<compile_context>
chip_gen: v5e
topology: v5e:2x2
jax: 0.10.0
libtpu: 0.0.40
codegen_flags: <defaults>
</compile_context>

<pallas_src>
from functools import partial

import jax
import jax.numpy as jnp
from jax.experimental import pallas as pl
from jax.experimental.pallas import tpu as pltpu


# -----------------------------------------------------------------------------
# VMEM budgeting / tile selection (generation-aware via vmem_budget_bytes)
# -----------------------------------------------------------------------------
def _round_up(x, m):
    return (x + m - 1) // m * m


def _vmem_bytes_estimate(TH, W, Cin, Cout, out_bytes):
    """Rough per-grid-step VMEM footprint: double-buffered pipeline blocks +
    scratch + the larger in-kernel transients.  Lane dims pad to 128, the
    second-to-last dims pad to 8 sublanes."""
    f32, lane, sub = 4, 128, 8
    Wp = W + 2
    m = TH * W
    in_main = TH * _round_up(Wp, sub) * _round_up(Cin, lane) * f32
    in_halo = 2 * _round_up(Wp, sub) * _round_up(Cin, lane) * f32
    ln_par = 2 * sub * _round_up(Cin, lane) * f32
    wts = _round_up(9 * Cin, sub) * _round_up(Cout, lane) * f32
    bias = sub * _round_up(Cout, lane) * f32
    out_blk = TH * _round_up(W, sub) * _round_up(Cout, lane) * out_bytes
    lhs = _round_up(m, sub) * _round_up(9 * Cin, lane) * f32
    xr_y = 2 * (TH + 2) * _round_up(Wp, sub) * _round_up(Cin, lane) * f32
    acc = _round_up(m, sub) * _round_up(Cout, lane) * f32
    # x2 = double-buffered auto-pipeline blocks.
    return 2 * (in_main + in_halo + ln_par + wts + bias + out_blk) + lhs + xr_y + acc


def _pick_tile_rows(Ho, W, Cin, Cout, out_bytes, th_max, budget):
    """Largest divisor of Ho (multiples of 8 preferred) whose estimated
    per-step VMEM footprint fits the budget."""
    cap = max(1, min(th_max, Ho))
    divs = [d for d in range(1, cap + 1) if Ho % d == 0]
    fits = [d for d in divs
            if _vmem_bytes_estimate(d, W, Cin, Cout, out_bytes) <= budget]
    if not fits:
        return 1
    m8 = [d for d in fits if d % 8 == 0]
    return max(m8) if m8 else max(fits)


# -----------------------------------------------------------------------------
# Fused LayerNorm2d + 3x3/s1/p1 conv kernel (one (batch, row-block) grid step)
# -----------------------------------------------------------------------------
def _ln_conv3x3_kernel(xm_ref, ha_ref, hb_ref, g_ref, bt_ref, w_ref, b_ref,
                       o_ref, lhs_ref, *, H, W, TH, Cin, eps):
    """
    xm_ref : (1, TH, W+2, Cin)   padded-input body rows   [i*TH, i*TH+TH)
    ha_ref : (1, 1,  W+2, Cin)   halo row                  i*TH+TH
    hb_ref : (1, 1,  W+2, Cin)   halo row                  i*TH+TH+1
    g_ref  : (1, Cin)            LayerNorm2d weight
    bt_ref : (1, Cin)            LayerNorm2d bias
    w_ref  : (9*Cin, Cout)       conv weight, (kh, kw, cin)-major rows
    b_ref  : (1, Cout)           conv bias
    o_ref  : (1, TH, W, Cout)    output block
    lhs_ref: VMEM (TH*W, 9*Cin)  im2col scratch (single K=9*Cin matmul)
    """
    i = pl.program_id(1)
    Hin = TH + 2
    Wp = W + 2
    Wo = W
    Cout = o_ref.shape[-1]

    # --- 1) haloed raw rows, assembled from the three pipelined views --------
    xr = jnp.concatenate([xm_ref[0], ha_ref[0], hb_ref[0]], axis=0)  # (Hin,Wp,Cin)

    # --- 2) LayerNorm2d over channels (biased variance, eps inside rsqrt) ----
    mean = jnp.mean(xr, axis=-1, keepdims=True)
    xc = xr - mean
    var = jnp.mean(xc * xc, axis=-1, keepdims=True)
    y = xc * jax.lax.rsqrt(var + eps)
    y = y * g_ref[...].reshape(1, 1, Cin) + bt_ref[...].reshape(1, 1, Cin)

    # Conv2d zero-pads AFTER the norm: the normalized border (which would be
    # the LN bias, not 0) must be re-zeroed.  Mask built once per row block.
    rid = i * TH + jax.lax.broadcasted_iota(jnp.int32, (Hin, Wp, Cin), 0)
    cid = jax.lax.broadcasted_iota(jnp.int32, (Hin, Wp, Cin), 1)
    valid = (rid >= 1) & (rid <= H) & (cid >= 1) & (cid <= W)
    y = jnp.where(valid, y, 0.0)                                     # (Hin,Wp,Cin)

    # --- 3) im2col in VMEM, then ONE K=9*Cin MXU matmul ----------------------
    for kh in range(3):
        for kw in range(3):
            t = kh * 3 + kw
            lhs_ref[:, t * Cin:(t + 1) * Cin] = (
                y[kh:kh + TH, kw:kw + Wo, :].reshape(TH * Wo, Cin))

    acc = jnp.dot(lhs_ref[...], w_ref[...], preferred_element_type=jnp.float32)
    acc = acc + b_ref[...]                                           # bias, once
    o_ref[...] = acc.reshape(1, TH, Wo, Cout).astype(o_ref.dtype)


# -----------------------------------------------------------------------------
# Wrapper: NCHW input (PyTorch layout params), NHWC lane-dense output
# -----------------------------------------------------------------------------
def strided_conv_forward(params, x_nchw, *, eps=1e-6, out_dtype=jnp.float32,
                         th_max=32, vmem_budget_bytes=40 * 1024 * 1024):
    """Returns (N, H, W, embed_dim); callers needing the old NCHW layout can
    transpose, but the ViT stem flattens H*W next so NHWC is kept public."""
    w = params["proj_w"]            # (Cout, Cin, 3, 3)  PyTorch OIHW
    b = params["proj_b"]            # (Cout,)
    g = params["norm_g"]            # (Cin,)
    bt = params["norm_b"]           # (Cin,)

    N, Cin, H, W = x_nchw.shape
    Cout = w.shape[0]
    assert w.shape == (Cout, Cin, 3, 3)
    Ho, Wo = H, W                   # k=3, s=1, p=1 only (see TODO above)

    # Input-side prep (tiny vs. the output traffic): one fused NHWC+pad pass.
    xpad = jnp.pad(jnp.transpose(x_nchw.astype(jnp.float32), (0, 2, 3, 1)),
                   ((0, 0), (1, 1), (1, 1), (0, 0)))                  # (N,H+2,W+2,Cin)

    out_bytes = jnp.dtype(out_dtype).itemsize
    TH = _pick_tile_rows(Ho, W, Cin, Cout, out_bytes, th_max, vmem_budget_bytes)
    assert Ho % TH == 0
    est = _vmem_bytes_estimate(TH, W, Cin, Cout, out_bytes)
    vmem_limit = int(min(128 * 1024 * 1024, max(32 * 1024 * 1024, 1.3 * est)))

    # Conv weight, tap-major rows: row index = (kh*3 + kw)*Cin + cin.
    w27 = jnp.transpose(w, (2, 3, 1, 0)).reshape(9 * Cin, Cout).astype(jnp.float32)

    kernel = partial(_ln_conv3x3_kernel, H=H, W=W, TH=TH, Cin=Cin, eps=eps)

    out_nhwc = pl.pallas_call(
        kernel,
        out_shape=jax.ShapeDtypeStruct((N, Ho, Wo, Cout), out_dtype),
        grid=(N, Ho // TH),
        in_specs=[
            # body rows [i*TH, i*TH+TH) of the padded image (auto-pipelined)
            pl.BlockSpec((1, TH, W + 2, Cin), lambda n, i: (n, i, 0, 0)),
            # the two halo rows below the body block (1-row blocks)
            pl.BlockSpec((1, 1, W + 2, Cin), lambda n, i: (n, i * TH + TH, 0, 0)),
            pl.BlockSpec((1, 1, W + 2, Cin), lambda n, i: (n, i * TH + TH + 1, 0, 0)),
            # VMEM-resident parameters (constant index maps)
            pl.BlockSpec((1, Cin), lambda n, i: (0, 0)),
            pl.BlockSpec((1, Cin), lambda n, i: (0, 0)),
            pl.BlockSpec((9 * Cin, Cout), lambda n, i: (0, 0)),
            pl.BlockSpec((1, Cout), lambda n, i: (0, 0)),
        ],
        out_specs=pl.BlockSpec((1, TH, Wo, Cout), lambda n, i: (n, i, 0, 0)),
        scratch_shapes=[pltpu.VMEM((TH * Wo, 9 * Cin), jnp.float32)],
        compiler_params=pltpu.CompilerParams(
            dimension_semantics=("parallel", "parallel"),   # shardable on v7x's 2 TCs
            vmem_limit_bytes=vmem_limit),
    )(xpad, xpad, xpad, g.reshape(1, Cin), bt.reshape(1, Cin), w27,
      b.reshape(1, Cout))

    return out_nhwc


# -----------------------------------------------------------------------------
# Pure-JAX reference (NHWC output to match the kernel's public layout)
# -----------------------------------------------------------------------------
def strided_conv_reference(params, x_nchw, eps=1e-6):
    x = x_nchw.astype(jnp.float32)
    mean = jnp.mean(x, axis=1, keepdims=True)
    var = jnp.mean((x - mean) ** 2, axis=1, keepdims=True)
    y = (x - mean) * jax.lax.rsqrt(var + eps)
    y = (y * params["norm_g"][None, :, None, None]
         + params["norm_b"][None, :, None, None])
    out = jax.lax.conv_general_dilated(
        y, params["proj_w"], window_strides=(1, 1), padding=((1, 1), (1, 1)),
        dimension_numbers=("NCHW", "OIHW", "NCHW"),
        precision=jax.lax.Precision.HIGHEST)
    out = out + params["proj_b"][None, :, None, None]
    return jnp.transpose(out, (0, 2, 3, 1))                            # NHWC


# -----------------------------------------------------------------------------
if __name__ == "__main__":
    key = jax.random.PRNGKey(0)
    k_g, k_b, k_w, k_pb, k_x = jax.random.split(key, 5)

    N, Cin, H, W = 2, 3, 16, 16     # module default in_chans=3
    Cout = 768                      # module default embed_dim=768 (lane-dense)

    params = dict(
        norm_g=1.0 + 0.1 * jax.random.normal(k_g, (Cin,), jnp.float32),
        norm_b=0.1 * jax.random.normal(k_b, (Cin,), jnp.float32),
        proj_w=0.05 * jax.random.normal(k_w, (Cout, Cin, 3, 3), jnp.float32),
        proj_b=0.05 * jax.random.normal(k_pb, (Cout,), jnp.float32),
    )
    x = jax.random.normal(k_x, (N, Cin, H, W), jnp.float32)            # NCHW

    ref = strided_conv_reference(params, x)                            # NHWC

    # f32 output path (parity mode, tight tolerance)
    out = jax.block_until_ready(jax.jit(strided_conv_forward)(params, x))
    assert out.shape == (N, H, W, Cout), out.shape
    assert bool(jnp.all(jnp.isfinite(out)))
    err32 = float(jnp.max(jnp.abs(out - ref)))
    assert err32 < 2e-3, f"f32 path max abs err vs reference = {err32}"

    # bf16 output streaming path (halves the dominant output HBM traffic)
    out_bf16 = jax.block_until_ready(
        jax.jit(partial(strided_conv_forward, out_dtype=jnp.bfloat16))(params, x))
    assert out_bf16.dtype == jnp.bfloat16
    err16 = float(jnp.max(jnp.abs(out_bf16.astype(jnp.float32) - ref)))
    assert err16 < 6e-2, f"bf16 path max abs err vs reference = {err16}"

    print("KERNEL_OK")
</pallas_src>

<mosaic_0001>
module attributes {stable_mosaic.version = 11 : i64} {
  func.func @_ln_conv3x3_kernel(%arg0: i32, %arg1: i32, %arg2: memref<1x16x18x3xf32, #tpu.memory_space<vmem>>, %arg3: memref<1x1x18x3xf32, #tpu.memory_space<vmem>>, %arg4: memref<1x1x18x3xf32, #tpu.memory_space<vmem>>, %arg5: memref<1x3xf32, #tpu.memory_space<vmem>>, %arg6: memref<1x3xf32, #tpu.memory_space<vmem>>, %arg7: memref<27x768xf32, #tpu.memory_space<vmem>>, %arg8: memref<1x768xf32, #tpu.memory_space<vmem>>, %arg9: memref<1x16x16x768xf32, #tpu.memory_space<vmem>>, %arg10: memref<256x27xf32, #tpu.memory_space<vmem>>) attributes {dimension_semantics = [#tpu.dimension_semantics<parallel>, #tpu.dimension_semantics<parallel>], iteration_bounds = array<i64: 2, 1>, scalar_prefetch = 0 : i64, scratch_operands = 1 : i64, tpu.core_type = #tpu.core_type<tc>, window_params = [{transform_indices = @transform_0, window_bounds = array<i64: 1, 16, 18, 3>}, {transform_indices = @transform_1, window_bounds = array<i64: 1, 1, 18, 3>}, {transform_indices = @transform_2, window_bounds = array<i64: 1, 1, 18, 3>}, {pipeline_mode = #tpu.pipeline_mode<synchronous>, transform_indices = @transform_3, window_bounds = array<i64: 1, 3>}, {pipeline_mode = #tpu.pipeline_mode<synchronous>, transform_indices = @transform_4, window_bounds = array<i64: 1, 3>}, {pipeline_mode = #tpu.pipeline_mode<synchronous>, transform_indices = @transform_5, window_bounds = array<i64: 27, 768>}, {pipeline_mode = #tpu.pipeline_mode<synchronous>, transform_indices = @transform_6, window_bounds = array<i64: 1, 768>}, {transform_indices = @transform_7, window_bounds = array<i64: 1, 16, 16, 768>}]} {
    %c0 = arith.constant 0 : index
    %c0_0 = arith.constant 0 : index
    %c0_1 = arith.constant 0 : index
    %c0_2 = arith.constant 0 : index
    %0 = vector.load %arg2[%c0, %c0_0, %c0_1, %c0_2] : memref<1x16x18x3xf32, #tpu.memory_space<vmem>>, vector<1x16x18x3xf32>
    %1 = vector.shape_cast %0 : vector<1x16x18x3xf32> to vector<16x18x3xf32>
    %c0_3 = arith.constant 0 : index
    %c0_4 = arith.constant 0 : index
    %c0_5 = arith.constant 0 : index
    %c0_6 = arith.constant 0 : index
    %2 = vector.load %arg3[%c0_3, %c0_4, %c0_5, %c0_6] : memref<1x1x18x3xf32, #tpu.memory_space<vmem>>, vector<1x1x18x3xf32>
    %3 = vector.shape_cast %2 : vector<1x1x18x3xf32> to vector<1x18x3xf32>
    %c0_7 = arith.constant 0 : index
    %c0_8 = arith.constant 0 : index
    %c0_9 = arith.constant 0 : index
    %c0_10 = arith.constant 0 : index
    %4 = vector.load %arg4[%c0_7, %c0_8, %c0_9, %c0_10] : memref<1x1x18x3xf32, #tpu.memory_space<vmem>>, vector<1x1x18x3xf32>
    %5 = vector.shape_cast %4 : vector<1x1x18x3xf32> to vector<1x18x3xf32>
    %6 = tpu.concatenate %1, %3, %5 in 0 : vector<16x18x3xf32>, vector<1x18x3xf32>, vector<1x18x3xf32> -> vector<18x18x3xf32>
    %cst = arith.constant dense<0.000000e+00> : vector<18x18xf32>
    %7 = vector.multi_reduction <add>, %6, %cst [2] : vector<18x18x3xf32> to vector<18x18xf32>
    %8 = vector.shape_cast %7 : vector<18x18xf32> to vector<18x18x1xf32>
    %cst_11 = arith.constant 3.000000e+00 : f32
    %9 = vector.broadcast %cst_11 : f32 to vector<18x18x1xf32>
    %10 = arith.divf %8, %9 : vector<18x18x1xf32>
    %11 = vector.broadcast %10 : vector<18x18x1xf32> to vector<18x18x3xf32>
    %12 = arith.subf %6, %11 : vector<18x18x3xf32>
    %13 = arith.mulf %12, %12 : vector<18x18x3xf32>
    %cst_12 = arith.constant dense<0.000000e+00> : vector<18x18xf32>
    %14 = vector.multi_reduction <add>, %13, %cst_12 [2] : vector<18x18x3xf32> to vector<18x18xf32>
    %15 = vector.shape_cast %14 : vector<18x18xf32> to vector<18x18x1xf32>
    %cst_13 = arith.constant 3.000000e+00 : f32
    %16 = vector.broadcast %cst_13 : f32 to vector<18x18x1xf32>
    %17 = arith.divf %15, %16 : vector<18x18x1xf32>
    %cst_14 = arith.constant 9.99999997E-7 : f32
    %18 = vector.broadcast %cst_14 : f32 to vector<18x18x1xf32>
    %19 = arith.addf %17, %18 : vector<18x18x1xf32>
    %20 = math.rsqrt %19 : vector<18x18x1xf32>
    %21 = vector.broadcast %20 : vector<18x18x1xf32> to vector<18x18x3xf32>
    %22 = arith.mulf %12, %21 : vector<18x18x3xf32>
    %c0_15 = arith.constant 0 : index
    %c0_16 = arith.constant 0 : index
    %23 = vector.load %arg5[%c0_15, %c0_16] : memref<1x3xf32, #tpu.memory_space<vmem>>, vector<1x3xf32>
    %24 = vector.shape_cast %23 : vector<1x3xf32> to vector<1x1x3xf32>
    %25 = vector.broadcast %24 : vector<1x1x3xf32> to vector<18x18x3xf32>
    %26 = arith.mulf %22, %25 : vector<18x18x3xf32>
    %c0_17 = arith.constant 0 : index
    %c0_18 = arith.constant 0 : index
    %27 = vector.load %arg6[%c0_17, %c0_18] : memref<1x3xf32, #tpu.memory_space<vmem>>, vector<1x3xf32>
    %28 = vector.shape_cast %27 : vector<1x3xf32> to vector<1x1x3xf32>
    %29 = vector.broadcast %28 : vector<1x1x3xf32> to vector<18x18x3xf32>
    %30 = arith.addf %26, %29 : vector<18x18x3xf32>
    %c16_i32 = arith.constant 16 : i32
    %31 = arith.muli %arg1, %c16_i32 : i32
    %32 = tpu.iota {dimensions = array<i32: 0>} : vector<18x18x3xi32>
    %33 = vector.broadcast %31 : i32 to vector<18x18x3xi32>
    %34 = arith.addi %33, %32 : vector<18x18x3xi32>
    %35 = tpu.iota {dimensions = array<i32: 1>} : vector<18x18x3xi32>
    %c1_i32 = arith.constant 1 : i32
    %36 = vector.broadcast %c1_i32 : i32 to vector<18x18x3xi32>
    %37 = arith.cmpi sge, %34, %36 : vector<18x18x3xi32>
    %c16_i32_19 = arith.constant 16 : i32
    %38 = vector.broadcast %c16_i32_19 : i32 to vector<18x18x3xi32>
    %39 = arith.cmpi sle, %34, %38 : vector<18x18x3xi32>
    %40 = arith.andi %37, %39 : vector<18x18x3xi1>
    %c1_i32_20 = arith.constant 1 : i32
    %41 = vector.broadcast %c1_i32_20 : i32 to vector<18x18x3xi32>
    %42 = arith.cmpi sge, %35, %41 : vector<18x18x3xi32>
    %43 = arith.andi %40, %42 : vector<18x18x3xi1>
    %c16_i32_21 = arith.constant 16 : i32
    %44 = vector.broadcast %c16_i32_21 : i32 to vector<18x18x3xi32>
    %45 = arith.cmpi sle, %35, %44 : vector<18x18x3xi32>
    %46 = arith.andi %43, %45 : vector<18x18x3xi1>
    %cst_22 = arith.constant 0.000000e+00 : f32
    %47 = vector.broadcast %cst_22 : f32 to vector<18x18x3xf32>
    %48 = arith.select %46, %30, %47 : vector<18x18x3xi1>, vector<18x18x3xf32>
    %49 = vector.extract_strided_slice %48 {offsets = [0, 0, 0], sizes = [16, 16, 3], strides = [1, 1, 1]} : vector<18x18x3xf32> to vector<16x16x3xf32>
    %50 = vector.shape_cast %49 : vector<16x16x3xf32> to vector<256x3xf32>
    %c0_23 = arith.constant 0 : index
    %c0_24 = arith.constant 0 : index
    %51 = vector.load %arg10[%c0_23, %c0_24] : memref<256x27xf32, #tpu.memory_space<vmem>>, vector<256x3xf32>
    tpu.vector_store %arg10[%c0_23, %c0_24], %50 {strides = array<i32>} : memref<256x27xf32, #tpu.memory_space<vmem>>, vector<256x3xf32>,
    %52 = vector.extract_strided_slice %48 {offsets = [0, 1, 0], sizes = [16, 16, 3], strides = [1, 1, 1]} : vector<18x18x3xf32> to vector<16x16x3xf32>
    %53 = vector.shape_cast %52 : vector<16x16x3xf32> to vector<256x3xf32>
    %c0_25 = arith.constant 0 : index
    %c3 = arith.constant 3 : index
    %54 = vector.load %arg10[%c0_25, %c3] : memref<256x27xf32, #tpu.memory_space<vmem>>, vector<256x3xf32>
    tpu.vector_store %arg10[%c0_25, %c3], %53 {strides = array<i32>} : memref<256x27xf32, #tpu.memory_space<vmem>>, vector<256x3xf32>,
    %55 = vector.extract_strided_slice %48 {offsets = [0, 2, 0], sizes = [16, 16, 3], strides = [1, 1, 1]} : vector<18x18x3xf32> to vector<16x16x3xf32>
    %56 = vector.shape_cast %55 : vector<16x16x3xf32> to vector<256x3xf32>
    %c0_26 = arith.constant 0 : index
    %c6 = arith.constant 6 : index
    %57 = vector.load %arg10[%c0_26, %c6] : memref<256x27xf32, #tpu.memory_space<vmem>>, vector<256x3xf32>
    tpu.vector_store %arg10[%c0_26, %c6], %56 {strides = array<i32>} : memref<256x27xf32, #tpu.memory_space<vmem>>, vector<256x3xf32>,
    %58 = vector.extract_strided_slice %48 {offsets = [1, 0, 0], sizes = [16, 16, 3], strides = [1, 1, 1]} : vector<18x18x3xf32> to vector<16x16x3xf32>
    %59 = vector.shape_cast %58 : vector<16x16x3xf32> to vector<256x3xf32>
    %c0_27 = arith.constant 0 : index
    %c9 = arith.constant 9 : index
    %60 = vector.load %arg10[%c0_27, %c9] : memref<256x27xf32, #tpu.memory_space<vmem>>, vector<256x3xf32>
    tpu.vector_store %arg10[%c0_27, %c9], %59 {strides = array<i32>} : memref<256x27xf32, #tpu.memory_space<vmem>>, vector<256x3xf32>,
    %61 = vector.extract_strided_slice %48 {offsets = [1, 1, 0], sizes = [16, 16, 3], strides = [1, 1, 1]} : vector<18x18x3xf32> to vector<16x16x3xf32>
    %62 = vector.shape_cast %61 : vector<16x16x3xf32> to vector<256x3xf32>
    %c0_28 = arith.constant 0 : index
    %c12 = arith.constant 12 : index
    %63 = vector.load %arg10[%c0_28, %c12] : memref<256x27xf32, #tpu.memory_space<vmem>>, vector<256x3xf32>
    tpu.vector_store %arg10[%c0_28, %c12], %62 {strides = array<i32>} : memref<256x27xf32, #tpu.memory_space<vmem>>, vector<256x3xf32>,
    %64 = vector.extract_strided_slice %48 {offsets = [1, 2, 0], sizes = [16, 16, 3], strides = [1, 1, 1]} : vector<18x18x3xf32> to vector<16x16x3xf32>
    %65 = vector.shape_cast %64 : vector<16x16x3xf32> to vector<256x3xf32>
    %c0_29 = arith.constant 0 : index
    %c15 = arith.constant 15 : index
    %66 = vector.load %arg10[%c0_29, %c15] : memref<256x27xf32, #tpu.memory_space<vmem>>, vector<256x3xf32>
    tpu.vector_store %arg10[%c0_29, %c15], %65 {strides = array<i32>} : memref<256x27xf32, #tpu.memory_space<vmem>>, vector<256x3xf32>,
    %67 = vector.extract_strided_slice %48 {offsets = [2, 0, 0], sizes = [16, 16, 3], strides = [1, 1, 1]} : vector<18x18x3xf32> to vector<16x16x3xf32>
    %68 = vector.shape_cast %67 : vector<16x16x3xf32> to vector<256x3xf32>
    %c0_30 = arith.constant 0 : index
    %c18 = arith.constant 18 : index
    %69 = vector.load %arg10[%c0_30, %c18] : memref<256x27xf32, #tpu.memory_space<vmem>>, vector<256x3xf32>
    tpu.vector_store %arg10[%c0_30, %c18], %68 {strides = array<i32>} : memref<256x27xf32, #tpu.memory_space<vmem>>, vector<256x3xf32>,
    %70 = vector.extract_strided_slice %48 {offsets = [2, 1, 0], sizes = [16, 16, 3], strides = [1, 1, 1]} : vector<18x18x3xf32> to vector<16x16x3xf32>
    %71 = vector.shape_cast %70 : vector<16x16x3xf32> to vector<256x3xf32>
    %c0_31 = arith.constant 0 : index
    %c21 = arith.constant 21 : index
    %72 = vector.load %arg10[%c0_31, %c21] : memref<256x27xf32, #tpu.memory_space<vmem>>, vector<256x3xf32>
    tpu.vector_store %arg10[%c0_31, %c21], %71 {strides = array<i32>} : memref<256x27xf32, #tpu.memory_space<vmem>>, vector<256x3xf32>,
    %73 = vector.extract_strided_slice %48 {offsets = [2, 2, 0], sizes = [16, 16, 3], strides = [1, 1, 1]} : vector<18x18x3xf32> to vector<16x16x3xf32>
    %74 = vector.shape_cast %73 : vector<16x16x3xf32> to vector<256x3xf32>
    %c0_32 = arith.constant 0 : index
    %c24 = arith.constant 24 : index
    %75 = vector.load %arg10[%c0_32, %c24] : memref<256x27xf32, #tpu.memory_space<vmem>>, vector<256x3xf32>
    tpu.vector_store %arg10[%c0_32, %c24], %74 {strides = array<i32>} : memref<256x27xf32, #tpu.memory_space<vmem>>, vector<256x3xf32>,
    %c0_33 = arith.constant 0 : index
    %c0_34 = arith.constant 0 : index
    %76 = vector.load %arg10[%c0_33, %c0_34] : memref<256x27xf32, #tpu.memory_space<vmem>>, vector<256x27xf32>
    %c0_35 = arith.constant 0 : index
    %c0_36 = arith.constant 0 : index
    %77 = vector.load %arg7[%c0_35, %c0_36] : memref<27x768xf32, #tpu.memory_space<vmem>>, vector<27x768xf32>
    %cst_37 = arith.constant dense<0.000000e+00> : vector<256x768xf32>
    %78 = tpu.matmul %76, %77, %cst_37 {dimension_numbers = #tpu.dot_dimension_numbers<[1], [0], [0], [1], [0, 0, 1, 1], [], []>} : vector<256x27xf32>, vector<27x768xf32>, vector<256x768xf32> -> vector<256x768xf32>
    %c0_38 = arith.constant 0 : index
    %c0_39 = arith.constant 0 : index
    %79 = vector.load %arg8[%c0_38, %c0_39] : memref<1x768xf32, #tpu.memory_space<vmem>>, vector<1x768xf32>
    %80 = vector.broadcast %79 : vector<1x768xf32> to vector<256x768xf32>
    %81 = arith.addf %78, %80 : vector<256x768xf32>
    %82 = vector.shape_cast %81 : vector<256x768xf32> to vector<1x16x16x768xf32>
    %c0_40 = arith.constant 0 : index
    %c0_41 = arith.constant 0 : index
    %c0_42 = arith.constant 0 : index
    %c0_43 = arith.constant 0 : index
    %83 = vector.load %arg9[%c0_40, %c0_41, %c0_42, %c0_43] : memref<1x16x16x768xf32, #tpu.memory_space<vmem>>, vector<1x16x16x768xf32>
    tpu.vector_store %arg9[%c0_40, %c0_41, %c0_42, %c0_43], %82 {strides = array<i32>} : memref<1x16x16x768xf32, #tpu.memory_space<vmem>>, vector<1x16x16x768xf32>,
    return
  }
  func.func @transform_0(%arg0: i32, %arg1: i32) -> (i32, i32, i32, i32) {
    %c0_i32 = arith.constant 0 : i32
    %c0_i32_0 = arith.constant 0 : i32
    %c0_i32_1 = arith.constant 0 : i32
    return %arg0, %arg1, %c0_i32, %c0_i32_0 : i32, i32, i32, i32
  }
  func.func @transform_1(%arg0: i32, %arg1: i32) -> (i32, i32, i32, i32) {
    %c16_i32 = arith.constant 16 : i32
    %0 = arith.muli %arg1, %c16_i32 : i32
    %c16_i32_0 = arith.constant 16 : i32
    %1 = arith.addi %0, %c16_i32_0 : i32
    %c0_i32 = arith.constant 0 : i32
    %c0_i32_1 = arith.constant 0 : i32
    %c0_i32_2 = arith.constant 0 : i32
    return %arg0, %1, %c0_i32, %c0_i32_1 : i32, i32, i32, i32
  }
  func.func @transform_2(%arg0: i32, %arg1: i32) -> (i32, i32, i32, i32) {
    %c16_i32 = arith.constant 16 : i32
    %0 = arith.muli %arg1, %c16_i32 : i32
    %c16_i32_0 = arith.constant 16 : i32
    %1 = arith.addi %0, %c16_i32_0 : i32
    %c1_i32 = arith.constant 1 : i32
    %2 = arith.addi %1, %c1_i32 : i32
    %c0_i32 = arith.constant 0 : i32
    %c0_i32_1 = arith.constant 0 : i32
    %c0_i32_2 = arith.constant 0 : i32
    return %arg0, %2, %c0_i32, %c0_i32_1 : i32, i32, i32, i32
  }
  func.func @transform_3(%arg0: i32, %arg1: i32) -> (i32, i32) {
    %c0_i32 = arith.constant 0 : i32
    %c0_i32_0 = arith.constant 0 : i32
    %c0_i32_1 = arith.constant 0 : i32
    return %c0_i32, %c0_i32_0 : i32, i32
  }
  func.func @transform_4(%arg0: i32, %arg1: i32) -> (i32, i32) {
    %c0_i32 = arith.constant 0 : i32
    %c0_i32_0 = arith.constant 0 : i32
    %c0_i32_1 = arith.constant 0 : i32
    return %c0_i32, %c0_i32_0 : i32, i32
  }
  func.func @transform_5(%arg0: i32, %arg1: i32) -> (i32, i32) {
    %c0_i32 = arith.constant 0 : i32
    %c0_i32_0 = arith.constant 0 : i32
    %c0_i32_1 = arith.constant 0 : i32
    return %c0_i32, %c0_i32_0 : i32, i32
  }
  func.func @transform_6(%arg0: i32, %arg1: i32) -> (i32, i32) {
    %c0_i32 = arith.constant 0 : i32
    %c0_i32_0 = arith.constant 0 : i32
    %c0_i32_1 = arith.constant 0 : i32
    return %c0_i32, %c0_i32_0 : i32, i32
  }
  func.func @transform_7(%arg0: i32, %arg1: i32) -> (i32, i32, i32, i32) {
    %c0_i32 = arith.constant 0 : i32
    %c0_i32_0 = arith.constant 0 : i32
    %c0_i32_1 = arith.constant 0 : i32
    return %arg0, %arg1, %c0_i32, %c0_i32_0 : i32, i32, i32, i32
  }
}

</mosaic_0001>

<llo_original>
// kernel: strided_conv_forward.1
$region0: #{strided_conv_forward.1}
  #allocation0 [shape = 'u32[]', space=smem, size = 0x4, offset = 0x4, fixed_abs, tag = 'smem constant byte address 0x4 - core index']
  #allocation1 [shape = 'u32[72,128]{1,0:T(1,128)}', space=vmem, size = 0x9000, scoped, tag = 'internal scratch']
  #allocation2 [shape = 'f32[256,27]{1,0:T(8,128)}', space=vmem, size = 0x20000, scoped, tag = 'scratch operand']
  %s0 = inlined_call_operand.vmem [shape: f32[2,18,18,3], index: 0, kind: input, shape index: {}, may-alias: {0,1,2}]
  %s1 = inlined_call_operand.vmem [shape: f32[2,18,18,3], index: 1, kind: input, shape index: {}, may-alias: {0,1,2}]
  %s2 = inlined_call_operand.vmem [shape: f32[2,18,18,3], index: 2, kind: input, shape index: {}, may-alias: {0,1,2}]
  %s3 = inlined_call_operand.hbm [shape: f32[1,3], index: 3, kind: input, shape index: {}]
  %s4 = inlined_call_operand.hbm [shape: f32[1,3], index: 4, kind: input, shape index: {}]
  %s5 = inlined_call_operand.vmem [shape: f32[27,768], index: 5, kind: input, shape index: {}]
  %s6 = inlined_call_operand.vmem [shape: f32[1,768], index: 6, kind: input, shape index: {}]
  %s7 = inlined_call_operand.hbm [shape: f32[2,16,16,768], index: 7, kind: output, shape index: {}]
  %s8 = sld [smem:[#allocation0]]
  $region69: #{strided_conv_forward.1} parent=0
    _
  %s10 = ssub.s32 1, %s8
  %s11 = scalar_select 0, %s10, %s8
  $region1: #{strided_conv_forward.1} parent=0
    #allocation3 [shape = 'u8[512]{0}', space=vmem, size = 0x400, scoped, tag = 'input window, operand 3, single buffered']
    #allocation4 [shape = 's32[2]{0}', space=sflag, size = 0x8, scoped, tag = 'scoped memory for strided_conv_forward.1']
    #allocation5 [shape = 's32[2]{0}', space=sflag, size = 0x8, scoped, tag = 'scoped memory for strided_conv_forward.1']
    #allocation6 [shape = 'u8[512]{0}', space=vmem, size = 0x400, scoped, tag = 'input window, operand 4, single buffered']
    #allocation7 [shape = 's32[1]{0}', space=sflag, size = 0x4, scoped, tag = 'scoped memory for strided_conv_forward.1']
    #allocation8 [shape = 'u8[1572864]{0}', space=vmem, size = 0x180000, scoped, tag = 'output window, operand 0']
    %12 = vsyncpa [#allocation4], 0
    %13 = vsyncpa [#allocation7], 0
    %14 = vsyncpa [#allocation5], 0
    %s15 = scalar_lea.sflag [#allocation5], 1
    %16 = vsyncpa %s15, 0
    loop: start=0, step=1, limit=4
    $region2: #{strided_conv_forward.1} parent=1 // loop_pre_header
      _
    $region3: #{strided_conv_forward.1} parent=1 // loop_header
      %s18 = sphi 0, %s22
      %p19 = scmp.ge.s32.totalorder %s18, 4
      %s25 = sphi 0, %s37
      %s26 = sphi 0, %s33
      %s27 = sphi 0, %s25
      %s28 = sphi 0, %s26
      %s29 = sphi 0, %s27
      %s30 = sphi 0, %s28
      %s42 = sphi 0, %s44
      %s45 = sphi 0, %s42
      %s46 = sphi 0, %s45
      %s62 = sphi 0, %s46
      %s74 = sphi 0, %s76
      %s77 = sphi 0, %s74
      %s78 = sphi 0, %s77
      %s94 = sphi 0, %s78
      %s106 = sphi 0, %s108
      %s109 = sphi 0, %s106
      %s110 = sphi 0, %s109
      %s126 = sphi 0, %s110
      %s130 = sphi 0, %s130
      %s132 = sphi 0, %s130
      %s133 = sphi 0, %s132
      %s147 = sphi 0, %s133
      %s151 = sphi 0, %s151
      %s153 = sphi 0, %s151
      %s154 = sphi 0, %s153
      %s168 = sphi 0, %s154
      %s172 = sphi 0, %s172
      %s174 = sphi 0, %s172
      %s175 = sphi 0, %s174
      %s189 = sphi 0, %s175
      %s193 = sphi 0, %s193
      %s195 = sphi 0, %s193
      %s196 = sphi 0, %s195
      %s210 = sphi 0, %s196
      %s218 = sphi 0, %s220
      %s221 = sphi 0, %s218
      %s222 = sphi 0, %s221
      %s238 = sphi 0, %s222
    $region4: #{strided_conv_forward.1} parent=1 // loop_header_branch
      %21 = sbr.rel (%p19) target = $region8
    $region5: #{strided_conv_forward.1} parent=1 // loop_body
      %s23 = ssub.s32 %s18, 1
      %s24 = ssub.s32 %s18, 2
      %s31 = sadd.s32 1, %s26
      %p32 = scmp.ge.s32.totalorder %s31, 1
      %s33 = scalar_select %p32, 0, %s31
      %s34 = sadd.s32 1, %s25
      %s35 = scalar_select %p32, %s34, %s25
      %p36 = scmp.ge.s32.totalorder %s35, 2
      %s37 = scalar_select %p36, 0, %s35
      %s38 = ssub.s32 %s25, %s37
      %s39 = ssub.s32 %s26, %s33
      %s40 = sor.u32 %s38, %s39
      %p41 = scmp.eq.s32.totalorder %s40, 0
      %s43 = sadd.s32 %s42, 1
      %s44 = scalar_select %p41, %s42, %s43
      %p47 = pneg %p41
      %p48 = scmp.eq.s32.totalorder %s18, 1
      %p49 = por %p47, %p48
      %p50 = scmp.ne.s32.totalorder %s42, %s45
      %p51 = scmp.eq.s32.totalorder %s18, 0
      %p52 = por %p50, %p51
      %p53 = scmp.ne.s32.totalorder %s42, %s45
      %p54 = scmp.eq.s32.totalorder %s23, 1
      %p55 = por %p53, %p54
      %p56 = scmp.ne.s32.totalorder %s45, %s46
      %p57 = scmp.eq.s32.totalorder %s23, 0
      %p58 = por %p56, %p57
      %p59 = scmp.ne.s32.totalorder %s45, %s46
      %p60 = scmp.eq.s32.totalorder %s24, 1
      %p61 = por %p59, %p60
      %p63 = scmp.ne.s32.totalorder %s46, %s62
      %p64 = scmp.eq.s32.totalorder %s24, 0
      %p65 = por %p63, %p64
      %s66 = smul.u32 %s26, 16
      %s67 = sadd.s32 %s66, 16
      %s68 = smul.u32 %s33, 16
      %s69 = sadd.s32 %s68, 16
      %s70 = ssub.s32 %s25, %s37
      %s71 = ssub.s32 %s67, %s69
      %s72 = sor.u32 %s70, %s71
      %p73 = scmp.eq.s32.totalorder %s72, 0
      %s75 = sadd.s32 %s74, 1
      %s76 = scalar_select %p73, %s74, %s75
      %p79 = pneg %p73
      %p80 = scmp.eq.s32.totalorder %s18, 1
      %p81 = por %p79, %p80
      %p82 = scmp.ne.s32.totalorder %s74, %s77
      %p83 = scmp.eq.s32.totalorder %s18, 0
      %p84 = por %p82, %p83
      %p85 = scmp.ne.s32.totalorder %s74, %s77
      %p86 = scmp.eq.s32.totalorder %s23, 1
      %p87 = por %p85, %p86
      %p88 = scmp.ne.s32.totalorder %s77, %s78
      %p89 = scmp.eq.s32.totalorder %s23, 0
      %p90 = por %p88, %p89
      %p91 = scmp.ne.s32.totalorder %s77, %s78
      %p92 = scmp.eq.s32.totalorder %s24, 1
      %p93 = por %p91, %p92
      %p95 = scmp.ne.s32.totalorder %s78, %s94
      %p96 = scmp.eq.s32.totalorder %s24, 0
      %p97 = por %p95, %p96
      %s98 = smul.u32 %s26, 16
      %s99 = sadd.s32 %s98, 17
      %s100 = smul.u32 %s33, 16
      %s101 = sadd.s32 %s100, 17
      %s102 = ssub.s32 %s25, %s37
      %s103 = ssub.s32 %s99, %s101
      %s104 = sor.u32 %s102, %s103
      %p105 = scmp.eq.s32.totalorder %s104, 0
      %s107 = sadd.s32 %s106, 1
      %s108 = scalar_select %p105, %s106, %s107
      %p111 = pneg %p105
      %p112 = scmp.eq.s32.totalorder %s18, 1
      %p113 = por %p111, %p112
      %p114 = scmp.ne.s32.totalorder %s106, %s109
      %p115 = scmp.eq.s32.totalorder %s18, 0
      %p116 = por %p114, %p115
      %p117 = scmp.ne.s32.totalorder %s106, %s109
      %p118 = scmp.eq.s32.totalorder %s23, 1
      %p119 = por %p117, %p118
      %p120 = scmp.ne.s32.totalorder %s109, %s110
      %p121 = scmp.eq.s32.totalorder %s23, 0
      %p122 = por %p120, %p121
      %p123 = scmp.ne.s32.totalorder %s109, %s110
      %p124 = scmp.eq.s32.totalorder %s24, 1
      %p125 = por %p123, %p124
      %p127 = scmp.ne.s32.totalorder %s110, %s126
      %p128 = scmp.eq.s32.totalorder %s24, 0
      %p129 = por %p127, %p128
      %s131 = sadd.s32 %s130, 1
      %p134 = scmp.eq.s32.totalorder %s18, 1
      %p135 = scmp.ne.s32.totalorder %s130, %s132
      %p136 = scmp.eq.s32.totalorder %s18, 0
      %p137 = por %p135, %p136
      %p138 = scmp.ne.s32.totalorder %s130, %s132
      %p139 = scmp.eq.s32.totalorder %s23, 1
      %p140 = por %p138, %p139
      %p141 = scmp.ne.s32.totalorder %s132, %s133
      %p142 = scmp.eq.s32.totalorder %s23, 0
      %p143 = por %p141, %p142
      %p144 = scmp.ne.s32.totalorder %s132, %s133
      %p145 = scmp.eq.s32.totalorder %s24, 1
      %p146 = por %p144, %p145
      %p148 = scmp.ne.s32.totalorder %s133, %s147
      %p149 = scmp.eq.s32.totalorder %s24, 0
      %p150 = por %p148, %p149
      %s152 = sadd.s32 %s151, 1
      %p155 = scmp.eq.s32.totalorder %s18, 1
      %p156 = scmp.ne.s32.totalorder %s151, %s153
      %p157 = scmp.eq.s32.totalorder %s18, 0
      %p158 = por %p156, %p157
      %p159 = scmp.ne.s32.totalorder %s151, %s153
      %p160 = scmp.eq.s32.totalorder %s23, 1
      %p161 = por %p159, %p160
      %p162 = scmp.ne.s32.totalorder %s153, %s154
      %p163 = scmp.eq.s32.totalorder %s23, 0
      %p164 = por %p162, %p163
      %p165 = scmp.ne.s32.totalorder %s153, %s154
      %p166 = scmp.eq.s32.totalorder %s24, 1
      %p167 = por %p165, %p166
      %p169 = scmp.ne.s32.totalorder %s154, %s168
      %p170 = scmp.eq.s32.totalorder %s24, 0
      %p171 = por %p169, %p170
      %s173 = sadd.s32 %s172, 1
      %p176 = scmp.eq.s32.totalorder %s18, 1
      %p177 = scmp.ne.s32.totalorder %s172, %s174
      %p178 = scmp.eq.s32.totalorder %s18, 0
      %p179 = por %p177, %p178
      %p180 = scmp.ne.s32.totalorder %s172, %s174
      %p181 = scmp.eq.s32.totalorder %s23, 1
      %p182 = por %p180, %p181
      %p183 = scmp.ne.s32.totalorder %s174, %s175
      %p184 = scmp.eq.s32.totalorder %s23, 0
      %p185 = por %p183, %p184
      %p186 = scmp.ne.s32.totalorder %s174, %s175
      %p187 = scmp.eq.s32.totalorder %s24, 1
      %p188 = por %p186, %p187
      %p190 = scmp.ne.s32.totalorder %s175, %s189
      %p191 = scmp.eq.s32.totalorder %s24, 0
      %p192 = por %p190, %p191
      %s194 = sadd.s32 %s193, 1
      %p197 = scmp.eq.s32.totalorder %s18, 1
      %p198 = scmp.ne.s32.totalorder %s193, %s195
      %p199 = scmp.eq.s32.totalorder %s18, 0
      %p200 = por %p198, %p199
      %p201 = scmp.ne.s32.totalorder %s193, %s195
      %p202 = scmp.eq.s32.totalorder %s23, 1
      %p203 = por %p201, %p202
      %p204 = scmp.ne.s32.totalorder %s195, %s196
      %p205 = scmp.eq.s32.totalorder %s23, 0
      %p206 = por %p204, %p205
      %p207 = scmp.ne.s32.totalorder %s195, %s196
      %p208 = scmp.eq.s32.totalorder %s24, 1
      %p209 = por %p207, %p208
      %p211 = scmp.ne.s32.totalorder %s196, %s210
      %p212 = scmp.eq.s32.totalorder %s24, 0
      %p213 = por %p211, %p212
      %s214 = ssub.s32 %s25, %s37
      %s215 = ssub.s32 %s26, %s33
      %s216 = sor.u32 %s214, %s215
      %p217 = scmp.eq.s32.totalorder %s216, 0
      %s219 = sadd.s32 %s218, 1
      %s220 = scalar_select %p217, %s218, %s219
      %p223 = pneg %p217
      %p224 = scmp.eq.s32.totalorder %s18, 1
      %p225 = por %p223, %p224
      %p226 = scmp.ne.s32.totalorder %s218, %s221
      %p227 = scmp.eq.s32.totalorder %s18, 0
      %p228 = por %p226, %p227
      %p229 = scmp.ne.s32.totalorder %s218, %s221
      %p230 = scmp.eq.s32.totalorder %s23, 1
      %p231 = por %p229, %p230
      %p232 = scmp.ne.s32.totalorder %s221, %s222
      %p233 = scmp.eq.s32.totalorder %s23, 0
      %p234 = por %p232, %p233
      %p235 = scmp.ne.s32.totalorder %s221, %s222
      %p236 = scmp.eq.s32.totalorder %s24, 1
      %p237 = por %p235, %p236
      %p239 = scmp.ne.s32.totalorder %s222, %s238
      %p240 = scmp.eq.s32.totalorder %s24, 0
      %p241 = por %p239, %p240
      %p242 = scmp.le.s32.totalorder 1, %s18
      %p243 = scmp.lt.s32.totalorder %s18, 3
      %p244 = pnand %p242, %p243
      %p245 = pneg %p244
      // Predicated region
      $region9: #{strided_conv_forward.1} parent=5 // pred_check
        _
      $region10: #{strided_conv_forward.1} parent=5 // pred_check_branch
        %247 = sbr.rel (%p244) target = $region12
      $region11: #{strided_conv_forward.1} parent=5 // pred_region
        %s248 = ssub.s32 %s18, 1
        // Predicated region
        $region13: #{strided_conv_forward.1} parent=11 // pred_check
          %p249 = pneg %p143
        $region14: #{strided_conv_forward.1} parent=11 // pred_check_branch
          %251 = sbr.rel (%p249) target = $region16
        $region15: #{strided_conv_forward.1} parent=11 // pred_region
          %253 = vsyncadd [#allocation4], 0
          %s255 = sshll.u32 %s3, 4
          %s256 = int_to_ptr.hbm [resolvable:$true] %s255
          %s257 = sshll.u32 [#allocation3], 4
          %s258 = int_to_ptr.vmem [resolvable:$true] %s257
          %260 = dma.hbm_to_vmem [thread:$0]  %s256, 16, %s258, [#allocation4]
        $region16: #{strided_conv_forward.1} parent=11 // pred_fallthru
          _
        // Predicated region
        $region17: #{strided_conv_forward.1} parent=11 // pred_check
          %p261 = pneg %p164
        $region18: #{strided_conv_forward.1} parent=11 // pred_check_branch
          %263 = sbr.rel (%p261) target = $region20
        $region19: #{strided_conv_forward.1} parent=11 // pred_region
          %265 = vsyncadd [#allocation7], 0
          %s267 = sshll.u32 %s4, 4
          %s268 = int_to_ptr.hbm [resolvable:$true] %s267
          %s269 = sshll.u32 [#allocation6], 4
          %s270 = int_to_ptr.vmem [resolvable:$true] %s269
          %272 = dma.hbm_to_vmem [thread:$0]  %s268, 16, %s270, [#allocation7]
        $region20: #{strided_conv_forward.1} parent=11 // pred_fallthru
          _
        // Predicated region
        $region21: #{strided_conv_forward.1} parent=11 // pred_check
          %p273 = pneg %p185
        $region22: #{strided_conv_forward.1} parent=11 // pred_check_branch
          %275 = sbr.rel (%p273) target = $region24
        $region23: #{strided_conv_forward.1} parent=11 // pred_region
          _
        $region24: #{strided_conv_forward.1} parent=11 // pred_fallthru
          _
        // Predicated region
        $region25: #{strided_conv_forward.1} parent=11 // pred_check
          %p276 = pneg %p206
        $region26: #{strided_conv_forward.1} parent=11 // pred_check_branch
          %278 = sbr.rel (%p276) target = $region28
        $region27: #{strided_conv_forward.1} parent=11 // pred_region
          _
        $region28: #{strided_conv_forward.1} parent=11 // pred_fallthru
          _
      $region12: #{strided_conv_forward.1} parent=5 // pred_fallthru
        _
      %p279 = scmp.lt.s32.totalorder %s18, 2
      // Predicated region
      $region29: #{strided_conv_forward.1} parent=5 // pred_check
        %p280 = pneg %p279
      $region30: #{strided_conv_forward.1} parent=5 // pred_check_branch
        %282 = sbr.rel (%p280) target = $region32
      $region31: #{strided_conv_forward.1} parent=5 // pred_region
        // Predicated region
        $region33: #{strided_conv_forward.1} parent=31 // pred_check
          %p283 = pneg %p52
        $region34: #{strided_conv_forward.1} parent=31 // pred_check_branch
          %285 = sbr.rel (%p283) target = $region36
        $region35: #{strided_conv_forward.1} parent=31 // pred_region
          %s286 = smul.u32 16, %s26
          %s287 = ssub.s32 18, %s286
          %p288 = scmp.lt.s32.totalorder %s287, 16
          %s289 = scalar_select %p288, %s287, 16
          %s290 = smul.u32 8, %s289
          %s291 = smul.u32 %s290, 3
          %p292 = scmp.lt.s32.totalorder %s25, 1
          %s293 = scalar_select %p292, %s25, 1
          %p294 = scmp.lt.s32.totalorder %s286, 17
          %s295 = scalar_select %p294, %s286, 17
          %s296 = smul.addr %s295, 3
          %s297 = smul.addr %s293, 54
          %s298 = sadd.s32 %s296, %s297
          %s299 = smul.addr %s298, 8
          %s300 = scalar_lea.vmem %s0, %s299
          %s301 = smul.u32 16, %s26
          %s302 = ssub.s32 18, %s301
          %p303 = scmp.lt.s32.totalorder %s302, 16
          %s304 = scalar_select %p303, %s302, 16
          %s305 = smul.u32 8, %s304
          %s306 = smul.u32 %s305, 3
        $region36: #{strided_conv_forward.1} parent=31 // pred_fallthru
          _
        // Predicated region
        $region37: #{strided_conv_forward.1} parent=31 // pred_check
          %p307 = pneg %p84
        $region38: #{strided_conv_forward.1} parent=31 // pred_check_branch
          %309 = sbr.rel (%p307) target = $region40
        $region39: #{strided_conv_forward.1} parent=31 // pred_region
          %s310 = smul.u32 %s26, 16
          %s311 = sadd.s32 %s310, 16
          %p312 = scmp.lt.s32.totalorder %s25, 1
          %s313 = scalar_select %p312, %s25, 1
          %p314 = scmp.lt.s32.totalorder %s311, 17
          %s315 = scalar_select %p314, %s311, 17
          %s316 = smul.addr %s315, 3
          %s317 = smul.addr %s313, 54
          %s318 = sadd.s32 %s316, %s317
          %s319 = smul.addr %s318, 8
          %s320 = scalar_lea.vmem %s1, %s319
          %s321 = smul.u32 %s26, 16
          %s322 = sadd.s32 %s321, 16
        $region40: #{strided_conv_forward.1} parent=31 // pred_fallthru
          _
        // Predicated region
        $region41: #{strided_conv_forward.1} parent=31 // pred_check
          %p323 = pneg %p116
        $region42: #{strided_conv_forward.1} parent=31 // pred_check_branch
          %325 = sbr.rel (%p323) target = $region44
        $region43: #{strided_conv_forward.1} parent=31 // pred_region
          %s326 = smul.u32 %s26, 16
          %s327 = sadd.s32 %s326, 17
          %p328 = scmp.lt.s32.totalorder %s25, 1
          %s329 = scalar_select %p328, %s25, 1
          %p330 = scmp.lt.s32.totalorder %s327, 17
          %s331 = scalar_select %p330, %s327, 17
          %s332 = smul.addr %s331, 3
          %s333 = smul.addr %s329, 54
          %s334 = sadd.s32 %s332, %s333
          %s335 = smul.addr %s334, 8
          %s336 = scalar_lea.vmem %s2, %s335
          %s337 = smul.u32 %s26, 16
          %s338 = sadd.s32 %s337, 17
        $region44: #{strided_conv_forward.1} parent=31 // pred_fallthru
          _
      $region32: #{strided_conv_forward.1} parent=5 // pred_fallthru
        _
      %p339 = scmp.le.s32.totalorder 1, %s18
      %p340 = scmp.lt.s32.totalorder %s18, 3
      %p341 = pnand %p339, %p340
      %p342 = pneg %p341
      // Predicated region
      $region45: #{strided_conv_forward.1} parent=5 // pred_check
        _
      $region46: #{strided_conv_forward.1} parent=5 // pred_check_branch
        %344 = sbr.rel (%p341) target = $region48
      $region47: #{strided_conv_forward.1} parent=5 // pred_region
        %s345 = ssub.s32 %s18, 1
        // Predicated region
        $region49: #{strided_conv_forward.1} parent=47 // pred_check
          %p346 = pneg %p143
        $region50: #{strided_conv_forward.1} parent=47 // pred_check_branch
          %348 = sbr.rel (%p346) target = $region52
        $region51: #{strided_conv_forward.1} parent=47 // pred_region
          %350 = dma.done [#allocation4], 16
        $region52: #{strided_conv_forward.1} parent=47 // pred_fallthru
          _
        // Predicated region
        $region53: #{strided_conv_forward.1} parent=47 // pred_check
          %p351 = pneg %p164
        $region54: #{strided_conv_forward.1} parent=47 // pred_check_branch
          %353 = sbr.rel (%p351) target = $region56
        $region55: #{strided_conv_forward.1} parent=47 // pred_region
          %355 = dma.done [#allocation7], 16
        $region56: #{strided_conv_forward.1} parent=47 // pred_fallthru
          _
        %s356 = smul.u32 16, %s28
        %s357 = ssub.s32 18, %s356
        %p358 = scmp.lt.s32.totalorder %s357, 16
        %s359 = scalar_select %p358, %s357, 16
        %s360 = smul.u32 8, %s359
        %s361 = smul.u32 %s360, 3
        %p362 = scmp.lt.s32.totalorder %s27, 1
        %s363 = scalar_select %p362, %s27, 1
        %p364 = scmp.lt.s32.totalorder %s356, 17
        %s365 = scalar_select %p364, %s356, 17
        %s366 = smul.addr %s365, 3
        %s367 = smul.addr %s363, 54
        %s368 = sadd.s32 %s366, %s367
        %s369 = smul.addr %s368, 8
        %s370 = scalar_lea.vmem %s0, %s369
        %p371 = pneg %p58
        %p372 = pneg %p55
        %s373 = smul.u32 %s28, 16
        %s374 = sadd.s32 %s373, 16
        %p375 = scmp.lt.s32.totalorder %s27, 1
        %s376 = scalar_select %p375, %s27, 1
        %p377 = scmp.lt.s32.totalorder %s374, 17
        %s378 = scalar_select %p377, %s374, 17
        %s379 = smul.addr %s378, 3
        %s380 = smul.addr %s376, 54
        %s381 = sadd.s32 %s379, %s380
        %s382 = smul.addr %s381, 8
        %s383 = scalar_lea.vmem %s1, %s382
        %p384 = pneg %p90
        %p385 = pneg %p87
        %s386 = smul.u32 %s28, 16
        %s387 = sadd.s32 %s386, 17
        %p388 = scmp.lt.s32.totalorder %s27, 1
        %s389 = scalar_select %p388, %s27, 1
        %p390 = scmp.lt.s32.totalorder %s387, 17
        %s391 = scalar_select %p390, %s387, 17
        %s392 = smul.addr %s391, 3
        %s393 = smul.addr %s389, 54
        %s394 = sadd.s32 %s392, %s393
        %s395 = smul.addr %s394, 8
        %s396 = scalar_lea.vmem %s2, %s395
        %p397 = pneg %p122
        %p398 = pneg %p119
        %p399 = pneg %p143
        %p400 = pneg %p140
        %p401 = pneg %p164
        %p402 = pneg %p161
        %p403 = pneg %p185
        %p404 = pneg %p182
        %p405 = pneg %p206
        %p406 = pneg %p203
        %p407 = pneg %p234
        %p408 = pneg %p231
        %s409 = sand.u32 %s221, 1
        %s410 = scalar_lea.sflag [#allocation5], %s409
        %s411 = sand.u32 %s221, 1
        %s412 = smul.addr %s411, 1536
        %s413 = scalar_lea.vmem [#allocation8], %s412
        %s414 = smul.u32 16, %s28
        %s415 = ssub.s32 18, %s414
        %p416 = scmp.lt.s32.totalorder %s415, 16
        %s417 = scalar_select %p416, %s415, 16
        %s418 = smul.u32 8, %s417
        %s419 = smul.u32 %s418, 3
        %p420 = scmp.lt.s32.totalorder %s27, 1
        %s421 = scalar_select %p420, %s27, 1
        %p422 = scmp.lt.s32.totalorder %s414, 17
        %s423 = scalar_select %p422, %s414, 17
        %s424 = smul.addr %s423, 3
        %s425 = smul.addr %s421, 54
        %s426 = sadd.s32 %s424, %s425
        %s427 = smul.addr %s426, 8
        %s428 = scalar_lea.vmem %s0, %s427
        %s429 = smul.u32 16, %s28
        %s430 = ssub.s32 18, %s429
        %p431 = scmp.lt.s32.totalorder %s430, 16
        %s432 = scalar_select %p431, %s430, 16
        %s433 = smul.u32 8, %s432
        %s434 = smul.u32 %s433, 3
        %s435 = smul.u32 %s28, 16
        %s436 = sadd.s32 %s435, 16
        %p437 = scmp.lt.s32.totalorder %s27, 1
        %s438 = scalar_select %p437, %s27, 1
        %p439 = scmp.lt.s32.totalorder %s436, 17
        %s440 = scalar_select %p439, %s436, 17
        %s441 = smul.addr %s440, 3
        %s442 = smul.addr %s438, 54
        %s443 = sadd.s32 %s441, %s442
        %s444 = smul.addr %s443, 8
        %s445 = scalar_lea.vmem %s1, %s444
        %s446 = smul.u32 %s28, 16
        %s447 = sadd.s32 %s446, 16
        %s448 = smul.u32 %s28, 16
        %s449 = sadd.s32 %s448, 17
        %p450 = scmp.lt.s32.totalorder %s27, 1
        %s451 = scalar_select %p450, %s27, 1
        %p452 = scmp.lt.s32.totalorder %s449, 17
        %s453 = scalar_select %p452, %s449, 17
        %s454 = smul.addr %s453, 3
        %s455 = smul.addr %s451, 54
        %s456 = sadd.s32 %s454, %s455
        %s457 = smul.addr %s456, 8
        %s458 = scalar_lea.vmem %s2, %s457
        %s459 = smul.u32 %s28, 16
        %s460 = sadd.s32 %s459, 17
        %s461 = smul.u32 16, %s28
        %v462 = vld [vmem:[%s428] sm:$0xff]
        %v463 = vld [vmem:[%s428 + $0x8] sm:$0xff]
        %v464 = vld [vmem:[%s428 + $0x10] sm:$0x3]
        %v465 = vld [vmem:[%s428 + $0x18] sm:$0xff]
        %v466 = vld [vmem:[%s428 + $0x20] sm:$0xff]
        %v467 = vld [vmem:[%s428 + $0x28] sm:$0x3]
        %v468 = vld [vmem:[%s428 + $0x30] sm:$0xff]
        %v469 = vld [vmem:[%s428 + $0x38] sm:$0xff]
        %v470 = vld [vmem:[%s428 + $0x40] sm:$0x3]
        %v471 = vld [vmem:[%s428 + $0x48] sm:$0xff]
        %v472 = vld [vmem:[%s428 + $0x50] sm:$0xff]
        %v473 = vld [vmem:[%s428 + $0x58] sm:$0x3]
        %v474 = vld [vmem:[%s428 + $0x60] sm:$0xff]
        %v475 = vld [vmem:[%s428 + $0x68] sm:$0xff]
        %v476 = vld [vmem:[%s428 + $0x70] sm:$0x3]
        %v477 = vld [vmem:[%s428 + $0x78] sm:$0xff]
        %v478 = vld [vmem:[%s428 + $0x80] sm:$0xff]
        %v479 = vld [vmem:[%s428 + $0x88] sm:$0x3]
        %v480 = vld [vmem:[%s428 + $0x90] sm:$0xff]
        %v481 = vld [vmem:[%s428 + $0x98] sm:$0xff]
        %v482 = vld [vmem:[%s428 + $0xa0] sm:$0x3]
        %v483 = vld [vmem:[%s428 + $0xa8] sm:$0xff]
        %v484 = vld [vmem:[%s428 + $0xb0] sm:$0xff]
        %v485 = vld [vmem:[%s428 + $0xb8] sm:$0x3]
        %v486 = vld [vmem:[%s428 + $0xc0] sm:$0xff]
        %v487 = vld [vmem:[%s428 + $0xc8] sm:$0xff]
        %v488 = vld [vmem:[%s428 + $0xd0] sm:$0x3]
        %v489 = vld [vmem:[%s428 + $0xd8] sm:$0xff]
        %v490 = vld [vmem:[%s428 + $0xe0] sm:$0xff]
        %v491 = vld [vmem:[%s428 + $0xe8] sm:$0x3]
        %v492 = vld [vmem:[%s428 + $0xf0] sm:$0xff]
        %v493 = vld [vmem:[%s428 + $0xf8] sm:$0xff]
        %v494 = vld [vmem:[%s428 + $0x100] sm:$0x3]
        %v495 = vld [vmem:[%s428 + $0x108] sm:$0xff]
        %v496 = vld [vmem:[%s428 + $0x110] sm:$0xff]
        %v497 = vld [vmem:[%s428 + $0x118] sm:$0x3]
        %v498 = vld [vmem:[%s428 + $0x120] sm:$0xff]
        %v499 = vld [vmem:[%s428 + $0x128] sm:$0xff]
        %v500 = vld [vmem:[%s428 + $0x130] sm:$0x3]
        %v501 = vld [vmem:[%s428 + $0x138] sm:$0xff]
        %v502 = vld [vmem:[%s428 + $0x140] sm:$0xff]
        %v503 = vld [vmem:[%s428 + $0x148] sm:$0x3]
        %v504 = vld [vmem:[%s428 + $0x150] sm:$0xff]
        %v505 = vld [vmem:[%s428 + $0x158] sm:$0xff]
        %v506 = vld [vmem:[%s428 + $0x160] sm:$0x3]
        %v507 = vld [vmem:[%s428 + $0x168] sm:$0xff]
        %v508 = vld [vmem:[%s428 + $0x170] sm:$0xff]
        %v509 = vld [vmem:[%s428 + $0x178] sm:$0x3]
        %v510 = vld [vmem:[%s445] sm:$0xff]
        %v511 = vld [vmem:[%s445 + $0x8] sm:$0xff]
        %v512 = vld [vmem:[%s445 + $0x10] sm:$0x3]
        %v513 = vld [vmem:[%s458] sm:$0xff]
        %v514 = vld [vmem:[%s458 + $0x8] sm:$0xff]
        %v515 = vld [vmem:[%s458 + $0x10] sm:$0x3]
        %vm516 = vcmask 23552
        %v517 = vsel %vm516, %v462, 0.0
        %518 = vadd.xlane.f32.xlu0 %v517
        %v519 = vpop.xlane.xlu0 %518
        %v520 = vsel %vm516, %v463, 0.0
        %521 = vadd.xlane.f32.xlu0 %v520
        %v522 = vpop.xlane.xlu0 %521
        %vm523 = vcmask 17408
        %v524 = vsel %vm523, %v464, 0.0
        %525 = vadd.xlane.f32.xlu0 %v524
        %v526 = vpop.xlane.xlu0 %525
        %v527 = vsel %vm516, %v465, 0.0
        %528 = vadd.xlane.f32.xlu0 %v527
        %v529 = vpop.xlane.xlu0 %528
        %v530 = vsel %vm516, %v466, 0.0
        %531 = vadd.xlane.f32.xlu0 %v530
        %v532 = vpop.xlane.xlu0 %531
        %v533 = vsel %vm523, %v467, 0.0
        %534 = vadd.xlane.f32.xlu0 %v533
        %v535 = vpop.xlane.xlu0 %534
        %v536 = vsel %vm516, %v468, 0.0
        %537 = vadd.xlane.f32.xlu0 %v536
        %v538 = vpop.xlane.xlu0 %537
        %v539 = vsel %vm516, %v469, 0.0
        %540 = vadd.xlane.f32.xlu0 %v539
        %v541 = vpop.xlane.xlu0 %540
        %v542 = vsel %vm523, %v470, 0.0
        %543 = vadd.xlane.f32.xlu0 %v542
        %v544 = vpop.xlane.xlu0 %543
        %v545 = vsel %vm516, %v471, 0.0
        %546 = vadd.xlane.f32.xlu0 %v545
        %v547 = vpop.xlane.xlu0 %546
        %v548 = vsel %vm516, %v472, 0.0
        %549 = vadd.xlane.f32.xlu0 %v548
        %v550 = vpop.xlane.xlu0 %549
        %v551 = vsel %vm523, %v473, 0.0
        %552 = vadd.xlane.f32.xlu0 %v551
        %v553 = vpop.xlane.xlu0 %552
        %v554 = vsel %vm516, %v474, 0.0
        %555 = vadd.xlane.f32.xlu0 %v554
        %v556 = vpop.xlane.xlu0 %555
        %v557 = vsel %vm516, %v475, 0.0
        %558 = vadd.xlane.f32.xlu0 %v557
        %v559 = vpop.xlane.xlu0 %558
        %v560 = vsel %vm523, %v476, 0.0
        %561 = vadd.xlane.f32.xlu0 %v560
        %v562 = vpop.xlane.xlu0 %561
        %v563 = vsel %vm516, %v477, 0.0
        %564 = vadd.xlane.f32.xlu0 %v563
        %v565 = vpop.xlane.xlu0 %564
        %v566 = vsel %vm516, %v478, 0.0
        %567 = vadd.xlane.f32.xlu0 %v566
        %v568 = vpop.xlane.xlu0 %567
        %v569 = vsel %vm523, %v479, 0.0
        %570 = vadd.xlane.f32.xlu0 %v569
        %v571 = vpop.xlane.xlu0 %570
        %v572 = vsel %vm516, %v480, 0.0
        %573 = vadd.xlane.f32.xlu0 %v572
        %v574 = vpop.xlane.xlu0 %573
        %v575 = vsel %vm516, %v481, 0.0
        %576 = vadd.xlane.f32.xlu0 %v575
        %v577 = vpop.xlane.xlu0 %576
        %v578 = vsel %vm523, %v482, 0.0
        %579 = vadd.xlane.f32.xlu0 %v578
        %v580 = vpop.xlane.xlu0 %579
        %v581 = vsel %vm516, %v483, 0.0
        %582 = vadd.xlane.f32.xlu0 %v581
        %v583 = vpop.xlane.xlu0 %582
        %v584 = vsel %vm516, %v484, 0.0
        %585 = vadd.xlane.f32.xlu0 %v584
        %v586 = vpop.xlane.xlu0 %585
        %v587 = vsel %vm523, %v485, 0.0
        %588 = vadd.xlane.f32.xlu0 %v587
        %v589 = vpop.xlane.xlu0 %588
        %v590 = vsel %vm516, %v486, 0.0
        %591 = vadd.xlane.f32.xlu0 %v590
        %v592 = vpop.xlane.xlu0 %591
        %v593 = vsel %vm516, %v487, 0.0
        %594 = vadd.xlane.f32.xlu0 %v593
        %v595 = vpop.xlane.xlu0 %594
        %v596 = vsel %vm523, %v488, 0.0
        %597 = vadd.xlane.f32.xlu0 %v596
        %v598 = vpop.xlane.xlu0 %597
        %v599 = vsel %vm516, %v489, 0.0
        %600 = vadd.xlane.f32.xlu0 %v599
        %v601 = vpop.xlane.xlu0 %600
        %v602 = vsel %vm516, %v490, 0.0
        %603 = vadd.xlane.f32.xlu0 %v602
        %v604 = vpop.xlane.xlu0 %603
        %v605 = vsel %vm523, %v491, 0.0
        %606 = vadd.xlane.f32.xlu0 %v605
        %v607 = vpop.xlane.xlu0 %606
        %v608 = vsel %vm516, %v492, 0.0
        %609 = vadd.xlane.f32.xlu0 %v608
        %v610 = vpop.xlane.xlu0 %609
        %v611 = vsel %vm516, %v493, 0.0
        %612 = vadd.xlane.f32.xlu0 %v611
        %v613 = vpop.xlane.xlu0 %612
        %v614 = vsel %vm523, %v494, 0.0
        %615 = vadd.xlane.f32.xlu0 %v614
        %v616 = vpop.xlane.xlu0 %615
        %v617 = vsel %vm516, %v495, 0.0
        %618 = vadd.xlane.f32.xlu0 %v617
        %v619 = vpop.xlane.xlu0 %618
        %v620 = vsel %vm516, %v496, 0.0
        %621 = vadd.xlane.f32.xlu0 %v620
        %v622 = vpop.xlane.xlu0 %621
        %v623 = vsel %vm523, %v497, 0.0
        %624 = vadd.xlane.f32.xlu0 %v623
        %v625 = vpop.xlane.xlu0 %624
        %v626 = vsel %vm516, %v498, 0.0
        %627 = vadd.xlane.f32.xlu0 %v626
        %v628 = vpop.xlane.xlu0 %627
        %v629 = vsel %vm516, %v499, 0.0
        %630 = vadd.xlane.f32.xlu0 %v629
        %v631 = vpop.xlane.xlu0 %630
        %v632 = vsel %vm523, %v500, 0.0
        %633 = vadd.xlane.f32.xlu0 %v632
        %v634 = vpop.xlane.xlu0 %633
        %v635 = vsel %vm516, %v501, 0.0
        %636 = vadd.xlane.f32.xlu0 %v635
        %v637 = vpop.xlane.xlu0 %636
        %v638 = vsel %vm516, %v502, 0.0
        %639 = vadd.xlane.f32.xlu0 %v638
        %v640 = vpop.xlane.xlu0 %639
        %v641 = vsel %vm523, %v503, 0.0
        %642 = vadd.xlane.f32.xlu0 %v641
        %v643 = vpop.xlane.xlu0 %642
        %v644 = vsel %vm516, %v504, 0.0
        %645 = vadd.xlane.f32.xlu0 %v644
        %v646 = vpop.xlane.xlu0 %645
        %v647 = vsel %vm516, %v505, 0.0
        %648 = vadd.xlane.f32.xlu0 %v647
        %v649 = vpop.xlane.xlu0 %648
        %v650 = vsel %vm523, %v506, 0.0
        %651 = vadd.xlane.f32.xlu0 %v650
        %v652 = vpop.xlane.xlu0 %651
        %v653 = vsel %vm516, %v507, 0.0
        %654 = vadd.xlane.f32.xlu0 %v653
        %v655 = vpop.xlane.xlu0 %654
        %v656 = vsel %vm516, %v508, 0.0
        %657 = vadd.xlane.f32.xlu0 %v656
        %v658 = vpop.xlane.xlu0 %657
        %v659 = vsel %vm523, %v509, 0.0
        %660 = vadd.xlane.f32.xlu0 %v659
        %v661 = vpop.xlane.xlu0 %660
        %v662 = vsel %vm516, %v510, 0.0
        %663 = vadd.xlane.f32.xlu0 %v662
        %v664 = vpop.xlane.xlu0 %663
        %v665 = vsel %vm516, %v511, 0.0
        %666 = vadd.xlane.f32.xlu0 %v665
        %v667 = vpop.xlane.xlu0 %666
        %v668 = vsel %vm523, %v512, 0.0
        %669 = vadd.xlane.f32.xlu0 %v668
        %v670 = vpop.xlane.xlu0 %669
        %v671 = vsel %vm516, %v513, 0.0
        %672 = vadd.xlane.f32.xlu0 %v671
        %v673 = vpop.xlane.xlu0 %672
        %v674 = vsel %vm516, %v514, 0.0
        %675 = vadd.xlane.f32.xlu0 %v674
        %v676 = vpop.xlane.xlu0 %675
        %v677 = vsel %vm523, %v515, 0.0
        %678 = vadd.xlane.f32.xlu0 %v677
        %v679 = vpop.xlane.xlu0 %678
        %v680 = vrcp.pop 3.0
        %v681 = vmul.f32 3.0, %v680
        %v682 = vsub.f32 1.0, %v681
        %v683 = vmul.f32 %v680, %v682
        %v684 = vadd.f32 %v680, %v683
        %vm685 = vweird.f32 %v680
        %v686 = vsel %vm685, %v680, %v684
        %v687 = vmul.f32 %v519, %v686
        %v688 = vmul.f32 %v522, %v686
        %v689 = vmul.f32 %v526, %v686
        %v690 = vmul.f32 %v529, %v686
        %v691 = vmul.f32 %v532, %v686
        %v692 = vmul.f32 %v535, %v686
        %v693 = vmul.f32 %v538, %v686
        %v694 = vmul.f32 %v541, %v686
        %v695 = vmul.f32 %v544, %v686
        %v696 = vmul.f32 %v547, %v686
        %v697 = vmul.f32 %v550, %v686
        %v698 = vmul.f32 %v553, %v686
        %v699 = vmul.f32 %v556, %v686
        %v700 = vmul.f32 %v559, %v686
        %v701 = vmul.f32 %v562, %v686
        %v702 = vmul.f32 %v565, %v686
        %v703 = vmul.f32 %v568, %v686
        %v704 = vmul.f32 %v571, %v686
        %v705 = vmul.f32 %v574, %v686
        %v706 = vmul.f32 %v577, %v686
        %v707 = vmul.f32 %v580, %v686
        %v708 = vmul.f32 %v583, %v686
        %v709 = vmul.f32 %v586, %v686
        %v710 = vmul.f32 %v589, %v686
        %v711 = vmul.f32 %v592, %v686
        %v712 = vmul.f32 %v595, %v686
        %v713 = vmul.f32 %v598, %v686
        %v714 = vmul.f32 %v601, %v686
        %v715 = vmul.f32 %v604, %v686
        %v716 = vmul.f32 %v607, %v686
        %v717 = vmul.f32 %v610, %v686
        %v718 = vmul.f32 %v613, %v686
        %v719 = vmul.f32 %v616, %v686
        %v720 = vmul.f32 %v619, %v686
        %v721 = vmul.f32 %v622, %v686
        %v722 = vmul.f32 %v625, %v686
        %v723 = vmul.f32 %v628, %v686
        %v724 = vmul.f32 %v631, %v686
        %v725 = vmul.f32 %v634, %v686
        %v726 = vmul.f32 %v637, %v686
        %v727 = vmul.f32 %v640, %v686
        %v728 = vmul.f32 %v643, %v686
        %v729 = vmul.f32 %v646, %v686
        %v730 = vmul.f32 %v649, %v686
        %v731 = vmul.f32 %v652, %v686
        %v732 = vmul.f32 %v655, %v686
        %v733 = vmul.f32 %v658, %v686
        %v734 = vmul.f32 %v661, %v686
        %v735 = vmul.f32 %v664, %v686
        %v736 = vmul.f32 %v667, %v686
        %v737 = vmul.f32 %v670, %v686
        %v738 = vmul.f32 %v673, %v686
        %v739 = vmul.f32 %v676, %v686
        %v740 = vmul.f32 %v679, %v686
        %v741 = vsub.f32 %v462, %v687
        %v742 = vsub.f32 %v463, %v688
        %v743 = vsub.f32 %v464, %v689
        %v744 = vsub.f32 %v465, %v690
        %v745 = vsub.f32 %v466, %v691
        %v746 = vsub.f32 %v467, %v692
        %v747 = vsub.f32 %v468, %v693
        %v748 = vsub.f32 %v469, %v694
        %v749 = vsub.f32 %v470, %v695
        %v750 = vsub.f32 %v471, %v696
        %v751 = vsub.f32 %v472, %v697
        %v752 = vsub.f32 %v473, %v698
        %v753 = vsub.f32 %v474, %v699
        %v754 = vsub.f32 %v475, %v700
        %v755 = vsub.f32 %v476, %v701
        %v756 = vsub.f32 %v477, %v702
        %v757 = vsub.f32 %v478, %v703
        %v758 = vsub.f32 %v479, %v704
        %v759 = vsub.f32 %v480, %v705
        %v760 = vsub.f32 %v481, %v706
        %v761 = vsub.f32 %v482, %v707
        %v762 = vsub.f32 %v483, %v708
        %v763 = vsub.f32 %v484, %v709
        %v764 = vsub.f32 %v485, %v710
        %v765 = vsub.f32 %v486, %v711
        %v766 = vsub.f32 %v487, %v712
        %v767 = vsub.f32 %v488, %v713
        %v768 = vsub.f32 %v489, %v714
        %v769 = vsub.f32 %v490, %v715
        %v770 = vsub.f32 %v491, %v716
        %v771 = vsub.f32 %v492, %v717
        %v772 = vsub.f32 %v493, %v718
        %v773 = vsub.f32 %v494, %v719
        %v774 = vsub.f32 %v495, %v720
        %v775 = vsub.f32 %v496, %v721
        %v776 = vsub.f32 %v497, %v722
        %v777 = vsub.f32 %v498, %v723
        %v778 = vsub.f32 %v499, %v724
        %v779 = vsub.f32 %v500, %v725
        %v780 = vsub.f32 %v501, %v726
        %v781 = vsub.f32 %v502, %v727
        %v782 = vsub.f32 %v503, %v728
        %v783 = vsub.f32 %v504, %v729
        %v784 = vsub.f32 %v505, %v730
        %v785 = vsub.f32 %v506, %v731
        %v786 = vsub.f32 %v507, %v732
        %v787 = vsub.f32 %v508, %v733
        %v788 = vsub.f32 %v509, %v734
        %v789 = vsub.f32 %v510, %v735
        %v790 = vsub.f32 %v511, %v736
        %v791 = vsub.f32 %v512, %v737
        %v792 = vsub.f32 %v513, %v738
        %v793 = vsub.f32 %v514, %v739
        %v794 = vsub.f32 %v515, %v740
        %v795 = vmul.f32 %v741, %v741
        %v796 = vmul.f32 %v742, %v742
        %v797 = vmul.f32 %v743, %v743
        %v798 = vmul.f32 %v744, %v744
        %v799 = vmul.f32 %v745, %v745
        %v800 = vmul.f32 %v746, %v746
        %v801 = vmul.f32 %v747, %v747
        %v802 = vmul.f32 %v748, %v748
        %v803 = vmul.f32 %v749, %v749
        %v804 = vmul.f32 %v750, %v750
        %v805 = vmul.f32 %v751, %v751
        %v806 = vmul.f32 %v752, %v752
        %v807 = vmul.f32 %v753, %v753
        %v808 = vmul.f32 %v754, %v754
        %v809 = vmul.f32 %v755, %v755
        %v810 = vmul.f32 %v756, %v756
        %v811 = vmul.f32 %v757, %v757
        %v812 = vmul.f32 %v758, %v758
        %v813 = vmul.f32 %v759, %v759
        %v814 = vmul.f32 %v760, %v760
        %v815 = vmul.f32 %v761, %v761
        %v816 = vmul.f32 %v762, %v762
        %v817 = vmul.f32 %v763, %v763
        %v818 = vmul.f32 %v764, %v764
        %v819 = vmul.f32 %v765, %v765
        %v820 = vmul.f32 %v766, %v766
        %v821 = vmul.f32 %v767, %v767
        %v822 = vmul.f32 %v768, %v768
        %v823 = vmul.f32 %v769, %v769
        %v824 = vmul.f32 %v770, %v770
        %v825 = vmul.f32 %v771, %v771
        %v826 = vmul.f32 %v772, %v772
        %v827 = vmul.f32 %v773, %v773
        %v828 = vmul.f32 %v774, %v774
        %v829 = vmul.f32 %v775, %v775
        %v830 = vmul.f32 %v776, %v776
        %v831 = vmul.f32 %v777, %v777
        %v832 = vmul.f32 %v778, %v778
        %v833 = vmul.f32 %v779, %v779
        %v834 = vmul.f32 %v780, %v780
        %v835 = vmul.f32 %v781, %v781
        %v836 = vmul.f32 %v782, %v782
        %v837 = vmul.f32 %v783, %v783
        %v838 = vmul.f32 %v784, %v784
        %v839 = vmul.f32 %v785, %v785
        %v840 = vmul.f32 %v786, %v786
        %v841 = vmul.f32 %v787, %v787
        %v842 = vmul.f32 %v788, %v788
        %v843 = vmul.f32 %v789, %v789
        %v844 = vmul.f32 %v790, %v790
        %v845 = vmul.f32 %v791, %v791
        %v846 = vmul.f32 %v792, %v792
        %v847 = vmul.f32 %v793, %v793
        %v848 = vmul.f32 %v794, %v794
        %v849 = vsel %vm516, %v795, 0.0
        %850 = vadd.xlane.f32.xlu0 %v849
        %v851 = vpop.xlane.xlu0 %850
        %v852 = vsel %vm516, %v796, 0.0
        %853 = vadd.xlane.f32.xlu0 %v852
        %v854 = vpop.xlane.xlu0 %853
        %v855 = vsel %vm523, %v797, 0.0
        %856 = vadd.xlane.f32.xlu0 %v855
        %v857 = vpop.xlane.xlu0 %856
        %v858 = vsel %vm516, %v798, 0.0
        %859 = vadd.xlane.f32.xlu0 %v858
        %v860 = vpop.xlane.xlu0 %859
        %v861 = vsel %vm516, %v799, 0.0
        %862 = vadd.xlane.f32.xlu0 %v861
        %v863 = vpop.xlane.xlu0 %862
        %v864 = vsel %vm523, %v800, 0.0
        %865 = vadd.xlane.f32.xlu0 %v864
        %v866 = vpop.xlane.xlu0 %865
        %v867 = vsel %vm516, %v801, 0.0
        %868 = vadd.xlane.f32.xlu0 %v867
        %v869 = vpop.xlane.xlu0 %868
        %v870 = vsel %vm516, %v802, 0.0
        %871 = vadd.xlane.f32.xlu0 %v870
        %v872 = vpop.xlane.xlu0 %871
        %v873 = vsel %vm523, %v803, 0.0
        %874 = vadd.xlane.f32.xlu0 %v873
        %v875 = vpop.xlane.xlu0 %874
        %v876 = vsel %vm516, %v804, 0.0
        %877 = vadd.xlane.f32.xlu0 %v876
        %v878 = vpop.xlane.xlu0 %877
        %v879 = vsel %vm516, %v805, 0.0
        %880 = vadd.xlane.f32.xlu0 %v879
        %v881 = vpop.xlane.xlu0 %880
        %v882 = vsel %vm523, %v806, 0.0
        %883 = vadd.xlane.f32.xlu0 %v882
        %v884 = vpop.xlane.xlu0 %883
        %v885 = vsel %vm516, %v807, 0.0
        %886 = vadd.xlane.f32.xlu0 %v885
        %v887 = vpop.xlane.xlu0 %886
        %v888 = vsel %vm516, %v808, 0.0
        %889 = vadd.xlane.f32.xlu0 %v888
        %v890 = vpop.xlane.xlu0 %889
        %v891 = vsel %vm523, %v809, 0.0
        %892 = vadd.xlane.f32.xlu0 %v891
        %v893 = vpop.xlane.xlu0 %892
        %v894 = vsel %vm516, %v810, 0.0
        %895 = vadd.xlane.f32.xlu0 %v894
        %v896 = vpop.xlane.xlu0 %895
        %v897 = vsel %vm516, %v811, 0.0
        %898 = vadd.xlane.f32.xlu0 %v897
        %v899 = vpop.xlane.xlu0 %898
        %v900 = vsel %vm523, %v812, 0.0
        %901 = vadd.xlane.f32.xlu0 %v900
        %v902 = vpop.xlane.xlu0 %901
        %v903 = vsel %vm516, %v813, 0.0
        %904 = vadd.xlane.f32.xlu0 %v903
        %v905 = vpop.xlane.xlu0 %904
        %v906 = vsel %vm516, %v814, 0.0
        %907 = vadd.xlane.f32.xlu0 %v906
        %v908 = vpop.xlane.xlu0 %907
        %v909 = vsel %vm523, %v815, 0.0
        %910 = vadd.xlane.f32.xlu0 %v909
        %v911 = vpop.xlane.xlu0 %910
        %v912 = vsel %vm516, %v816, 0.0
        %913 = vadd.xlane.f32.xlu0 %v912
        %v914 = vpop.xlane.xlu0 %913
        %v915 = vsel %vm516, %v817, 0.0
        %916 = vadd.xlane.f32.xlu0 %v915
        %v917 = vpop.xlane.xlu0 %916
        %v918 = vsel %vm523, %v818, 0.0
        %919 = vadd.xlane.f32.xlu0 %v918
        %v920 = vpop.xlane.xlu0 %919
        %v921 = vsel %vm516, %v819, 0.0
        %922 = vadd.xlane.f32.xlu0 %v921
        %v923 = vpop.xlane.xlu0 %922
        %v924 = vsel %vm516, %v820, 0.0
        %925 = vadd.xlane.f32.xlu0 %v924
        %v926 = vpop.xlane.xlu0 %925
        %v927 = vsel %vm523, %v821, 0.0
        %928 = vadd.xlane.f32.xlu0 %v927
        %v929 = vpop.xlane.xlu0 %928
        %v930 = vsel %vm516, %v822, 0.0
        %931 = vadd.xlane.f32.xlu0 %v930
        %v932 = vpop.xlane.xlu0 %931
        %v933 = vsel %vm516, %v823, 0.0
        %934 = vadd.xlane.f32.xlu0 %v933
        %v935 = vpop.xlane.xlu0 %934
        %v936 = vsel %vm523, %v824, 0.0
        %937 = vadd.xlane.f32.xlu0 %v936
        %v938 = vpop.xlane.xlu0 %937
        %v939 = vsel %vm516, %v825, 0.0
        %940 = vadd.xlane.f32.xlu0 %v939
        %v941 = vpop.xlane.xlu0 %940
        %v942 = vsel %vm516, %v826, 0.0
        %943 = vadd.xlane.f32.xlu0 %v942
        %v944 = vpop.xlane.xlu0 %943
        %v945 = vsel %vm523, %v827, 0.0
        %946 = vadd.xlane.f32.xlu0 %v945
        %v947 = vpop.xlane.xlu0 %946
        %v948 = vsel %vm516, %v828, 0.0
        %949 = vadd.xlane.f32.xlu0 %v948
        %v950 = vpop.xlane.xlu0 %949
        %v951 = vsel %vm516, %v829, 0.0
        %952 = vadd.xlane.f32.xlu0 %v951
        %v953 = vpop.xlane.xlu0 %952
        %v954 = vsel %vm523, %v830, 0.0
        %955 = vadd.xlane.f32.xlu0 %v954
        %v956 = vpop.xlane.xlu0 %955
        %v957 = vsel %vm516, %v831, 0.0
        %958 = vadd.xlane.f32.xlu0 %v957
        %v959 = vpop.xlane.xlu0 %958
        %v960 = vsel %vm516, %v832, 0.0
        %961 = vadd.xlane.f32.xlu0 %v960
        %v962 = vpop.xlane.xlu0 %961
        %v963 = vsel %vm523, %v833, 0.0
        %964 = vadd.xlane.f32.xlu0 %v963
        %v965 = vpop.xlane.xlu0 %964
        %v966 = vsel %vm516, %v834, 0.0
        %967 = vadd.xlane.f32.xlu0 %v966
        %v968 = vpop.xlane.xlu0 %967
        %v969 = vsel %vm516, %v835, 0.0
        %970 = vadd.xlane.f32.xlu0 %v969
        %v971 = vpop.xlane.xlu0 %970
        %v972 = vsel %vm523, %v836, 0.0
        %973 = vadd.xlane.f32.xlu0 %v972
        %v974 = vpop.xlane.xlu0 %973
        %v975 = vsel %vm516, %v837, 0.0
        %976 = vadd.xlane.f32.xlu0 %v975
        %v977 = vpop.xlane.xlu0 %976
        %v978 = vsel %vm516, %v838, 0.0
        %979 = vadd.xlane.f32.xlu0 %v978
        %v980 = vpop.xlane.xlu0 %979
        %v981 = vsel %vm523, %v839, 0.0
        %982 = vadd.xlane.f32.xlu0 %v981
        %v983 = vpop.xlane.xlu0 %982
        %v984 = vsel %vm516, %v840, 0.0
        %985 = vadd.xlane.f32.xlu0 %v984
        %v986 = vpop.xlane.xlu0 %985
        %v987 = vsel %vm516, %v841, 0.0
        %988 = vadd.xlane.f32.xlu0 %v987
        %v989 = vpop.xlane.xlu0 %988
        %v990 = vsel %vm523, %v842, 0.0
        %991 = vadd.xlane.f32.xlu0 %v990
        %v992 = vpop.xlane.xlu0 %991
        %v993 = vsel %vm516, %v843, 0.0
        %994 = vadd.xlane.f32.xlu0 %v993
        %v995 = vpop.xlane.xlu0 %994
        %v996 = vsel %vm516, %v844, 0.0
        %997 = vadd.xlane.f32.xlu0 %v996
        %v998 = vpop.xlane.xlu0 %997
        %v999 = vsel %vm523, %v845, 0.0
        %1000 = vadd.xlane.f32.xlu0 %v999
        %v1001 = vpop.xlane.xlu0 %1000
        %v1002 = vsel %vm516, %v846, 0.0
        %1003 = vadd.xlane.f32.xlu0 %v1002
        %v1004 = vpop.xlane.xlu0 %1003
        %v1005 = vsel %vm516, %v847, 0.0
        %1006 = vadd.xlane.f32.xlu0 %v1005
        %v1007 = vpop.xlane.xlu0 %1006
        %v1008 = vsel %vm523, %v848, 0.0
        %1009 = vadd.xlane.f32.xlu0 %v1008
        %v1010 = vpop.xlane.xlu0 %1009
        %v1011 = vmul.f32 %v851, %v686
        %v1012 = vmul.f32 %v854, %v686
        %v1013 = vmul.f32 %v857, %v686
        %v1014 = vmul.f32 %v860, %v686
        %v1015 = vmul.f32 %v863, %v686
        %v1016 = vmul.f32 %v866, %v686
        %v1017 = vmul.f32 %v869, %v686
        %v1018 = vmul.f32 %v872, %v686
        %v1019 = vmul.f32 %v875, %v686
        %v1020 = vmul.f32 %v878, %v686
        %v1021 = vmul.f32 %v881, %v686
        %v1022 = vmul.f32 %v884, %v686
        %v1023 = vmul.f32 %v887, %v686
        %v1024 = vmul.f32 %v890, %v686
        %v1025 = vmul.f32 %v893, %v686
        %v1026 = vmul.f32 %v896, %v686
        %v1027 = vmul.f32 %v899, %v686
        %v1028 = vmul.f32 %v902, %v686
        %v1029 = vmul.f32 %v905, %v686
        %v1030 = vmul.f32 %v908, %v686
        %v1031 = vmul.f32 %v911, %v686
        %v1032 = vmul.f32 %v914, %v686
        %v1033 = vmul.f32 %v917, %v686
        %v1034 = vmul.f32 %v920, %v686
        %v1035 = vmul.f32 %v923, %v686
        %v1036 = vmul.f32 %v926, %v686
        %v1037 = vmul.f32 %v929, %v686
        %v1038 = vmul.f32 %v932, %v686
        %v1039 = vmul.f32 %v935, %v686
        %v1040 = vmul.f32 %v938, %v686
        %v1041 = vmul.f32 %v941, %v686
        %v1042 = vmul.f32 %v944, %v686
        %v1043 = vmul.f32 %v947, %v686
        %v1044 = vmul.f32 %v950, %v686
        %v1045 = vmul.f32 %v953, %v686
        %v1046 = vmul.f32 %v956, %v686
        %v1047 = vmul.f32 %v959, %v686
        %v1048 = vmul.f32 %v962, %v686
        %v1049 = vmul.f32 %v965, %v686
        %v1050 = vmul.f32 %v968, %v686
        %v1051 = vmul.f32 %v971, %v686
        %v1052 = vmul.f32 %v974, %v686
        %v1053 = vmul.f32 %v977, %v686
        %v1054 = vmul.f32 %v980, %v686
        %v1055 = vmul.f32 %v983, %v686
        %v1056 = vmul.f32 %v986, %v686
        %v1057 = vmul.f32 %v989, %v686
        %v1058 = vmul.f32 %v992, %v686
        %v1059 = vmul.f32 %v995, %v686
        %v1060 = vmul.f32 %v998, %v686
        %v1061 = vmul.f32 %v1001, %v686
        %v1062 = vmul.f32 %v1004, %v686
        %v1063 = vmul.f32 %v1007, %v686
        %v1064 = vmul.f32 %v1010, %v686
        %v1065 = vadd.f32 %v1011, 1e-06
        %v1066 = vadd.f32 %v1012, 1e-06
        %v1067 = vadd.f32 %v1013, 1e-06
        %v1068 = vadd.f32 %v1014, 1e-06
        %v1069 = vadd.f32 %v1015, 1e-06
        %v1070 = vadd.f32 %v1016, 1e-06
        %v1071 = vadd.f32 %v1017, 1e-06
        %v1072 = vadd.f32 %v1018, 1e-06
        %v1073 = vadd.f32 %v1019, 1e-06
        %v1074 = vadd.f32 %v1020, 1e-06
        %v1075 = vadd.f32 %v1021, 1e-06
        %v1076 = vadd.f32 %v1022, 1e-06
        %v1077 = vadd.f32 %v1023, 1e-06
        %v1078 = vadd.f32 %v1024, 1e-06
        %v1079 = vadd.f32 %v1025, 1e-06
        %v1080 = vadd.f32 %v1026, 1e-06
        %v1081 = vadd.f32 %v1027, 1e-06
        %v1082 = vadd.f32 %v1028, 1e-06
        %v1083 = vadd.f32 %v1029, 1e-06
        %v1084 = vadd.f32 %v1030, 1e-06
        %v1085 = vadd.f32 %v1031, 1e-06
        %v1086 = vadd.f32 %v1032, 1e-06
        %v1087 = vadd.f32 %v1033, 1e-06
        %v1088 = vadd.f32 %v1034, 1e-06
        %v1089 = vadd.f32 %v1035, 1e-06
        %v1090 = vadd.f32 %v1036, 1e-06
        %v1091 = vadd.f32 %v1037, 1e-06
        %v1092 = vadd.f32 %v1038, 1e-06
        %v1093 = vadd.f32 %v1039, 1e-06
        %v1094 = vadd.f32 %v1040, 1e-06
        %v1095 = vadd.f32 %v1041, 1e-06
        %v1096 = vadd.f32 %v1042, 1e-06
        %v1097 = vadd.f32 %v1043, 1e-06
        %v1098 = vadd.f32 %v1044, 1e-06
        %v1099 = vadd.f32 %v1045, 1e-06
        %v1100 = vadd.f32 %v1046, 1e-06
        %v1101 = vadd.f32 %v1047, 1e-06
        %v1102 = vadd.f32 %v1048, 1e-06
        %v1103 = vadd.f32 %v1049, 1e-06
        %v1104 = vadd.f32 %v1050, 1e-06
        %v1105 = vadd.f32 %v1051, 1e-06
        %v1106 = vadd.f32 %v1052, 1e-06
        %v1107 = vadd.f32 %v1053, 1e-06
        %v1108 = vadd.f32 %v1054, 1e-06
        %v1109 = vadd.f32 %v1055, 1e-06
        %v1110 = vadd.f32 %v1056, 1e-06
        %v1111 = vadd.f32 %v1057, 1e-06
        %v1112 = vadd.f32 %v1058, 1e-06
        %v1113 = vadd.f32 %v1059, 1e-06
        %v1114 = vadd.f32 %v1060, 1e-06
        %v1115 = vadd.f32 %v1061, 1e-06
        %v1116 = vadd.f32 %v1062, 1e-06
        %v1117 = vadd.f32 %v1063, 1e-06
        %v1118 = vadd.f32 %v1064, 1e-06
        %v1119 = vrsqrt.pop %v1065
        %v1120 = vmul.f32 %v1119, %v1065
        %v1121 = vmul.f32 %v1120, %v1119
        %v1122 = vmul.f32 0.5, %v1121
        %v1123 = vsub.f32 1.5, %v1122
        %v1124 = vmul.f32 %v1119, %v1123
        %vm1125 = vweird.f32 %v1065
        %vm1126 = vweird.f32 %v1119
        %vm1127 = vmor %vm1125, %vm1126
        %v1128 = vsel %vm1127, %v1119, %v1124
        %v1129 = vrsqrt.pop %v1066
        %v1130 = vmul.f32 %v1129, %v1066
        %v1131 = vmul.f32 %v1130, %v1129
        %v1132 = vmul.f32 0.5, %v1131
        %v1133 = vsub.f32 1.5, %v1132
        %v1134 = vmul.f32 %v1129, %v1133
        %vm1135 = vweird.f32 %v1066
        %vm1136 = vweird.f32 %v1129
        %vm1137 = vmor %vm1135, %vm1136
        %v1138 = vsel %vm1137, %v1129, %v1134
        %v1139 = vrsqrt.pop %v1067
        %v1140 = vmul.f32 %v1139, %v1067
        %v1141 = vmul.f32 %v1140, %v1139
        %v1142 = vmul.f32 0.5, %v1141
        %v1143 = vsub.f32 1.5, %v1142
        %v1144 = vmul.f32 %v1139, %v1143
        %vm1145 = vweird.f32 %v1067
        %vm1146 = vweird.f32 %v1139
        %vm1147 = vmor %vm1145, %vm1146
        %v1148 = vsel %vm1147, %v1139, %v1144
        %v1149 = vrsqrt.pop %v1068
        %v1150 = vmul.f32 %v1149, %v1068
        %v1151 = vmul.f32 %v1150, %v1149
        %v1152 = vmul.f32 0.5, %v1151
        %v1153 = vsub.f32 1.5, %v1152
        %v1154 = vmul.f32 %v1149, %v1153
        %vm1155 = vweird.f32 %v1068
        %vm1156 = vweird.f32 %v1149
        %vm1157 = vmor %vm1155, %vm1156
        %v1158 = vsel %vm1157, %v1149, %v1154
        %v1159 = vrsqrt.pop %v1069
        %v1160 = vmul.f32 %v1159, %v1069
        %v1161 = vmul.f32 %v1160, %v1159
        %v1162 = vmul.f32 0.5, %v1161
        %v1163 = vsub.f32 1.5, %v1162
        %v1164 = vmul.f32 %v1159, %v1163
        %vm1165 = vweird.f32 %v1069
        %vm1166 = vweird.f32 %v1159
        %vm1167 = vmor %vm1165, %vm1166
        %v1168 = vsel %vm1167, %v1159, %v1164
        %v1169 = vrsqrt.pop %v1070
        %v1170 = vmul.f32 %v1169, %v1070
        %v1171 = vmul.f32 %v1170, %v1169
        %v1172 = vmul.f32 0.5, %v1171
        %v1173 = vsub.f32 1.5, %v1172
        %v1174 = vmul.f32 %v1169, %v1173
        %vm1175 = vweird.f32 %v1070
        %vm1176 = vweird.f32 %v1169
        %vm1177 = vmor %vm1175, %vm1176
        %v1178 = vsel %vm1177, %v1169, %v1174
        %v1179 = vrsqrt.pop %v1071
        %v1180 = vmul.f32 %v1179, %v1071
        %v1181 = vmul.f32 %v1180, %v1179
        %v1182 = vmul.f32 0.5, %v1181
        %v1183 = vsub.f32 1.5, %v1182
        %v1184 = vmul.f32 %v1179, %v1183
        %vm1185 = vweird.f32 %v1071
        %vm1186 = vweird.f32 %v1179
        %vm1187 = vmor %vm1185, %vm1186
        %v1188 = vsel %vm1187, %v1179, %v1184
        %v1189 = vrsqrt.pop %v1072
        %v1190 = vmul.f32 %v1189, %v1072
        %v1191 = vmul.f32 %v1190, %v1189
        %v1192 = vmul.f32 0.5, %v1191
        %v1193 = vsub.f32 1.5, %v1192
        %v1194 = vmul.f32 %v1189, %v1193
        %vm1195 = vweird.f32 %v1072
        %vm1196 = vweird.f32 %v1189
        %vm1197 = vmor %vm1195, %vm1196
        %v1198 = vsel %vm1197, %v1189, %v1194
        %v1199 = vrsqrt.pop %v1073
        %v1200 = vmul.f32 %v1199, %v1073
        %v1201 = vmul.f32 %v1200, %v1199
        %v1202 = vmul.f32 0.5, %v1201
        %v1203 = vsub.f32 1.5, %v1202
        %v1204 = vmul.f32 %v1199, %v1203
        %vm1205 = vweird.f32 %v1073
        %vm1206 = vweird.f32 %v1199
        %vm1207 = vmor %vm1205, %vm1206
        %v1208 = vsel %vm1207, %v1199, %v1204
        %v1209 = vrsqrt.pop %v1074
        %v1210 = vmul.f32 %v1209, %v1074
        %v1211 = vmul.f32 %v1210, %v1209
        %v1212 = vmul.f32 0.5, %v1211
        %v1213 = vsub.f32 1.5, %v1212
        %v1214 = vmul.f32 %v1209, %v1213
        %vm1215 = vweird.f32 %v1074
        %vm1216 = vweird.f32 %v1209
        %vm1217 = vmor %vm1215, %vm1216
        %v1218 = vsel %vm1217, %v1209, %v1214
        %v1219 = vrsqrt.pop %v1075
        %v1220 = vmul.f32 %v1219, %v1075
        %v1221 = vmul.f32 %v1220, %v1219
        %v1222 = vmul.f32 0.5, %v1221
        %v1223 = vsub.f32 1.5, %v1222
        %v1224 = vmul.f32 %v1219, %v1223
        %vm1225 = vweird.f32 %v1075
        %vm1226 = vweird.f32 %v1219
        %vm1227 = vmor %vm1225, %vm1226
        %v1228 = vsel %vm1227, %v1219, %v1224
        %v1229 = vrsqrt.pop %v1076
        %v1230 = vmul.f32 %v1229, %v1076
        %v1231 = vmul.f32 %v1230, %v1229
        %v1232 = vmul.f32 0.5, %v1231
        %v1233 = vsub.f32 1.5, %v1232
        %v1234 = vmul.f32 %v1229, %v1233
        %vm1235 = vweird.f32 %v1076
        %vm1236 = vweird.f32 %v1229
        %vm1237 = vmor %vm1235, %vm1236
        %v1238 = vsel %vm1237, %v1229, %v1234
        %v1239 = vrsqrt.pop %v1077
        %v1240 = vmul.f32 %v1239, %v1077
        %v1241 = vmul.f32 %v1240, %v1239
        %v1242 = vmul.f32 0.5, %v1241
        %v1243 = vsub.f32 1.5, %v1242
        %v1244 = vmul.f32 %v1239, %v1243
        %vm1245 = vweird.f32 %v1077
        %vm1246 = vweird.f32 %v1239
        %vm1247 = vmor %vm1245, %vm1246
        %v1248 = vsel %vm1247, %v1239, %v1244
        %v1249 = vrsqrt.pop %v1078
        %v1250 = vmul.f32 %v1249, %v1078
        %v1251 = vmul.f32 %v1250, %v1249
        %v1252 = vmul.f32 0.5, %v1251
        %v1253 = vsub.f32 1.5, %v1252
        %v1254 = vmul.f32 %v1249, %v1253
        %vm1255 = vweird.f32 %v1078
        %vm1256 = vweird.f32 %v1249
        %vm1257 = vmor %vm1255, %vm1256
        %v1258 = vsel %vm1257, %v1249, %v1254
        %v1259 = vrsqrt.pop %v1079
        %v1260 = vmul.f32 %v1259, %v1079
        %v1261 = vmul.f32 %v1260, %v1259
        %v1262 = vmul.f32 0.5, %v1261
        %v1263 = vsub.f32 1.5, %v1262
        %v1264 = vmul.f32 %v1259, %v1263
        %vm1265 = vweird.f32 %v1079
        %vm1266 = vweird.f32 %v1259
        %vm1267 = vmor %vm1265, %vm1266
        %v1268 = vsel %vm1267, %v1259, %v1264
        %v1269 = vrsqrt.pop %v1080
        %v1270 = vmul.f32 %v1269, %v1080
        %v1271 = vmul.f32 %v1270, %v1269
        %v1272 = vmul.f32 0.5, %v1271
        %v1273 = vsub.f32 1.5, %v1272
        %v1274 = vmul.f32 %v1269, %v1273
        %vm1275 = vweird.f32 %v1080
        %vm1276 = vweird.f32 %v1269
        %vm1277 = vmor %vm1275, %vm1276
        %v1278 = vsel %vm1277, %v1269, %v1274
        %v1279 = vrsqrt.pop %v1081
        %v1280 = vmul.f32 %v1279, %v1081
        %v1281 = vmul.f32 %v1280, %v1279
        %v1282 = vmul.f32 0.5, %v1281
        %v1283 = vsub.f32 1.5, %v1282
        %v1284 = vmul.f32 %v1279, %v1283
        %vm1285 = vweird.f32 %v1081
        %vm1286 = vweird.f32 %v1279
        %vm1287 = vmor %vm1285, %vm1286
        %v1288 = vsel %vm1287, %v1279, %v1284
        %v1289 = vrsqrt.pop %v1082
        %v1290 = vmul.f32 %v1289, %v1082
        %v1291 = vmul.f32 %v1290, %v1289
        %v1292 = vmul.f32 0.5, %v1291
        %v1293 = vsub.f32 1.5, %v1292
        %v1294 = vmul.f32 %v1289, %v1293
        %vm1295 = vweird.f32 %v1082
        %vm1296 = vweird.f32 %v1289
        %vm1297 = vmor %vm1295, %vm1296
        %v1298 = vsel %vm1297, %v1289, %v1294
        %v1299 = vrsqrt.pop %v1083
        %v1300 = vmul.f32 %v1299, %v1083
        %v1301 = vmul.f32 %v1300, %v1299
        %v1302 = vmul.f32 0.5, %v1301
        %v1303 = vsub.f32 1.5, %v1302
        %v1304 = vmul.f32 %v1299, %v1303
        %vm1305 = vweird.f32 %v1083
        %vm1306 = vweird.f32 %v1299
        %vm1307 = vmor %vm1305, %vm1306
        %v1308 = vsel %vm1307, %v1299, %v1304
        %v1309 = vrsqrt.pop %v1084
        %v1310 = vmul.f32 %v1309, %v1084
        %v1311 = vmul.f32 %v1310, %v1309
        %v1312 = vmul.f32 0.5, %v1311
        %v1313 = vsub.f32 1.5, %v1312
        %v1314 = vmul.f32 %v1309, %v1313
        %vm1315 = vweird.f32 %v1084
        %vm1316 = vweird.f32 %v1309
        %vm1317 = vmor %vm1315, %vm1316
        %v1318 = vsel %vm1317, %v1309, %v1314
        %v1319 = vrsqrt.pop %v1085
        %v1320 = vmul.f32 %v1319, %v1085
        %v1321 = vmul.f32 %v1320, %v1319
        %v1322 = vmul.f32 0.5, %v1321
        %v1323 = vsub.f32 1.5, %v1322
        %v1324 = vmul.f32 %v1319, %v1323
        %vm1325 = vweird.f32 %v1085
        %vm1326 = vweird.f32 %v1319
        %vm1327 = vmor %vm1325, %vm1326
        %v1328 = vsel %vm1327, %v1319, %v1324
        %v1329 = vrsqrt.pop %v1086
        %v1330 = vmul.f32 %v1329, %v1086
        %v1331 = vmul.f32 %v1330, %v1329
        %v1332 = vmul.f32 0.5, %v1331
        %v1333 = vsub.f32 1.5, %v1332
        %v1334 = vmul.f32 %v1329, %v1333
        %vm1335 = vweird.f32 %v1086
        %vm1336 = vweird.f32 %v1329
        %vm1337 = vmor %vm1335, %vm1336
        %v1338 = vsel %vm1337, %v1329, %v1334
        %v1339 = vrsqrt.pop %v1087
        %v1340 = vmul.f32 %v1339, %v1087
        %v1341 = vmul.f32 %v1340, %v1339
        %v1342 = vmul.f32 0.5, %v1341
        %v1343 = vsub.f32 1.5, %v1342
        %v1344 = vmul.f32 %v1339, %v1343
        %vm1345 = vweird.f32 %v1087
        %vm1346 = vweird.f32 %v1339
        %vm1347 = vmor %vm1345, %vm1346
        %v1348 = vsel %vm1347, %v1339, %v1344
        %v1349 = vrsqrt.pop %v1088
        %v1350 = vmul.f32 %v1349, %v1088
        %v1351 = vmul.f32 %v1350, %v1349
        %v1352 = vmul.f32 0.5, %v1351
        %v1353 = vsub.f32 1.5, %v1352
        %v1354 = vmul.f32 %v1349, %v1353
        %vm1355 = vweird.f32 %v1088
        %vm1356 = vweird.f32 %v1349
        %vm1357 = vmor %vm1355, %vm1356
        %v1358 = vsel %vm1357, %v1349, %v1354
        %v1359 = vrsqrt.pop %v1089
        %v1360 = vmul.f32 %v1359, %v1089
        %v1361 = vmul.f32 %v1360, %v1359
        %v1362 = vmul.f32 0.5, %v1361
        %v1363 = vsub.f32 1.5, %v1362
        %v1364 = vmul.f32 %v1359, %v1363
        %vm1365 = vweird.f32 %v1089
        %vm1366 = vweird.f32 %v1359
        %vm1367 = vmor %vm1365, %vm1366
        %v1368 = vsel %vm1367, %v1359, %v1364
        %v1369 = vrsqrt.pop %v1090
        %v1370 = vmul.f32 %v1369, %v1090
        %v1371 = vmul.f32 %v1370, %v1369
        %v1372 = vmul.f32 0.5, %v1371
        %v1373 = vsub.f32 1.5, %v1372
        %v1374 = vmul.f32 %v1369, %v1373
        %vm1375 = vweird.f32 %v1090
        %vm1376 = vweird.f32 %v1369
        %vm1377 = vmor %vm1375, %vm1376
        %v1378 = vsel %vm1377, %v1369, %v1374
        %v1379 = vrsqrt.pop %v1091
        %v1380 = vmul.f32 %v1379, %v1091
        %v1381 = vmul.f32 %v1380, %v1379
        %v1382 = vmul.f32 0.5, %v1381
        %v1383 = vsub.f32 1.5, %v1382
        %v1384 = vmul.f32 %v1379, %v1383
        %vm1385 = vweird.f32 %v1091
        %vm1386 = vweird.f32 %v1379
        %vm1387 = vmor %vm1385, %vm1386
        %v1388 = vsel %vm1387, %v1379, %v1384
        %v1389 = vrsqrt.pop %v1092
        %v1390 = vmul.f32 %v1389, %v1092
        %v1391 = vmul.f32 %v1390, %v1389
        %v1392 = vmul.f32 0.5, %v1391
        %v1393 = vsub.f32 1.5, %v1392
        %v1394 = vmul.f32 %v1389, %v1393
        %vm1395 = vweird.f32 %v1092
        %vm1396 = vweird.f32 %v1389
        %vm1397 = vmor %vm1395, %vm1396
        %v1398 = vsel %vm1397, %v1389, %v1394
        %v1399 = vrsqrt.pop %v1093
        %v1400 = vmul.f32 %v1399, %v1093
        %v1401 = vmul.f32 %v1400, %v1399
        %v1402 = vmul.f32 0.5, %v1401
        %v1403 = vsub.f32 1.5, %v1402
        %v1404 = vmul.f32 %v1399, %v1403
        %vm1405 = vweird.f32 %v1093
        %vm1406 = vweird.f32 %v1399
        %vm1407 = vmor %vm1405, %vm1406
        %v1408 = vsel %vm1407, %v1399, %v1404
        %v1409 = vrsqrt.pop %v1094
        %v1410 = vmul.f32 %v1409, %v1094
        %v1411 = vmul.f32 %v1410, %v1409
        %v1412 = vmul.f32 0.5, %v1411
        %v1413 = vsub.f32 1.5, %v1412
        %v1414 = vmul.f32 %v1409, %v1413
        %vm1415 = vweird.f32 %v1094
        %vm1416 = vweird.f32 %v1409
        %vm1417 = vmor %vm1415, %vm1416
        %v1418 = vsel %vm1417, %v1409, %v1414
        %v1419 = vrsqrt.pop %v1095
        %v1420 = vmul.f32 %v1419, %v1095
        %v1421 = vmul.f32 %v1420, %v1419
        %v1422 = vmul.f32 0.5, %v1421
        %v1423 = vsub.f32 1.5, %v1422
        %v1424 = vmul.f32 %v1419, %v1423
        %vm1425 = vweird.f32 %v1095
        %vm1426 = vweird.f32 %v1419
        %vm1427 = vmor %vm1425, %vm1426
        %v1428 = vsel %vm1427, %v1419, %v1424
        %v1429 = vrsqrt.pop %v1096
        %v1430 = vmul.f32 %v1429, %v1096
        %v1431 = vmul.f32 %v1430, %v1429
        %v1432 = vmul.f32 0.5, %v1431
        %v1433 = vsub.f32 1.5, %v1432
        %v1434 = vmul.f32 %v1429, %v1433
        %vm1435 = vweird.f32 %v1096
        %vm1436 = vweird.f32 %v1429
        %vm1437 = vmor %vm1435, %vm1436
        %v1438 = vsel %vm1437, %v1429, %v1434
        %v1439 = vrsqrt.pop %v1097
        %v1440 = vmul.f32 %v1439, %v1097
        %v1441 = vmul.f32 %v1440, %v1439
        %v1442 = vmul.f32 0.5, %v1441
        %v1443 = vsub.f32 1.5, %v1442
        %v1444 = vmul.f32 %v1439, %v1443
        %vm1445 = vweird.f32 %v1097
        %vm1446 = vweird.f32 %v1439
        %vm1447 = vmor %vm1445, %vm1446
        %v1448 = vsel %vm1447, %v1439, %v1444
        %v1449 = vrsqrt.pop %v1098
        %v1450 = vmul.f32 %v1449, %v1098
        %v1451 = vmul.f32 %v1450, %v1449
        %v1452 = vmul.f32 0.5, %v1451
        %v1453 = vsub.f32 1.5, %v1452
        %v1454 = vmul.f32 %v1449, %v1453
        %vm1455 = vweird.f32 %v1098
        %vm1456 = vweird.f32 %v1449
        %vm1457 = vmor %vm1455, %vm1456
        %v1458 = vsel %vm1457, %v1449, %v1454
        %v1459 = vrsqrt.pop %v1099
        %v1460 = vmul.f32 %v1459, %v1099
        %v1461 = vmul.f32 %v1460, %v1459
        %v1462 = vmul.f32 0.5, %v1461
        %v1463 = vsub.f32 1.5, %v1462
        %v1464 = vmul.f32 %v1459, %v1463
        %vm1465 = vweird.f32 %v1099
        %vm1466 = vweird.f32 %v1459
        %vm1467 = vmor %vm1465, %vm1466
        %v1468 = vsel %vm1467, %v1459, %v1464
        %v1469 = vrsqrt.pop %v1100
        %v1470 = vmul.f32 %v1469, %v1100
        %v1471 = vmul.f32 %v1470, %v1469
        %v1472 = vmul.f32 0.5, %v1471
        %v1473 = vsub.f32 1.5, %v1472
        %v1474 = vmul.f32 %v1469, %v1473
        %vm1475 = vweird.f32 %v1100
        %vm1476 = vweird.f32 %v1469
        %vm1477 = vmor %vm1475, %vm1476
        %v1478 = vsel %vm1477, %v1469, %v1474
        %v1479 = vrsqrt.pop %v1101
        %v1480 = vmul.f32 %v1479, %v1101
        %v1481 = vmul.f32 %v1480, %v1479
        %v1482 = vmul.f32 0.5, %v1481
        %v1483 = vsub.f32 1.5, %v1482
        %v1484 = vmul.f32 %v1479, %v1483
        %vm1485 = vweird.f32 %v1101
        %vm1486 = vweird.f32 %v1479
        %vm1487 = vmor %vm1485, %vm1486
        %v1488 = vsel %vm1487, %v1479, %v1484
        %v1489 = vrsqrt.pop %v1102
        %v1490 = vmul.f32 %v1489, %v1102
        %v1491 = vmul.f32 %v1490, %v1489
        %v1492 = vmul.f32 0.5, %v1491
        %v1493 = vsub.f32 1.5, %v1492
        %v1494 = vmul.f32 %v1489, %v1493
        %vm1495 = vweird.f32 %v1102
        %vm1496 = vweird.f32 %v1489
        %vm1497 = vmor %vm1495, %vm1496
        %v1498 = vsel %vm1497, %v1489, %v1494
        %v1499 = vrsqrt.pop %v1103
        %v1500 = vmul.f32 %v1499, %v1103
        %v1501 = vmul.f32 %v1500, %v1499
        %v1502 = vmul.f32 0.5, %v1501
        %v1503 = vsub.f32 1.5, %v1502
        %v1504 = vmul.f32 %v1499, %v1503
        %vm1505 = vweird.f32 %v1103
        %vm1506 = vweird.f32 %v1499
        %vm1507 = vmor %vm1505, %vm1506
        %v1508 = vsel %vm1507, %v1499, %v1504
        %v1509 = vrsqrt.pop %v1104
        %v1510 = vmul.f32 %v1509, %v1104
        %v1511 = vmul.f32 %v1510, %v1509
        %v1512 = vmul.f32 0.5, %v1511
        %v1513 = vsub.f32 1.5, %v1512
        %v1514 = vmul.f32 %v1509, %v1513
        %vm1515 = vweird.f32 %v1104
        %vm1516 = vweird.f32 %v1509
        %vm1517 = vmor %vm1515, %vm1516
        %v1518 = vsel %vm1517, %v1509, %v1514
        %v1519 = vrsqrt.pop %v1105
        %v1520 = vmul.f32 %v1519, %v1105
        %v1521 = vmul.f32 %v1520, %v1519
        %v1522 = vmul.f32 0.5, %v1521
        %v1523 = vsub.f32 1.5, %v1522
        %v1524 = vmul.f32 %v1519, %v1523
        %vm1525 = vweird.f32 %v1105
        %vm1526 = vweird.f32 %v1519
        %vm1527 = vmor %vm1525, %vm1526
        %v1528 = vsel %vm1527, %v1519, %v1524
        %v1529 = vrsqrt.pop %v1106
        %v1530 = vmul.f32 %v1529, %v1106
        %v1531 = vmul.f32 %v1530, %v1529
        %v1532 = vmul.f32 0.5, %v1531
        %v1533 = vsub.f32 1.5, %v1532
        %v1534 = vmul.f32 %v1529, %v1533
        %vm1535 = vweird.f32 %v1106
        %vm1536 = vweird.f32 %v1529
        %vm1537 = vmor %vm1535, %vm1536
        %v1538 = vsel %vm1537, %v1529, %v1534
        %v1539 = vrsqrt.pop %v1107
        %v1540 = vmul.f32 %v1539, %v1107
        %v1541 = vmul.f32 %v1540, %v1539
        %v1542 = vmul.f32 0.5, %v1541
        %v1543 = vsub.f32 1.5, %v1542
        %v1544 = vmul.f32 %v1539, %v1543
        %vm1545 = vweird.f32 %v1107
        %vm1546 = vweird.f32 %v1539
        %vm1547 = vmor %vm1545, %vm1546
        %v1548 = vsel %vm1547, %v1539, %v1544
        %v1549 = vrsqrt.pop %v1108
        %v1550 = vmul.f32 %v1549, %v1108
        %v1551 = vmul.f32 %v1550, %v1549
        %v1552 = vmul.f32 0.5, %v1551
        %v1553 = vsub.f32 1.5, %v1552
        %v1554 = vmul.f32 %v1549, %v1553
        %vm1555 = vweird.f32 %v1108
        %vm1556 = vweird.f32 %v1549
        %vm1557 = vmor %vm1555, %vm1556
        %v1558 = vsel %vm1557, %v1549, %v1554
        %v1559 = vrsqrt.pop %v1109
        %v1560 = vmul.f32 %v1559, %v1109
        %v1561 = vmul.f32 %v1560, %v1559
        %v1562 = vmul.f32 0.5, %v1561
        %v1563 = vsub.f32 1.5, %v1562
        %v1564 = vmul.f32 %v1559, %v1563
        %vm1565 = vweird.f32 %v1109
        %vm1566 = vweird.f32 %v1559
        %vm1567 = vmor %vm1565, %vm1566
        %v1568 = vsel %vm1567, %v1559, %v1564
        %v1569 = vrsqrt.pop %v1110
        %v1570 = vmul.f32 %v1569, %v1110
        %v1571 = vmul.f32 %v1570, %v1569
        %v1572 = vmul.f32 0.5, %v1571
        %v1573 = vsub.f32 1.5, %v1572
        %v1574 = vmul.f32 %v1569, %v1573
        %vm1575 = vweird.f32 %v1110
        %vm1576 = vweird.f32 %v1569
        %vm1577 = vmor %vm1575, %vm1576
        %v1578 = vsel %vm1577, %v1569, %v1574
        %v1579 = vrsqrt.pop %v1111
        %v1580 = vmul.f32 %v1579, %v1111
        %v1581 = vmul.f32 %v1580, %v1579
        %v1582 = vmul.f32 0.5, %v1581
        %v1583 = vsub.f32 1.5, %v1582
        %v1584 = vmul.f32 %v1579, %v1583
        %vm1585 = vweird.f32 %v1111
        %vm1586 = vweird.f32 %v1579
        %vm1587 = vmor %vm1585, %vm1586
        %v1588 = vsel %vm1587, %v1579, %v1584
        %v1589 = vrsqrt.pop %v1112
        %v1590 = vmul.f32 %v1589, %v1112
        %v1591 = vmul.f32 %v1590, %v1589
        %v1592 = vmul.f32 0.5, %v1591
        %v1593 = vsub.f32 1.5, %v1592
        %v1594 = vmul.f32 %v1589, %v1593
        %vm1595 = vweird.f32 %v1112
        %vm1596 = vweird.f32 %v1589
        %vm1597 = vmor %vm1595, %vm1596
        %v1598 = vsel %vm1597, %v1589, %v1594
        %v1599 = vrsqrt.pop %v1113
        %v1600 = vmul.f32 %v1599, %v1113
        %v1601 = vmul.f32 %v1600, %v1599
        %v1602 = vmul.f32 0.5, %v1601
        %v1603 = vsub.f32 1.5, %v1602
        %v1604 = vmul.f32 %v1599, %v1603
        %vm1605 = vweird.f32 %v1113
        %vm1606 = vweird.f32 %v1599
        %vm1607 = vmor %vm1605, %vm1606
        %v1608 = vsel %vm1607, %v1599, %v1604
        %v1609 = vrsqrt.pop %v1114
        %v1610 = vmul.f32 %v1609, %v1114
        %v1611 = vmul.f32 %v1610, %v1609
        %v1612 = vmul.f32 0.5, %v1611
        %v1613 = vsub.f32 1.5, %v1612
        %v1614 = vmul.f32 %v1609, %v1613
        %vm1615 = vweird.f32 %v1114
        %vm1616 = vweird.f32 %v1609
        %vm1617 = vmor %vm1615, %vm1616
        %v1618 = vsel %vm1617, %v1609, %v1614
        %v1619 = vrsqrt.pop %v1115
        %v1620 = vmul.f32 %v1619, %v1115
        %v1621 = vmul.f32 %v1620, %v1619
        %v1622 = vmul.f32 0.5, %v1621
        %v1623 = vsub.f32 1.5, %v1622
        %v1624 = vmul.f32 %v1619, %v1623
        %vm1625 = vweird.f32 %v1115
        %vm1626 = vweird.f32 %v1619
        %vm1627 = vmor %vm1625, %vm1626
        %v1628 = vsel %vm1627, %v1619, %v1624
        %v1629 = vrsqrt.pop %v1116
        %v1630 = vmul.f32 %v1629, %v1116
        %v1631 = vmul.f32 %v1630, %v1629
        %v1632 = vmul.f32 0.5, %v1631
        %v1633 = vsub.f32 1.5, %v1632
        %v1634 = vmul.f32 %v1629, %v1633
        %vm1635 = vweird.f32 %v1116
        %vm1636 = vweird.f32 %v1629
        %vm1637 = vmor %vm1635, %vm1636
        %v1638 = vsel %vm1637, %v1629, %v1634
        %v1639 = vrsqrt.pop %v1117
        %v1640 = vmul.f32 %v1639, %v1117
        %v1641 = vmul.f32 %v1640, %v1639
        %v1642 = vmul.f32 0.5, %v1641
        %v1643 = vsub.f32 1.5, %v1642
        %v1644 = vmul.f32 %v1639, %v1643
        %vm1645 = vweird.f32 %v1117
        %vm1646 = vweird.f32 %v1639
        %vm1647 = vmor %vm1645, %vm1646
        %v1648 = vsel %vm1647, %v1639, %v1644
        %v1649 = vrsqrt.pop %v1118
        %v1650 = vmul.f32 %v1649, %v1118
        %v1651 = vmul.f32 %v1650, %v1649
        %v1652 = vmul.f32 0.5, %v1651
        %v1653 = vsub.f32 1.5, %v1652
        %v1654 = vmul.f32 %v1649, %v1653
        %vm1655 = vweird.f32 %v1118
        %vm1656 = vweird.f32 %v1649
        %vm1657 = vmor %vm1655, %vm1656
        %v1658 = vsel %vm1657, %v1649, %v1654
        %v1659 = vmul.f32 %v741, %v1128
        %v1660 = vmul.f32 %v742, %v1138
        %v1661 = vmul.f32 %v743, %v1148
        %v1662 = vmul.f32 %v744, %v1158
        %v1663 = vmul.f32 %v745, %v1168
        %v1664 = vmul.f32 %v746, %v1178
        %v1665 = vmul.f32 %v747, %v1188
        %v1666 = vmul.f32 %v748, %v1198
        %v1667 = vmul.f32 %v749, %v1208
        %v1668 = vmul.f32 %v750, %v1218
        %v1669 = vmul.f32 %v751, %v1228
        %v1670 = vmul.f32 %v752, %v1238
        %v1671 = vmul.f32 %v753, %v1248
        %v1672 = vmul.f32 %v754, %v1258
        %v1673 = vmul.f32 %v755, %v1268
        %v1674 = vmul.f32 %v756, %v1278
        %v1675 = vmul.f32 %v757, %v1288
        %v1676 = vmul.f32 %v758, %v1298
        %v1677 = vmul.f32 %v759, %v1308
        %v1678 = vmul.f32 %v760, %v1318
        %v1679 = vmul.f32 %v761, %v1328
        %v1680 = vmul.f32 %v762, %v1338
        %v1681 = vmul.f32 %v763, %v1348
        %v1682 = vmul.f32 %v764, %v1358
        %v1683 = vmul.f32 %v765, %v1368
        %v1684 = vmul.f32 %v766, %v1378
        %v1685 = vmul.f32 %v767, %v1388
        %v1686 = vmul.f32 %v768, %v1398
        %v1687 = vmul.f32 %v769, %v1408
        %v1688 = vmul.f32 %v770, %v1418
        %v1689 = vmul.f32 %v771, %v1428
        %v1690 = vmul.f32 %v772, %v1438
        %v1691 = vmul.f32 %v773, %v1448
        %v1692 = vmul.f32 %v774, %v1458
        %v1693 = vmul.f32 %v775, %v1468
        %v1694 = vmul.f32 %v776, %v1478
        %v1695 = vmul.f32 %v777, %v1488
        %v1696 = vmul.f32 %v778, %v1498
        %v1697 = vmul.f32 %v779, %v1508
        %v1698 = vmul.f32 %v780, %v1518
        %v1699 = vmul.f32 %v781, %v1528
        %v1700 = vmul.f32 %v782, %v1538
        %v1701 = vmul.f32 %v783, %v1548
        %v1702 = vmul.f32 %v784, %v1558
        %v1703 = vmul.f32 %v785, %v1568
        %v1704 = vmul.f32 %v786, %v1578
        %v1705 = vmul.f32 %v787, %v1588
        %v1706 = vmul.f32 %v788, %v1598
        %v1707 = vmul.f32 %v789, %v1608
        %v1708 = vmul.f32 %v790, %v1618
        %v1709 = vmul.f32 %v791, %v1628
        %v1710 = vmul.f32 %v792, %v1638
        %v1711 = vmul.f32 %v793, %v1648
        %v1712 = vmul.f32 %v794, %v1658
        %v1713 = vld [vmem:[#allocation3] sm:$0x1]
        %v1715 = vperm.slane %v1713, 0
        %v1717 = vmul.f32 %v1659, %v1715
        %v1718 = vmul.f32 %v1660, %v1715
        %v1719 = vmul.f32 %v1661, %v1715
        %v1720 = vmul.f32 %v1662, %v1715
        %v1721 = vmul.f32 %v1663, %v1715
        %v1722 = vmul.f32 %v1664, %v1715
        %v1723 = vmul.f32 %v1665, %v1715
        %v1724 = vmul.f32 %v1666, %v1715
        %v1725 = vmul.f32 %v1667, %v1715
        %v1726 = vmul.f32 %v1668, %v1715
        %v1727 = vmul.f32 %v1669, %v1715
        %v1728 = vmul.f32 %v1670, %v1715
        %v1729 = vmul.f32 %v1671, %v1715
        %v1730 = vmul.f32 %v1672, %v1715
        %v1731 = vmul.f32 %v1673, %v1715
        %v1732 = vmul.f32 %v1674, %v1715
        %v1733 = vmul.f32 %v1675, %v1715
        %v1734 = vmul.f32 %v1676, %v1715
        %v1735 = vmul.f32 %v1677, %v1715
        %v1736 = vmul.f32 %v1678, %v1715
        %v1737 = vmul.f32 %v1679, %v1715
        %v1738 = vmul.f32 %v1680, %v1715
        %v1739 = vmul.f32 %v1681, %v1715
        %v1740 = vmul.f32 %v1682, %v1715
        %v1741 = vmul.f32 %v1683, %v1715
        %v1742 = vmul.f32 %v1684, %v1715
        %v1743 = vmul.f32 %v1685, %v1715
        %v1744 = vmul.f32 %v1686, %v1715
        %v1745 = vmul.f32 %v1687, %v1715
        %v1746 = vmul.f32 %v1688, %v1715
        %v1747 = vmul.f32 %v1689, %v1715
        %v1748 = vmul.f32 %v1690, %v1715
        %v1749 = vmul.f32 %v1691, %v1715
        %v1750 = vmul.f32 %v1692, %v1715
        %v1751 = vmul.f32 %v1693, %v1715
        %v1752 = vmul.f32 %v1694, %v1715
        %v1753 = vmul.f32 %v1695, %v1715
        %v1754 = vmul.f32 %v1696, %v1715
        %v1755 = vmul.f32 %v1697, %v1715
        %v1756 = vmul.f32 %v1698, %v1715
        %v1757 = vmul.f32 %v1699, %v1715
        %v1758 = vmul.f32 %v1700, %v1715
        %v1759 = vmul.f32 %v1701, %v1715
        %v1760 = vmul.f32 %v1702, %v1715
        %v1761 = vmul.f32 %v1703, %v1715
        %v1762 = vmul.f32 %v1704, %v1715
        %v1763 = vmul.f32 %v1705, %v1715
        %v1764 = vmul.f32 %v1706, %v1715
        %v1765 = vmul.f32 %v1707, %v1715
        %v1766 = vmul.f32 %v1708, %v1715
        %v1767 = vmul.f32 %v1709, %v1715
        %v1768 = vmul.f32 %v1710, %v1715
        %v1769 = vmul.f32 %v1711, %v1715
        %v1770 = vmul.f32 %v1712, %v1715
        %v1771 = vld [vmem:[#allocation6] sm:$0x1]
        %v1773 = vperm.slane %v1771, 0
        %v1775 = vadd.f32 %v1717, %v1773
        %v1776 = vadd.f32 %v1718, %v1773
        %v1777 = vadd.f32 %v1719, %v1773
        %v1778 = vadd.f32 %v1720, %v1773
        %v1779 = vadd.f32 %v1721, %v1773
        %v1780 = vadd.f32 %v1722, %v1773
        %v1781 = vadd.f32 %v1723, %v1773
        %v1782 = vadd.f32 %v1724, %v1773
        %v1783 = vadd.f32 %v1725, %v1773
        %v1784 = vadd.f32 %v1726, %v1773
        %v1785 = vadd.f32 %v1727, %v1773
        %v1786 = vadd.f32 %v1728, %v1773
        %v1787 = vadd.f32 %v1729, %v1773
        %v1788 = vadd.f32 %v1730, %v1773
        %v1789 = vadd.f32 %v1731, %v1773
        %v1790 = vadd.f32 %v1732, %v1773
        %v1791 = vadd.f32 %v1733, %v1773
        %v1792 = vadd.f32 %v1734, %v1773
        %v1793 = vadd.f32 %v1735, %v1773
        %v1794 = vadd.f32 %v1736, %v1773
        %v1795 = vadd.f32 %v1737, %v1773
        %v1796 = vadd.f32 %v1738, %v1773
        %v1797 = vadd.f32 %v1739, %v1773
        %v1798 = vadd.f32 %v1740, %v1773
        %v1799 = vadd.f32 %v1741, %v1773
        %v1800 = vadd.f32 %v1742, %v1773
        %v1801 = vadd.f32 %v1743, %v1773
        %v1802 = vadd.f32 %v1744, %v1773
        %v1803 = vadd.f32 %v1745, %v1773
        %v1804 = vadd.f32 %v1746, %v1773
        %v1805 = vadd.f32 %v1747, %v1773
        %v1806 = vadd.f32 %v1748, %v1773
        %v1807 = vadd.f32 %v1749, %v1773
        %v1808 = vadd.f32 %v1750, %v1773
        %v1809 = vadd.f32 %v1751, %v1773
        %v1810 = vadd.f32 %v1752, %v1773
        %v1811 = vadd.f32 %v1753, %v1773
        %v1812 = vadd.f32 %v1754, %v1773
        %v1813 = vadd.f32 %v1755, %v1773
        %v1814 = vadd.f32 %v1756, %v1773
        %v1815 = vadd.f32 %v1757, %v1773
        %v1816 = vadd.f32 %v1758, %v1773
        %v1817 = vadd.f32 %v1759, %v1773
        %v1818 = vadd.f32 %v1760, %v1773
        %v1819 = vadd.f32 %v1761, %v1773
        %v1820 = vadd.f32 %v1762, %v1773
        %v1821 = vadd.f32 %v1763, %v1773
        %v1822 = vadd.f32 %v1764, %v1773
        %v1823 = vadd.f32 %v1765, %v1773
        %v1824 = vadd.f32 %v1766, %v1773
        %v1825 = vadd.f32 %v1767, %v1773
        %v1826 = vadd.f32 %v1768, %v1773
        %v1827 = vadd.f32 %v1769, %v1773
        %v1828 = vadd.f32 %v1770, %v1773
        %s1829 = smul.u32 %s28, 16
        %v1830 = vstv %s1829
        %v1831 = vadd.s32 %v1830, 1
        %v1832 = vadd.s32 %v1830, 2
        %v1833 = vadd.s32 %v1830, 3
        %v1834 = vadd.s32 %v1830, 4
        %v1835 = vadd.s32 %v1830, 5
        %v1836 = vadd.s32 %v1830, 6
        %v1837 = vadd.s32 %v1830, 7
        %v1838 = vadd.s32 %v1830, 8
        %v1839 = vadd.s32 %v1830, 9
        %v1840 = vadd.s32 %v1830, 10
        %v1841 = vadd.s32 %v1830, 11
        %v1842 = vadd.s32 %v1830, 12
        %v1843 = vadd.s32 %v1830, 13
        %v1844 = vadd.s32 %v1830, 14
        %v1845 = vadd.s32 %v1830, 15
        %v1846 = vadd.s32 %v1830, 16
        %v1847 = vadd.s32 %v1830, 17
        %v1848 = vlaneseq
        %v1849 = vshrl.u32 %v1848, 7
        %v1850 = vadd.s32 %v1849, 8
        %v1851 = vadd.s32 %v1849, 16
        %vm1852 = vcmp.ge.s32.totalorder %v1830, 1
        %vm1853 = vcmp.ge.s32.totalorder %v1831, 1
        %vm1854 = vcmp.ge.s32.totalorder %v1832, 1
        %vm1855 = vcmp.ge.s32.totalorder %v1833, 1
        %vm1856 = vcmp.ge.s32.totalorder %v1834, 1
        %vm1857 = vcmp.ge.s32.totalorder %v1835, 1
        %vm1858 = vcmp.ge.s32.totalorder %v1836, 1
        %vm1859 = vcmp.ge.s32.totalorder %v1837, 1
        %vm1860 = vcmp.ge.s32.totalorder %v1838, 1
        %vm1861 = vcmp.ge.s32.totalorder %v1839, 1
        %vm1862 = vcmp.ge.s32.totalorder %v1840, 1
        %vm1863 = vcmp.ge.s32.totalorder %v1841, 1
        %vm1864 = vcmp.ge.s32.totalorder %v1842, 1
        %vm1865 = vcmp.ge.s32.totalorder %v1843, 1
        %vm1866 = vcmp.ge.s32.totalorder %v1844, 1
        %vm1867 = vcmp.ge.s32.totalorder %v1845, 1
        %vm1868 = vcmp.ge.s32.totalorder %v1846, 1
        %vm1869 = vcmp.ge.s32.totalorder %v1847, 1
        %vm1870 = vcmp.le.s32.totalorder %v1830, 16
        %vm1871 = vcmp.le.s32.totalorder %v1831, 16
        %vm1872 = vcmp.le.s32.totalorder %v1832, 16
        %vm1873 = vcmp.le.s32.totalorder %v1833, 16
        %vm1874 = vcmp.le.s32.totalorder %v1834, 16
        %vm1875 = vcmp.le.s32.totalorder %v1835, 16
        %vm1876 = vcmp.le.s32.totalorder %v1836, 16
        %vm1877 = vcmp.le.s32.totalorder %v1837, 16
        %vm1878 = vcmp.le.s32.totalorder %v1838, 16
        %vm1879 = vcmp.le.s32.totalorder %v1839, 16
        %vm1880 = vcmp.le.s32.totalorder %v1840, 16
        %vm1881 = vcmp.le.s32.totalorder %v1841, 16
        %vm1882 = vcmp.le.s32.totalorder %v1842, 16
        %vm1883 = vcmp.le.s32.totalorder %v1843, 16
        %vm1884 = vcmp.le.s32.totalorder %v1844, 16
        %vm1885 = vcmp.le.s32.totalorder %v1845, 16
        %vm1886 = vcmp.le.s32.totalorder %v1846, 16
        %vm1887 = vcmp.le.s32.totalorder %v1847, 16
        %vm1888 = vmand %vm1852, %vm1870
        %vm1889 = vmand %vm1853, %vm1871
        %vm1890 = vmand %vm1854, %vm1872
        %vm1891 = vmand %vm1855, %vm1873
        %vm1892 = vmand %vm1856, %vm1874
        %vm1893 = vmand %vm1857, %vm1875
        %vm1894 = vmand %vm1858, %vm1876
        %vm1895 = vmand %vm1859, %vm1877
        %vm1896 = vmand %vm1860, %vm1878
        %vm1897 = vmand %vm1861, %vm1879
        %vm1898 = vmand %vm1862, %vm1880
        %vm1899 = vmand %vm1863, %vm1881
        %vm1900 = vmand %vm1864, %vm1882
        %vm1901 = vmand %vm1865, %vm1883
        %vm1902 = vmand %vm1866, %vm1884
        %vm1903 = vmand %vm1867, %vm1885
        %vm1904 = vmand %vm1868, %vm1886
        %vm1905 = vmand %vm1869, %vm1887
        %vm1906 = vcmp.ge.s32.totalorder %v1849, 1
        %vm1907 = vcmp.ge.s32.totalorder %v1850, 1
        %vm1908 = vcmp.ge.s32.totalorder %v1851, 1
        %vm1909 = vmand %vm1888, %vm1906
        %vm1910 = vmand %vm1888, %vm1907
        %vm1911 = vmand %vm1888, %vm1908
        %vm1912 = vmand %vm1889, %vm1906
        %vm1913 = vmand %vm1889, %vm1907
        %vm1914 = vmand %vm1889, %vm1908
        %vm1915 = vmand %vm1890, %vm1906
        %vm1916 = vmand %vm1890, %vm1907
        %vm1917 = vmand %vm1890, %vm1908
        %vm1918 = vmand %vm1891, %vm1906
        %vm1919 = vmand %vm1891, %vm1907
        %vm1920 = vmand %vm1891, %vm1908
        %vm1921 = vmand %vm1892, %vm1906
        %vm1922 = vmand %vm1892, %vm1907
        %vm1923 = vmand %vm1892, %vm1908
        %vm1924 = vmand %vm1893, %vm1906
        %vm1925 = vmand %vm1893, %vm1907
        %vm1926 = vmand %vm1893, %vm1908
        %vm1927 = vmand %vm1894, %vm1906
        %vm1928 = vmand %vm1894, %vm1907
        %vm1929 = vmand %vm1894, %vm1908
        %vm1930 = vmand %vm1895, %vm1906
        %vm1931 = vmand %vm1895, %vm1907
        %vm1932 = vmand %vm1895, %vm1908
        %vm1933 = vmand %vm1896, %vm1906
        %vm1934 = vmand %vm1896, %vm1907
        %vm1935 = vmand %vm1896, %vm1908
        %vm1936 = vmand %vm1897, %vm1906
        %vm1937 = vmand %vm1897, %vm1907
        %vm1938 = vmand %vm1897, %vm1908
        %vm1939 = vmand %vm1898, %vm1906
        %vm1940 = vmand %vm1898, %vm1907
        %vm1941 = vmand %vm1898, %vm1908
        %vm1942 = vmand %vm1899, %vm1906
        %vm1943 = vmand %vm1899, %vm1907
        %vm1944 = vmand %vm1899, %vm1908
        %vm1945 = vmand %vm1900, %vm1906
        %vm1946 = vmand %vm1900, %vm1907
        %vm1947 = vmand %vm1900, %vm1908
        %vm1948 = vmand %vm1901, %vm1906
        %vm1949 = vmand %vm1901, %vm1907
        %vm1950 = vmand %vm1901, %vm1908
        %vm1951 = vmand %vm1902, %vm1906
        %vm1952 = vmand %vm1902, %vm1907
        %vm1953 = vmand %vm1902, %vm1908
        %vm1954 = vmand %vm1903, %vm1906
        %vm1955 = vmand %vm1903, %vm1907
        %vm1956 = vmand %vm1903, %vm1908
        %vm1957 = vmand %vm1904, %vm1906
        %vm1958 = vmand %vm1904, %vm1907
        %vm1959 = vmand %vm1904, %vm1908
        %vm1960 = vmand %vm1905, %vm1906
        %vm1961 = vmand %vm1905, %vm1907
        %vm1962 = vmand %vm1905, %vm1908
        %vm1963 = vcmp.le.s32.totalorder %v1849, 16
        %vm1964 = vcmp.le.s32.totalorder %v1850, 16
        %vm1965 = vcmp.le.s32.totalorder %v1851, 16
        %vm1966 = vmand %vm1909, %vm1963
        %vm1967 = vmand %vm1910, %vm1964
        %vm1968 = vmand %vm1911, %vm1965
        %vm1969 = vmand %vm1912, %vm1963
        %vm1970 = vmand %vm1913, %vm1964
        %vm1971 = vmand %vm1914, %vm1965
        %vm1972 = vmand %vm1915, %vm1963
        %vm1973 = vmand %vm1916, %vm1964
        %vm1974 = vmand %vm1917, %vm1965
        %vm1975 = vmand %vm1918, %vm1963
        %vm1976 = vmand %vm1919, %vm1964
        %vm1977 = vmand %vm1920, %vm1965
        %vm1978 = vmand %vm1921, %vm1963
        %vm1979 = vmand %vm1922, %vm1964
        %vm1980 = vmand %vm1923, %vm1965
        %vm1981 = vmand %vm1924, %vm1963
        %vm1982 = vmand %vm1925, %vm1964
        %vm1983 = vmand %vm1926, %vm1965
        %vm1984 = vmand %vm1927, %vm1963
        %vm1985 = vmand %vm1928, %vm1964
        %vm1986 = vmand %vm1929, %vm1965
        %vm1987 = vmand %vm1930, %vm1963
        %vm1988 = vmand %vm1931, %vm1964
        %vm1989 = vmand %vm1932, %vm1965
        %vm1990 = vmand %vm1933, %vm1963
        %vm1991 = vmand %vm1934, %vm1964
        %vm1992 = vmand %vm1935, %vm1965
        %vm1993 = vmand %vm1936, %vm1963
        %vm1994 = vmand %vm1937, %vm1964
        %vm1995 = vmand %vm1938, %vm1965
        %vm1996 = vmand %vm1939, %vm1963
        %vm1997 = vmand %vm1940, %vm1964
        %vm1998 = vmand %vm1941, %vm1965
        %vm1999 = vmand %vm1942, %vm1963
        %vm2000 = vmand %vm1943, %vm1964
        %vm2001 = vmand %vm1944, %vm1965
        %vm2002 = vmand %vm1945, %vm1963
        %vm2003 = vmand %vm1946, %vm1964
        %vm2004 = vmand %vm1947, %vm1965
        %vm2005 = vmand %vm1948, %vm1963
        %vm2006 = vmand %vm1949, %vm1964
        %vm2007 = vmand %vm1950, %vm1965
        %vm2008 = vmand %vm1951, %vm1963
        %vm2009 = vmand %vm1952, %vm1964
        %vm2010 = vmand %vm1953, %vm1965
        %vm2011 = vmand %vm1954, %vm1963
        %vm2012 = vmand %vm1955, %vm1964
        %vm2013 = vmand %vm1956, %vm1965
        %vm2014 = vmand %vm1957, %vm1963
        %vm2015 = vmand %vm1958, %vm1964
        %vm2016 = vmand %vm1959, %vm1965
        %vm2017 = vmand %vm1960, %vm1963
        %vm2018 = vmand %vm1961, %vm1964
        %vm2019 = vmand %vm1962, %vm1965
        %v2020 = vsel %vm1966, %v1775, 0.0
        %v2021 = vsel %vm1967, %v1776, 0.0
        %v2022 = vsel %vm1968, %v1777, 0.0
        %v2023 = vsel %vm1969, %v1778, 0.0
        %v2024 = vsel %vm1970, %v1779, 0.0
        %v2025 = vsel %vm1971, %v1780, 0.0
        %v2026 = vsel %vm1972, %v1781, 0.0
        %v2027 = vsel %vm1973, %v1782, 0.0
        %v2028 = vsel %vm1974, %v1783, 0.0
        %v2029 = vsel %vm1975, %v1784, 0.0
        %v2030 = vsel %vm1976, %v1785, 0.0
        %v2031 = vsel %vm1977, %v1786, 0.0
        %v2032 = vsel %vm1978, %v1787, 0.0
        %v2033 = vsel %vm1979, %v1788, 0.0
        %v2034 = vsel %vm1980, %v1789, 0.0
        %v2035 = vsel %vm1981, %v1790, 0.0
        %v2036 = vsel %vm1982, %v1791, 0.0
        %v2037 = vsel %vm1983, %v1792, 0.0
        %v2038 = vsel %vm1984, %v1793, 0.0
        %v2039 = vsel %vm1985, %v1794, 0.0
        %v2040 = vsel %vm1986, %v1795, 0.0
        %v2041 = vsel %vm1987, %v1796, 0.0
        %v2042 = vsel %vm1988, %v1797, 0.0
        %v2043 = vsel %vm1989, %v1798, 0.0
        %v2044 = vsel %vm1990, %v1799, 0.0
        %v2045 = vsel %vm1991, %v1800, 0.0
        %v2046 = vsel %vm1992, %v1801, 0.0
        %v2047 = vsel %vm1993, %v1802, 0.0
        %v2048 = vsel %vm1994, %v1803, 0.0
        %v2049 = vsel %vm1995, %v1804, 0.0
        %v2050 = vsel %vm1996, %v1805, 0.0
        %v2051 = vsel %vm1997, %v1806, 0.0
        %v2052 = vsel %vm1998, %v1807, 0.0
        %v2053 = vsel %vm1999, %v1808, 0.0
        %v2054 = vsel %vm2000, %v1809, 0.0
        %v2055 = vsel %vm2001, %v1810, 0.0
        %v2056 = vsel %vm2002, %v1811, 0.0
        %v2057 = vsel %vm2003, %v1812, 0.0
        %v2058 = vsel %vm2004, %v1813, 0.0
        %v2059 = vsel %vm2005, %v1814, 0.0
        %v2060 = vsel %vm2006, %v1815, 0.0
        %v2061 = vsel %vm2007, %v1816, 0.0
        %v2062 = vsel %vm2008, %v1817, 0.0
        %v2063 = vsel %vm2009, %v1818, 0.0
        %v2064 = vsel %vm2010, %v1819, 0.0
        %v2065 = vsel %vm2011, %v1820, 0.0
        %v2066 = vsel %vm2012, %v1821, 0.0
        %v2067 = vsel %vm2013, %v1822, 0.0
        %v2068 = vsel %vm2014, %v1823, 0.0
        %v2069 = vsel %vm2015, %v1824, 0.0
        %v2070 = vsel %vm2016, %v1825, 0.0
        %v2071 = vsel %vm2017, %v1826, 0.0
        %v2072 = vsel %vm2018, %v1827, 0.0
        %v2073 = vsel %vm2019, %v1828, 0.0
        %2074 = vst.msk [vmem:[#allocation2] sm:$0xff] %vm516, %v2020
        %2075 = vst.msk [vmem:[#allocation2 + $0x8] sm:$0xff] %vm516, %v2021
        %2076 = vst.msk [vmem:[#allocation2 + $0x10] sm:$0xff] %vm516, %v2023
        %2077 = vst.msk [vmem:[#allocation2 + $0x18] sm:$0xff] %vm516, %v2024
        %2078 = vst.msk [vmem:[#allocation2 + $0x20] sm:$0xff] %vm516, %v2026
        %2079 = vst.msk [vmem:[#allocation2 + $0x28] sm:$0xff] %vm516, %v2027
        %2080 = vst.msk [vmem:[#allocation2 + $0x30] sm:$0xff] %vm516, %v2029
        %2081 = vst.msk [vmem:[#allocation2 + $0x38] sm:$0xff] %vm516, %v2030
        %2082 = vst.msk [vmem:[#allocation2 + $0x40] sm:$0xff] %vm516, %v2032
        %2083 = vst.msk [vmem:[#allocation2 + $0x48] sm:$0xff] %vm516, %v2033
        %2084 = vst.msk [vmem:[#allocation2 + $0x50] sm:$0xff] %vm516, %v2035
        %2085 = vst.msk [vmem:[#allocation2 + $0x58] sm:$0xff] %vm516, %v2036
        %2086 = vst.msk [vmem:[#allocation2 + $0x60] sm:$0xff] %vm516, %v2038
        %2087 = vst.msk [vmem:[#allocation2 + $0x68] sm:$0xff] %vm516, %v2039
        %2088 = vst.msk [vmem:[#allocation2 + $0x70] sm:$0xff] %vm516, %v2041
        %2089 = vst.msk [vmem:[#allocation2 + $0x78] sm:$0xff] %vm516, %v2042
        %2090 = vst.msk [vmem:[#allocation2 + $0x80] sm:$0xff] %vm516, %v2044
        %2091 = vst.msk [vmem:[#allocation2 + $0x88] sm:$0xff] %vm516, %v2045
        %2092 = vst.msk [vmem:[#allocation2 + $0x90] sm:$0xff] %vm516, %v2047
        %2093 = vst.msk [vmem:[#allocation2 + $0x98] sm:$0xff] %vm516, %v2048
        %2094 = vst.msk [vmem:[#allocation2 + $0xa0] sm:$0xff] %vm516, %v2050
        %2095 = vst.msk [vmem:[#allocation2 + $0xa8] sm:$0xff] %vm516, %v2051
        %2096 = vst.msk [vmem:[#allocation2 + $0xb0] sm:$0xff] %vm516, %v2053
        %2097 = vst.msk [vmem:[#allocation2 + $0xb8] sm:$0xff] %vm516, %v2054
        %2098 = vst.msk [vmem:[#allocation2 + $0xc0] sm:$0xff] %vm516, %v2056
        %2099 = vst.msk [vmem:[#allocation2 + $0xc8] sm:$0xff] %vm516, %v2057
        %2100 = vst.msk [vmem:[#allocation2 + $0xd0] sm:$0xff] %vm516, %v2059
        %2101 = vst.msk [vmem:[#allocation2 + $0xd8] sm:$0xff] %vm516, %v2060
        %2102 = vst.msk [vmem:[#allocation2 + $0xe0] sm:$0xff] %vm516, %v2062
        %2103 = vst.msk [vmem:[#allocation2 + $0xe8] sm:$0xff] %vm516, %v2063
        %2104 = vst.msk [vmem:[#allocation2 + $0xf0] sm:$0xff] %vm516, %v2065
        %2105 = vst.msk [vmem:[#allocation2 + $0xf8] sm:$0xff] %vm516, %v2066
        %vm2154 = vcmask 1046528
        %v2155 = vrot.slane %v2020, 1
        %v2156 = vrot.slane %v2021, 1
        %v2157 = vsel %vm2154, %v2155, %v2156
        %v2158 = vrot.slane %v2022, 1
        %v2159 = vsel %vm2154, %v2156, %v2158
        %v2160 = vrot.slane %v2023, 1
        %v2161 = vrot.slane %v2024, 1
        %v2162 = vsel %vm2154, %v2160, %v2161
        %v2163 = vrot.slane %v2025, 1
        %v2164 = vsel %vm2154, %v2161, %v2163
        %v2165 = vrot.slane %v2026, 1
        %v2166 = vrot.slane %v2027, 1
        %v2167 = vsel %vm2154, %v2165, %v2166
        %v2168 = vrot.slane %v2028, 1
        %v2169 = vsel %vm2154, %v2166, %v2168
        %v2170 = vrot.slane %v2029, 1
        %v2171 = vrot.slane %v2030, 1
        %v2172 = vsel %vm2154, %v2170, %v2171
        %v2173 = vrot.slane %v2031, 1
        %v2174 = vsel %vm2154, %v2171, %v2173
        %v2175 = vrot.slane %v2032, 1
        %v2176 = vrot.slane %v2033, 1
        %v2177 = vsel %vm2154, %v2175, %v2176
        %v2178 = vrot.slane %v2034, 1
        %v2179 = vsel %vm2154, %v2176, %v2178
        %v2180 = vrot.slane %v2035, 1
        %v2181 = vrot.slane %v2036, 1
        %v2182 = vsel %vm2154, %v2180, %v2181
        %v2183 = vrot.slane %v2037, 1
        %v2184 = vsel %vm2154, %v2181, %v2183
        %v2185 = vrot.slane %v2038, 1
        %v2186 = vrot.slane %v2039, 1
        %v2187 = vsel %vm2154, %v2185, %v2186
        %v2188 = vrot.slane %v2040, 1
        %v2189 = vsel %vm2154, %v2186, %v2188
        %v2190 = vrot.slane %v2041, 1
        %v2191 = vrot.slane %v2042, 1
        %v2192 = vsel %vm2154, %v2190, %v2191
        %v2193 = vrot.slane %v2043, 1
        %v2194 = vsel %vm2154, %v2191, %v2193
        %v2195 = vrot.slane %v2044, 1
        %v2196 = vrot.slane %v2045, 1
        %v2197 = vsel %vm2154, %v2195, %v2196
        %v2198 = vrot.slane %v2046, 1
        %v2199 = vsel %vm2154, %v2196, %v2198
        %v2200 = vrot.slane %v2047, 1
        %v2201 = vrot.slane %v2048, 1
        %v2202 = vsel %vm2154, %v2200, %v2201
        %v2203 = vrot.slane %v2049, 1
        %v2204 = vsel %vm2154, %v2201, %v2203
        %v2205 = vrot.slane %v2050, 1
        %v2206 = vrot.slane %v2051, 1
        %v2207 = vsel %vm2154, %v2205, %v2206
        %v2208 = vrot.slane %v2052, 1
        %v2209 = vsel %vm2154, %v2206, %v2208
        %v2210 = vrot.slane %v2053, 1
        %v2211 = vrot.slane %v2054, 1
        %v2212 = vsel %vm2154, %v2210, %v2211
        %v2213 = vrot.slane %v2055, 1
        %v2214 = vsel %vm2154, %v2211, %v2213
        %v2215 = vrot.slane %v2056, 1
        %v2216 = vrot.slane %v2057, 1
        %v2217 = vsel %vm2154, %v2215, %v2216
        %v2218 = vrot.slane %v2058, 1
        %v2219 = vsel %vm2154, %v2216, %v2218
        %v2220 = vrot.slane %v2059, 1
        %v2221 = vrot.slane %v2060, 1
        %v2222 = vsel %vm2154, %v2220, %v2221
        %v2223 = vrot.slane %v2061, 1
        %v2224 = vsel %vm2154, %v2221, %v2223
        %v2225 = vrot.slane %v2062, 1
        %v2226 = vrot.slane %v2063, 1
        %v2227 = vsel %vm2154, %v2225, %v2226
        %v2228 = vrot.slane %v2064, 1
        %v2229 = vsel %vm2154, %v2226, %v2228
        %v2230 = vrot.slane %v2065, 1
        %v2231 = vrot.slane %v2066, 1
        %v2232 = vsel %vm2154, %v2230, %v2231
        %v2233 = vrot.slane %v2067, 1
        %v2234 = vsel %vm2154, %v2231, %v2233
        %2235 = vrot.lane.b32.xlu0 %v2157, 3
        %v2236 = vpop.permute.xlu0 %2235
        %2237 = vrot.lane.b32.xlu0 %v2159, 3
        %v2238 = vpop.permute.xlu0 %2237
        %2239 = vrot.lane.b32.xlu0 %v2162, 3
        %v2240 = vpop.permute.xlu0 %2239
        %2241 = vrot.lane.b32.xlu0 %v2164, 3
        %v2242 = vpop.permute.xlu0 %2241
        %2243 = vrot.lane.b32.xlu0 %v2167, 3
        %v2244 = vpop.permute.xlu0 %2243
        %2245 = vrot.lane.b32.xlu0 %v2169, 3
        %v2246 = vpop.permute.xlu0 %2245
        %2247 = vrot.lane.b32.xlu0 %v2172, 3
        %v2248 = vpop.permute.xlu0 %2247
        %2249 = vrot.lane.b32.xlu0 %v2174, 3
        %v2250 = vpop.permute.xlu0 %2249
        %2251 = vrot.lane.b32.xlu0 %v2177, 3
        %v2252 = vpop.permute.xlu0 %2251
        %2253 = vrot.lane.b32.xlu0 %v2179, 3
        %v2254 = vpop.permute.xlu0 %2253
        %2255 = vrot.lane.b32.xlu0 %v2182, 3
        %v2256 = vpop.permute.xlu0 %2255
        %2257 = vrot.lane.b32.xlu0 %v2184, 3
        %v2258 = vpop.permute.xlu0 %2257
        %2259 = vrot.lane.b32.xlu0 %v2187, 3
        %v2260 = vpop.permute.xlu0 %2259
        %2261 = vrot.lane.b32.xlu0 %v2189, 3
        %v2262 = vpop.permute.xlu0 %2261
        %2263 = vrot.lane.b32.xlu0 %v2192, 3
        %v2264 = vpop.permute.xlu0 %2263
        %2265 = vrot.lane.b32.xlu0 %v2194, 3
        %v2266 = vpop.permute.xlu0 %2265
        %2267 = vrot.lane.b32.xlu0 %v2197, 3
        %v2268 = vpop.permute.xlu0 %2267
        %2269 = vrot.lane.b32.xlu0 %v2199, 3
        %v2270 = vpop.permute.xlu0 %2269
        %2271 = vrot.lane.b32.xlu0 %v2202, 3
        %v2272 = vpop.permute.xlu0 %2271
        %2273 = vrot.lane.b32.xlu0 %v2204, 3
        %v2274 = vpop.permute.xlu0 %2273
        %2275 = vrot.lane.b32.xlu0 %v2207, 3
        %v2276 = vpop.permute.xlu0 %2275
        %2277 = vrot.lane.b32.xlu0 %v2209, 3
        %v2278 = vpop.permute.xlu0 %2277
        %2279 = vrot.lane.b32.xlu0 %v2212, 3
        %v2280 = vpop.permute.xlu0 %2279
        %2281 = vrot.lane.b32.xlu0 %v2214, 3
        %v2282 = vpop.permute.xlu0 %2281
        %2283 = vrot.lane.b32.xlu0 %v2217, 3
        %v2284 = vpop.permute.xlu0 %2283
        %2285 = vrot.lane.b32.xlu0 %v2219, 3
        %v2286 = vpop.permute.xlu0 %2285
        %2287 = vrot.lane.b32.xlu0 %v2222, 3
        %v2288 = vpop.permute.xlu0 %2287
        %2289 = vrot.lane.b32.xlu0 %v2224, 3
        %v2290 = vpop.permute.xlu0 %2289
        %2291 = vrot.lane.b32.xlu0 %v2227, 3
        %v2292 = vpop.permute.xlu0 %2291
        %2293 = vrot.lane.b32.xlu0 %v2229, 3
        %v2294 = vpop.permute.xlu0 %2293
        %2295 = vrot.lane.b32.xlu0 %v2232, 3
        %v2296 = vpop.permute.xlu0 %2295
        %2297 = vrot.lane.b32.xlu0 %v2234, 3
        %v2298 = vpop.permute.xlu0 %2297
        %vm2331 = vcmask 48152
        %2332 = vst.msk [vmem:[#allocation2] sm:$0xff] %vm2331, %v2236
        %2333 = vst.msk [vmem:[#allocation2 + $0x8] sm:$0xff] %vm2331, %v2238
        %2334 = vst.msk [vmem:[#allocation2 + $0x10] sm:$0xff] %vm2331, %v2240
        %2335 = vst.msk [vmem:[#allocation2 + $0x18] sm:$0xff] %vm2331, %v2242
        %2336 = vst.msk [vmem:[#allocation2 + $0x20] sm:$0xff] %vm2331, %v2244
        %2337 = vst.msk [vmem:[#allocation2 + $0x28] sm:$0xff] %vm2331, %v2246
        %2338 = vst.msk [vmem:[#allocation2 + $0x30] sm:$0xff] %vm2331, %v2248
        %2339 = vst.msk [vmem:[#allocation2 + $0x38] sm:$0xff] %vm2331, %v2250
        %2340 = vst.msk [vmem:[#allocation2 + $0x40] sm:$0xff] %vm2331, %v2252
        %2341 = vst.msk [vmem:[#allocation2 + $0x48] sm:$0xff] %vm2331, %v2254
        %2342 = vst.msk [vmem:[#allocation2 + $0x50] sm:$0xff] %vm2331, %v2256
        %2343 = vst.msk [vmem:[#allocation2 + $0x58] sm:$0xff] %vm2331, %v2258
        %2344 = vst.msk [vmem:[#allocation2 + $0x60] sm:$0xff] %vm2331, %v2260
        %2345 = vst.msk [vmem:[#allocation2 + $0x68] sm:$0xff] %vm2331, %v2262
        %2346 = vst.msk [vmem:[#allocation2 + $0x70] sm:$0xff] %vm2331, %v2264
        %2347 = vst.msk [vmem:[#allocation2 + $0x78] sm:$0xff] %vm2331, %v2266
        %2348 = vst.msk [vmem:[#allocation2 + $0x80] sm:$0xff] %vm2331, %v2268
        %2349 = vst.msk [vmem:[#allocation2 + $0x88] sm:$0xff] %vm2331, %v2270
        %2350 = vst.msk [vmem:[#allocation2 + $0x90] sm:$0xff] %vm2331, %v2272
        %2351 = vst.msk [vmem:[#allocation2 + $0x98] sm:$0xff] %vm2331, %v2274
        %2352 = vst.msk [vmem:[#allocation2 + $0xa0] sm:$0xff] %vm2331, %v2276
        %2353 = vst.msk [vmem:[#allocation2 + $0xa8] sm:$0xff] %vm2331, %v2278
        %2354 = vst.msk [vmem:[#allocation2 + $0xb0] sm:$0xff] %vm2331, %v2280
        %2355 = vst.msk [vmem:[#allocation2 + $0xb8] sm:$0xff] %vm2331, %v2282
        %2356 = vst.msk [vmem:[#allocation2 + $0xc0] sm:$0xff] %vm2331, %v2284
        %2357 = vst.msk [vmem:[#allocation2 + $0xc8] sm:$0xff] %vm2331, %v2286
        %2358 = vst.msk [vmem:[#allocation2 + $0xd0] sm:$0xff] %vm2331, %v2288
        %2359 = vst.msk [vmem:[#allocation2 + $0xd8] sm:$0xff] %vm2331, %v2290
        %2360 = vst.msk [vmem:[#allocation2 + $0xe0] sm:$0xff] %vm2331, %v2292
        %2361 = vst.msk [vmem:[#allocation2 + $0xe8] sm:$0xff] %vm2331, %v2294
        %2362 = vst.msk [vmem:[#allocation2 + $0xf0] sm:$0xff] %vm2331, %v2296
        %2363 = vst.msk [vmem:[#allocation2 + $0xf8] sm:$0xff] %vm2331, %v2298
        %vm2364 = vcmask 1045504
        %v2365 = vrot.slane %v2020, 2
        %v2366 = vrot.slane %v2021, 2
        %v2367 = vsel %vm2364, %v2365, %v2366
        %v2368 = vrot.slane %v2022, 2
        %v2369 = vsel %vm2364, %v2366, %v2368
        %v2370 = vrot.slane %v2023, 2
        %v2371 = vrot.slane %v2024, 2
        %v2372 = vsel %vm2364, %v2370, %v2371
        %v2373 = vrot.slane %v2025, 2
        %v2374 = vsel %vm2364, %v2371, %v2373
        %v2375 = vrot.slane %v2026, 2
        %v2376 = vrot.slane %v2027, 2
        %v2377 = vsel %vm2364, %v2375, %v2376
        %v2378 = vrot.slane %v2028, 2
        %v2379 = vsel %vm2364, %v2376, %v2378
        %v2380 = vrot.slane %v2029, 2
        %v2381 = vrot.slane %v2030, 2
        %v2382 = vsel %vm2364, %v2380, %v2381
        %v2383 = vrot.slane %v2031, 2
        %v2384 = vsel %vm2364, %v2381, %v2383
        %v2385 = vrot.slane %v2032, 2
        %v2386 = vrot.slane %v2033, 2
        %v2387 = vsel %vm2364, %v2385, %v2386
        %v2388 = vrot.slane %v2034, 2
        %v2389 = vsel %vm2364, %v2386, %v2388
        %v2390 = vrot.slane %v2035, 2
        %v2391 = vrot.slane %v2036, 2
        %v2392 = vsel %vm2364, %v2390, %v2391
        %v2393 = vrot.slane %v2037, 2
        %v2394 = vsel %vm2364, %v2391, %v2393
        %v2395 = vrot.slane %v2038, 2
        %v2396 = vrot.slane %v2039, 2
        %v2397 = vsel %vm2364, %v2395, %v2396
        %v2398 = vrot.slane %v2040, 2
        %v2399 = vsel %vm2364, %v2396, %v2398
        %v2400 = vrot.slane %v2041, 2
        %v2401 = vrot.slane %v2042, 2
        %v2402 = vsel %vm2364, %v2400, %v2401
        %v2403 = vrot.slane %v2043, 2
        %v2404 = vsel %vm2364, %v2401, %v2403
        %v2405 = vrot.slane %v2044, 2
        %v2406 = vrot.slane %v2045, 2
        %v2407 = vsel %vm2364, %v2405, %v2406
        %v2408 = vrot.slane %v2046, 2
        %v2409 = vsel %vm2364, %v2406, %v2408
        %v2410 = vrot.slane %v2047, 2
        %v2411 = vrot.slane %v2048, 2
        %v2412 = vsel %vm2364, %v2410, %v2411
        %v2413 = vrot.slane %v2049, 2
        %v2414 = vsel %vm2364, %v2411, %v2413
        %v2415 = vrot.slane %v2050, 2
        %v2416 = vrot.slane %v2051, 2
        %v2417 = vsel %vm2364, %v2415, %v2416
        %v2418 = vrot.slane %v2052, 2
        %v2419 = vsel %vm2364, %v2416, %v2418
        %v2420 = vrot.slane %v2053, 2
        %v2421 = vrot.slane %v2054, 2
        %v2422 = vsel %vm2364, %v2420, %v2421
        %v2423 = vrot.slane %v2055, 2
        %v2424 = vsel %vm2364, %v2421, %v2423
        %v2425 = vrot.slane %v2056, 2
        %v2426 = vrot.slane %v2057, 2
        %v2427 = vsel %vm2364, %v2425, %v2426
        %v2428 = vrot.slane %v2058, 2
        %v2429 = vsel %vm2364, %v2426, %v2428
        %v2430 = vrot.slane %v2059, 2
        %v2431 = vrot.slane %v2060, 2
        %v2432 = vsel %vm2364, %v2430, %v2431
        %v2433 = vrot.slane %v2061, 2
        %v2434 = vsel %vm2364, %v2431, %v2433
        %v2435 = vrot.slane %v2062, 2
        %v2436 = vrot.slane %v2063, 2
        %v2437 = vsel %vm2364, %v2435, %v2436
        %v2438 = vrot.slane %v2064, 2
        %v2439 = vsel %vm2364, %v2436, %v2438
        %v2440 = vrot.slane %v2065, 2
        %v2441 = vrot.slane %v2066, 2
        %v2442 = vsel %vm2364, %v2440, %v2441
        %v2443 = vrot.slane %v2067, 2
        %v2444 = vsel %vm2364, %v2441, %v2443
        %2445 = vrot.lane.b32.xlu0 %v2367, 6
        %v2446 = vpop.permute.xlu0 %2445
        %2447 = vrot.lane.b32.xlu0 %v2369, 6
        %v2448 = vpop.permute.xlu0 %2447
        %2449 = vrot.lane.b32.xlu0 %v2372, 6
        %v2450 = vpop.permute.xlu0 %2449
        %2451 = vrot.lane.b32.xlu0 %v2374, 6
        %v2452 = vpop.permute.xlu0 %2451
        %2453 = vrot.lane.b32.xlu0 %v2377, 6
        %v2454 = vpop.permute.xlu0 %2453
        %2455 = vrot.lane.b32.xlu0 %v2379, 6
        %v2456 = vpop.permute.xlu0 %2455
        %2457 = vrot.lane.b32.xlu0 %v2382, 6
        %v2458 = vpop.permute.xlu0 %2457
        %2459 = vrot.lane.b32.xlu0 %v2384, 6
        %v2460 = vpop.permute.xlu0 %2459
        %2461 = vrot.lane.b32.xlu0 %v2387, 6
        %v2462 = vpop.permute.xlu0 %2461
        %2463 = vrot.lane.b32.xlu0 %v2389, 6
        %v2464 = vpop.permute.xlu0 %2463
        %2465 = vrot.lane.b32.xlu0 %v2392, 6
        %v2466 = vpop.permute.xlu0 %2465
        %2467 = vrot.lane.b32.xlu0 %v2394, 6
        %v2468 = vpop.permute.xlu0 %2467
        %2469 = vrot.lane.b32.xlu0 %v2397, 6
        %v2470 = vpop.permute.xlu0 %2469
        %2471 = vrot.lane.b32.xlu0 %v2399, 6
        %v2472 = vpop.permute.xlu0 %2471
        %2473 = vrot.lane.b32.xlu0 %v2402, 6
        %v2474 = vpop.permute.xlu0 %2473
        %2475 = vrot.lane.b32.xlu0 %v2404, 6
        %v2476 = vpop.permute.xlu0 %2475
        %2477 = vrot.lane.b32.xlu0 %v2407, 6
        %v2478 = vpop.permute.xlu0 %2477
        %2479 = vrot.lane.b32.xlu0 %v2409, 6
        %v2480 = vpop.permute.xlu0 %2479
        %2481 = vrot.lane.b32.xlu0 %v2412, 6
        %v2482 = vpop.permute.xlu0 %2481
        %2483 = vrot.lane.b32.xlu0 %v2414, 6
        %v2484 = vpop.permute.xlu0 %2483
        %2485 = vrot.lane.b32.xlu0 %v2417, 6
        %v2486 = vpop.permute.xlu0 %2485
        %2487 = vrot.lane.b32.xlu0 %v2419, 6
        %v2488 = vpop.permute.xlu0 %2487
        %2489 = vrot.lane.b32.xlu0 %v2422, 6
        %v2490 = vpop.permute.xlu0 %2489
        %2491 = vrot.lane.b32.xlu0 %v2424, 6
        %v2492 = vpop.permute.xlu0 %2491
        %2493 = vrot.lane.b32.xlu0 %v2427, 6
        %v2494 = vpop.permute.xlu0 %2493
        %2495 = vrot.lane.b32.xlu0 %v2429, 6
        %v2496 = vpop.permute.xlu0 %2495
        %2497 = vrot.lane.b32.xlu0 %v2432, 6
        %v2498 = vpop.permute.xlu0 %2497
        %2499 = vrot.lane.b32.xlu0 %v2434, 6
        %v2500 = vpop.permute.xlu0 %2499
        %2501 = vrot.lane.b32.xlu0 %v2437, 6
        %v2502 = vpop.permute.xlu0 %2501
        %2503 = vrot.lane.b32.xlu0 %v2439, 6
        %v2504 = vpop.permute.xlu0 %2503
        %2505 = vrot.lane.b32.xlu0 %v2442, 6
        %v2506 = vpop.permute.xlu0 %2505
        %2507 = vrot.lane.b32.xlu0 %v2444, 6
        %v2508 = vpop.permute.xlu0 %2507
        %vm2541 = vcmask 72752
        %2542 = vst.msk [vmem:[#allocation2] sm:$0xff] %vm2541, %v2446
        %2543 = vst.msk [vmem:[#allocation2 + $0x8] sm:$0xff] %vm2541, %v2448
        %2544 = vst.msk [vmem:[#allocation2 + $0x10] sm:$0xff] %vm2541, %v2450
        %2545 = vst.msk [vmem:[#allocation2 + $0x18] sm:$0xff] %vm2541, %v2452
        %2546 = vst.msk [vmem:[#allocation2 + $0x20] sm:$0xff] %vm2541, %v2454
        %2547 = vst.msk [vmem:[#allocation2 + $0x28] sm:$0xff] %vm2541, %v2456
        %2548 = vst.msk [vmem:[#allocation2 + $0x30] sm:$0xff] %vm2541, %v2458
        %2549 = vst.msk [vmem:[#allocation2 + $0x38] sm:$0xff] %vm2541, %v2460
        %2550 = vst.msk [vmem:[#allocation2 + $0x40] sm:$0xff] %vm2541, %v2462
        %2551 = vst.msk [vmem:[#allocation2 + $0x48] sm:$0xff] %vm2541, %v2464
        %2552 = vst.msk [vmem:[#allocation2 + $0x50] sm:$0xff] %vm2541, %v2466
        %2553 = vst.msk [vmem:[#allocation2 + $0x58] sm:$0xff] %vm2541, %v2468
        %2554 = vst.msk [vmem:[#allocation2 + $0x60] sm:$0xff] %vm2541, %v2470
        %2555 = vst.msk [vmem:[#allocation2 + $0x68] sm:$0xff] %vm2541, %v2472
        %2556 = vst.msk [vmem:[#allocation2 + $0x70] sm:$0xff] %vm2541, %v2474
        %2557 = vst.msk [vmem:[#allocation2 + $0x78] sm:$0xff] %vm2541, %v2476
        %2558 = vst.msk [vmem:[#allocation2 + $0x80] sm:$0xff] %vm2541, %v2478
        %2559 = vst.msk [vmem:[#allocation2 + $0x88] sm:$0xff] %vm2541, %v2480
        %2560 = vst.msk [vmem:[#allocation2 + $0x90] sm:$0xff] %vm2541, %v2482
        %2561 = vst.msk [vmem:[#allocation2 + $0x98] sm:$0xff] %vm2541, %v2484
        %2562 = vst.msk [vmem:[#allocation2 + $0xa0] sm:$0xff] %vm2541, %v2486
        %2563 = vst.msk [vmem:[#allocation2 + $0xa8] sm:$0xff] %vm2541, %v2488
        %2564 = vst.msk [vmem:[#allocation2 + $0xb0] sm:$0xff] %vm2541, %v2490
        %2565 = vst.msk [vmem:[#allocation2 + $0xb8] sm:$0xff] %vm2541, %v2492
        %2566 = vst.msk [vmem:[#allocation2 + $0xc0] sm:$0xff] %vm2541, %v2494
        %2567 = vst.msk [vmem:[#allocation2 + $0xc8] sm:$0xff] %vm2541, %v2496
        %2568 = vst.msk [vmem:[#allocation2 + $0xd0] sm:$0xff] %vm2541, %v2498
        %2569 = vst.msk [vmem:[#allocation2 + $0xd8] sm:$0xff] %vm2541, %v2500
        %2570 = vst.msk [vmem:[#allocation2 + $0xe0] sm:$0xff] %vm2541, %v2502
        %2571 = vst.msk [vmem:[#allocation2 + $0xe8] sm:$0xff] %vm2541, %v2504
        %2572 = vst.msk [vmem:[#allocation2 + $0xf0] sm:$0xff] %vm2541, %v2506
        %2573 = vst.msk [vmem:[#allocation2 + $0xf8] sm:$0xff] %vm2541, %v2508
        %2576 = vrot.lane.b32.xlu0 %v2023, 9
        %v2577 = vpop.permute.xlu0 %2576
        %2578 = vrot.lane.b32.xlu0 %v2024, 9
        %v2579 = vpop.permute.xlu0 %2578
        %2580 = vrot.lane.b32.xlu0 %v2026, 9
        %v2581 = vpop.permute.xlu0 %2580
        %2582 = vrot.lane.b32.xlu0 %v2027, 9
        %v2583 = vpop.permute.xlu0 %2582
        %2584 = vrot.lane.b32.xlu0 %v2029, 9
        %v2585 = vpop.permute.xlu0 %2584
        %2586 = vrot.lane.b32.xlu0 %v2030, 9
        %v2587 = vpop.permute.xlu0 %2586
        %2588 = vrot.lane.b32.xlu0 %v2032, 9
        %v2589 = vpop.permute.xlu0 %2588
        %2590 = vrot.lane.b32.xlu0 %v2033, 9
        %v2591 = vpop.permute.xlu0 %2590
        %2592 = vrot.lane.b32.xlu0 %v2035, 9
        %v2593 = vpop.permute.xlu0 %2592
        %2594 = vrot.lane.b32.xlu0 %v2036, 9
        %v2595 = vpop.permute.xlu0 %2594
        %2596 = vrot.lane.b32.xlu0 %v2038, 9
        %v2597 = vpop.permute.xlu0 %2596
        %2598 = vrot.lane.b32.xlu0 %v2039, 9
        %v2599 = vpop.permute.xlu0 %2598
        %2600 = vrot.lane.b32.xlu0 %v2041, 9
        %v2601 = vpop.permute.xlu0 %2600
        %2602 = vrot.lane.b32.xlu0 %v2042, 9
        %v2603 = vpop.permute.xlu0 %2602
        %2604 = vrot.lane.b32.xlu0 %v2044, 9
        %v2605 = vpop.permute.xlu0 %2604
        %2606 = vrot.lane.b32.xlu0 %v2045, 9
        %v2607 = vpop.permute.xlu0 %2606
        %2608 = vrot.lane.b32.xlu0 %v2047, 9
        %v2609 = vpop.permute.xlu0 %2608
        %2610 = vrot.lane.b32.xlu0 %v2048, 9
        %v2611 = vpop.permute.xlu0 %2610
        %2612 = vrot.lane.b32.xlu0 %v2050, 9
        %v2613 = vpop.permute.xlu0 %2612
        %2614 = vrot.lane.b32.xlu0 %v2051, 9
        %v2615 = vpop.permute.xlu0 %2614
        %2616 = vrot.lane.b32.xlu0 %v2053, 9
        %v2617 = vpop.permute.xlu0 %2616
        %2618 = vrot.lane.b32.xlu0 %v2054, 9
        %v2619 = vpop.permute.xlu0 %2618
        %2620 = vrot.lane.b32.xlu0 %v2056, 9
        %v2621 = vpop.permute.xlu0 %2620
        %2622 = vrot.lane.b32.xlu0 %v2057, 9
        %v2623 = vpop.permute.xlu0 %2622
        %2624 = vrot.lane.b32.xlu0 %v2059, 9
        %v2625 = vpop.permute.xlu0 %2624
        %2626 = vrot.lane.b32.xlu0 %v2060, 9
        %v2627 = vpop.permute.xlu0 %2626
        %2628 = vrot.lane.b32.xlu0 %v2062, 9
        %v2629 = vpop.permute.xlu0 %2628
        %2630 = vrot.lane.b32.xlu0 %v2063, 9
        %v2631 = vpop.permute.xlu0 %2630
        %2632 = vrot.lane.b32.xlu0 %v2065, 9
        %v2633 = vpop.permute.xlu0 %2632
        %2634 = vrot.lane.b32.xlu0 %v2066, 9
        %v2635 = vpop.permute.xlu0 %2634
        %2636 = vrot.lane.b32.xlu0 %v2068, 9
        %v2637 = vpop.permute.xlu0 %2636
        %2638 = vrot.lane.b32.xlu0 %v2069, 9
        %v2639 = vpop.permute.xlu0 %2638
        %vm2672 = vcmask 97352
        %2673 = vst.msk [vmem:[#allocation2] sm:$0xff] %vm2672, %v2577
        %2674 = vst.msk [vmem:[#allocation2 + $0x8] sm:$0xff] %vm2672, %v2579
        %2675 = vst.msk [vmem:[#allocation2 + $0x10] sm:$0xff] %vm2672, %v2581
        %2676 = vst.msk [vmem:[#allocation2 + $0x18] sm:$0xff] %vm2672, %v2583
        %2677 = vst.msk [vmem:[#allocation2 + $0x20] sm:$0xff] %vm2672, %v2585
        %2678 = vst.msk [vmem:[#allocation2 + $0x28] sm:$0xff] %vm2672, %v2587
        %2679 = vst.msk [vmem:[#allocation2 + $0x30] sm:$0xff] %vm2672, %v2589
        %2680 = vst.msk [vmem:[#allocation2 + $0x38] sm:$0xff] %vm2672, %v2591
        %2681 = vst.msk [vmem:[#allocation2 + $0x40] sm:$0xff] %vm2672, %v2593
        %2682 = vst.msk [vmem:[#allocation2 + $0x48] sm:$0xff] %vm2672, %v2595
        %2683 = vst.msk [vmem:[#allocation2 + $0x50] sm:$0xff] %vm2672, %v2597
        %2684 = vst.msk [vmem:[#allocation2 + $0x58] sm:$0xff] %vm2672, %v2599
        %2685 = vst.msk [vmem:[#allocation2 + $0x60] sm:$0xff] %vm2672, %v2601
        %2686 = vst.msk [vmem:[#allocation2 + $0x68] sm:$0xff] %vm2672, %v2603
        %2687 = vst.msk [vmem:[#allocation2 + $0x70] sm:$0xff] %vm2672, %v2605
        %2688 = vst.msk [vmem:[#allocation2 + $0x78] sm:$0xff] %vm2672, %v2607
        %2689 = vst.msk [vmem:[#allocation2 + $0x80] sm:$0xff] %vm2672, %v2609
        %2690 = vst.msk [vmem:[#allocation2 + $0x88] sm:$0xff] %vm2672, %v2611
        %2691 = vst.msk [vmem:[#allocation2 + $0x90] sm:$0xff] %vm2672, %v2613
        %2692 = vst.msk [vmem:[#allocation2 + $0x98] sm:$0xff] %vm2672, %v2615
        %2693 = vst.msk [vmem:[#allocation2 + $0xa0] sm:$0xff] %vm2672, %v2617
        %2694 = vst.msk [vmem:[#allocation2 + $0xa8] sm:$0xff] %vm2672, %v2619
        %2695 = vst.msk [vmem:[#allocation2 + $0xb0] sm:$0xff] %vm2672, %v2621
        %2696 = vst.msk [vmem:[#allocation2 + $0xb8] sm:$0xff] %vm2672, %v2623
        %2697 = vst.msk [vmem:[#allocation2 + $0xc0] sm:$0xff] %vm2672, %v2625
        %2698 = vst.msk [vmem:[#allocation2 + $0xc8] sm:$0xff] %vm2672, %v2627
        %2699 = vst.msk [vmem:[#allocation2 + $0xd0] sm:$0xff] %vm2672, %v2629
        %2700 = vst.msk [vmem:[#allocation2 + $0xd8] sm:$0xff] %vm2672, %v2631
        %2701 = vst.msk [vmem:[#allocation2 + $0xe0] sm:$0xff] %vm2672, %v2633
        %2702 = vst.msk [vmem:[#allocation2 + $0xe8] sm:$0xff] %vm2672, %v2635
        %2703 = vst.msk [vmem:[#allocation2 + $0xf0] sm:$0xff] %vm2672, %v2637
        %2704 = vst.msk [vmem:[#allocation2 + $0xf8] sm:$0xff] %vm2672, %v2639
        %v2706 = vrot.slane %v2068, 1
        %v2707 = vrot.slane %v2069, 1
        %v2708 = vsel %vm2154, %v2706, %v2707
        %v2709 = vrot.slane %v2070, 1
        %v2710 = vsel %vm2154, %v2707, %v2709
        %2711 = vrot.lane.b32.xlu0 %v2162, 12
        %v2712 = vpop.permute.xlu0 %2711
        %2713 = vrot.lane.b32.xlu0 %v2164, 12
        %v2714 = vpop.permute.xlu0 %2713
        %2715 = vrot.lane.b32.xlu0 %v2167, 12
        %v2716 = vpop.permute.xlu0 %2715
        %2717 = vrot.lane.b32.xlu0 %v2169, 12
        %v2718 = vpop.permute.xlu0 %2717
        %2719 = vrot.lane.b32.xlu0 %v2172, 12
        %v2720 = vpop.permute.xlu0 %2719
        %2721 = vrot.lane.b32.xlu0 %v2174, 12
        %v2722 = vpop.permute.xlu0 %2721
        %2723 = vrot.lane.b32.xlu0 %v2177, 12
        %v2724 = vpop.permute.xlu0 %2723
        %2725 = vrot.lane.b32.xlu0 %v2179, 12
        %v2726 = vpop.permute.xlu0 %2725
        %2727 = vrot.lane.b32.xlu0 %v2182, 12
        %v2728 = vpop.permute.xlu0 %2727
        %2729 = vrot.lane.b32.xlu0 %v2184, 12
        %v2730 = vpop.permute.xlu0 %2729
        %2731 = vrot.lane.b32.xlu0 %v2187, 12
        %v2732 = vpop.permute.xlu0 %2731
        %2733 = vrot.lane.b32.xlu0 %v2189, 12
        %v2734 = vpop.permute.xlu0 %2733
        %2735 = vrot.lane.b32.xlu0 %v2192, 12
        %v2736 = vpop.permute.xlu0 %2735
        %2737 = vrot.lane.b32.xlu0 %v2194, 12
        %v2738 = vpop.permute.xlu0 %2737
        %2739 = vrot.lane.b32.xlu0 %v2197, 12
        %v2740 = vpop.permute.xlu0 %2739
        %2741 = vrot.lane.b32.xlu0 %v2199, 12
        %v2742 = vpop.permute.xlu0 %2741
        %2743 = vrot.lane.b32.xlu0 %v2202, 12
        %v2744 = vpop.permute.xlu0 %2743
        %2745 = vrot.lane.b32.xlu0 %v2204, 12
        %v2746 = vpop.permute.xlu0 %2745
        %2747 = vrot.lane.b32.xlu0 %v2207, 12
        %v2748 = vpop.permute.xlu0 %2747
        %2749 = vrot.lane.b32.xlu0 %v2209, 12
        %v2750 = vpop.permute.xlu0 %2749
        %2751 = vrot.lane.b32.xlu0 %v2212, 12
        %v2752 = vpop.permute.xlu0 %2751
        %2753 = vrot.lane.b32.xlu0 %v2214, 12
        %v2754 = vpop.permute.xlu0 %2753
        %2755 = vrot.lane.b32.xlu0 %v2217, 12
        %v2756 = vpop.permute.xlu0 %2755
        %2757 = vrot.lane.b32.xlu0 %v2219, 12
        %v2758 = vpop.permute.xlu0 %2757
        %2759 = vrot.lane.b32.xlu0 %v2222, 12
        %v2760 = vpop.permute.xlu0 %2759
        %2761 = vrot.lane.b32.xlu0 %v2224, 12
        %v2762 = vpop.permute.xlu0 %2761
        %2763 = vrot.lane.b32.xlu0 %v2227, 12
        %v2764 = vpop.permute.xlu0 %2763
        %2765 = vrot.lane.b32.xlu0 %v2229, 12
        %v2766 = vpop.permute.xlu0 %2765
        %2767 = vrot.lane.b32.xlu0 %v2232, 12
        %v2768 = vpop.permute.xlu0 %2767
        %2769 = vrot.lane.b32.xlu0 %v2234, 12
        %v2770 = vpop.permute.xlu0 %2769
        %2771 = vrot.lane.b32.xlu0 %v2708, 12
        %v2772 = vpop.permute.xlu0 %2771
        %2773 = vrot.lane.b32.xlu0 %v2710, 12
        %v2774 = vpop.permute.xlu0 %2773
        %vm2807 = vcmask 121952
        %2808 = vst.msk [vmem:[#allocation2] sm:$0xff] %vm2807, %v2712
        %2809 = vst.msk [vmem:[#allocation2 + $0x8] sm:$0xff] %vm2807, %v2714
        %2810 = vst.msk [vmem:[#allocation2 + $0x10] sm:$0xff] %vm2807, %v2716
        %2811 = vst.msk [vmem:[#allocation2 + $0x18] sm:$0xff] %vm2807, %v2718
        %2812 = vst.msk [vmem:[#allocation2 + $0x20] sm:$0xff] %vm2807, %v2720
        %2813 = vst.msk [vmem:[#allocation2 + $0x28] sm:$0xff] %vm2807, %v2722
        %2814 = vst.msk [vmem:[#allocation2 + $0x30] sm:$0xff] %vm2807, %v2724
        %2815 = vst.msk [vmem:[#allocation2 + $0x38] sm:$0xff] %vm2807, %v2726
        %2816 = vst.msk [vmem:[#allocation2 + $0x40] sm:$0xff] %vm2807, %v2728
        %2817 = vst.msk [vmem:[#allocation2 + $0x48] sm:$0xff] %vm2807, %v2730
        %2818 = vst.msk [vmem:[#allocation2 + $0x50] sm:$0xff] %vm2807, %v2732
        %2819 = vst.msk [vmem:[#allocation2 + $0x58] sm:$0xff] %vm2807, %v2734
        %2820 = vst.msk [vmem:[#allocation2 + $0x60] sm:$0xff] %vm2807, %v2736
        %2821 = vst.msk [vmem:[#allocation2 + $0x68] sm:$0xff] %vm2807, %v2738
        %2822 = vst.msk [vmem:[#allocation2 + $0x70] sm:$0xff] %vm2807, %v2740
        %2823 = vst.msk [vmem:[#allocation2 + $0x78] sm:$0xff] %vm2807, %v2742
        %2824 = vst.msk [vmem:[#allocation2 + $0x80] sm:$0xff] %vm2807, %v2744
        %2825 = vst.msk [vmem:[#allocation2 + $0x88] sm:$0xff] %vm2807, %v2746
        %2826 = vst.msk [vmem:[#allocation2 + $0x90] sm:$0xff] %vm2807, %v2748
        %2827 = vst.msk [vmem:[#allocation2 + $0x98] sm:$0xff] %vm2807, %v2750
        %2828 = vst.msk [vmem:[#allocation2 + $0xa0] sm:$0xff] %vm2807, %v2752
        %2829 = vst.msk [vmem:[#allocation2 + $0xa8] sm:$0xff] %vm2807, %v2754
        %2830 = vst.msk [vmem:[#allocation2 + $0xb0] sm:$0xff] %vm2807, %v2756
        %2831 = vst.msk [vmem:[#allocation2 + $0xb8] sm:$0xff] %vm2807, %v2758
        %2832 = vst.msk [vmem:[#allocation2 + $0xc0] sm:$0xff] %vm2807, %v2760
        %2833 = vst.msk [vmem:[#allocation2 + $0xc8] sm:$0xff] %vm2807, %v2762
        %2834 = vst.msk [vmem:[#allocation2 + $0xd0] sm:$0xff] %vm2807, %v2764
        %2835 = vst.msk [vmem:[#allocation2 + $0xd8] sm:$0xff] %vm2807, %v2766
        %2836 = vst.msk [vmem:[#allocation2 + $0xe0] sm:$0xff] %vm2807, %v2768
        %2837 = vst.msk [vmem:[#allocation2 + $0xe8] sm:$0xff] %vm2807, %v2770
        %2838 = vst.msk [vmem:[#allocation2 + $0xf0] sm:$0xff] %vm2807, %v2772
        %2839 = vst.msk [vmem:[#allocation2 + $0xf8] sm:$0xff] %vm2807, %v2774
        %v2840 = vrot.slane %v2068, 2
        %v2841 = vrot.slane %v2069, 2
        %v2842 = vsel %vm2364, %v2840, %v2841
        %v2843 = vrot.slane %v2070, 2
        %v2844 = vsel %vm2364, %v2841, %v2843
        %2845 = vrot.lane.b32.xlu0 %v2372, 15
        %v2846 = vpop.permute.xlu0 %2845
        %2847 = vrot.lane.b32.xlu0 %v2374, 15
        %v2848 = vpop.permute.xlu0 %2847
        %2849 = vrot.lane.b32.xlu0 %v2377, 15
        %v2850 = vpop.permute.xlu0 %2849
        %2851 = vrot.lane.b32.xlu0 %v2379, 15
        %v2852 = vpop.permute.xlu0 %2851
        %2853 = vrot.lane.b32.xlu0 %v2382, 15
        %v2854 = vpop.permute.xlu0 %2853
        %2855 = vrot.lane.b32.xlu0 %v2384, 15
        %v2856 = vpop.permute.xlu0 %2855
        %2857 = vrot.lane.b32.xlu0 %v2387, 15
        %v2858 = vpop.permute.xlu0 %2857
        %2859 = vrot.lane.b32.xlu0 %v2389, 15
        %v2860 = vpop.permute.xlu0 %2859
        %2861 = vrot.lane.b32.xlu0 %v2392, 15
        %v2862 = vpop.permute.xlu0 %2861
        %2863 = vrot.lane.b32.xlu0 %v2394, 15
        %v2864 = vpop.permute.xlu0 %2863
        %2865 = vrot.lane.b32.xlu0 %v2397, 15
        %v2866 = vpop.permute.xlu0 %2865
        %2867 = vrot.lane.b32.xlu0 %v2399, 15
        %v2868 = vpop.permute.xlu0 %2867
        %2869 = vrot.lane.b32.xlu0 %v2402, 15
        %v2870 = vpop.permute.xlu0 %2869
        %2871 = vrot.lane.b32.xlu0 %v2404, 15
        %v2872 = vpop.permute.xlu0 %2871
        %2873 = vrot.lane.b32.xlu0 %v2407, 15
        %v2874 = vpop.permute.xlu0 %2873
        %2875 = vrot.lane.b32.xlu0 %v2409, 15
        %v2876 = vpop.permute.xlu0 %2875
        %2877 = vrot.lane.b32.xlu0 %v2412, 15
        %v2878 = vpop.permute.xlu0 %2877
        %2879 = vrot.lane.b32.xlu0 %v2414, 15
        %v2880 = vpop.permute.xlu0 %2879
        %2881 = vrot.lane.b32.xlu0 %v2417, 15
        %v2882 = vpop.permute.xlu0 %2881
        %2883 = vrot.lane.b32.xlu0 %v2419, 15
        %v2884 = vpop.permute.xlu0 %2883
        %2885 = vrot.lane.b32.xlu0 %v2422, 15
        %v2886 = vpop.permute.xlu0 %2885
        %2887 = vrot.lane.b32.xlu0 %v2424, 15
        %v2888 = vpop.permute.xlu0 %2887
        %2889 = vrot.lane.b32.xlu0 %v2427, 15
        %v2890 = vpop.permute.xlu0 %2889
        %2891 = vrot.lane.b32.xlu0 %v2429, 15
        %v2892 = vpop.permute.xlu0 %2891
        %2893 = vrot.lane.b32.xlu0 %v2432, 15
        %v2894 = vpop.permute.xlu0 %2893
        %2895 = vrot.lane.b32.xlu0 %v2434, 15
        %v2896 = vpop.permute.xlu0 %2895
        %2897 = vrot.lane.b32.xlu0 %v2437, 15
        %v2898 = vpop.permute.xlu0 %2897
        %2899 = vrot.lane.b32.xlu0 %v2439, 15
        %v2900 = vpop.permute.xlu0 %2899
        %2901 = vrot.lane.b32.xlu0 %v2442, 15
        %v2902 = vpop.permute.xlu0 %2901
        %2903 = vrot.lane.b32.xlu0 %v2444, 15
        %v2904 = vpop.permute.xlu0 %2903
        %2905 = vrot.lane.b32.xlu0 %v2842, 15
        %v2906 = vpop.permute.xlu0 %2905
        %2907 = vrot.lane.b32.xlu0 %v2844, 15
        %v2908 = vpop.permute.xlu0 %2907
        %vm2941 = vcmask 146552
        %2942 = vst.msk [vmem:[#allocation2] sm:$0xff] %vm2941, %v2846
        %2943 = vst.msk [vmem:[#allocation2 + $0x8] sm:$0xff] %vm2941, %v2848
        %2944 = vst.msk [vmem:[#allocation2 + $0x10] sm:$0xff] %vm2941, %v2850
        %2945 = vst.msk [vmem:[#allocation2 + $0x18] sm:$0xff] %vm2941, %v2852
        %2946 = vst.msk [vmem:[#allocation2 + $0x20] sm:$0xff] %vm2941, %v2854
        %2947 = vst.msk [vmem:[#allocation2 + $0x28] sm:$0xff] %vm2941, %v2856
        %2948 = vst.msk [vmem:[#allocation2 + $0x30] sm:$0xff] %vm2941, %v2858
        %2949 = vst.msk [vmem:[#allocation2 + $0x38] sm:$0xff] %vm2941, %v2860
        %2950 = vst.msk [vmem:[#allocation2 + $0x40] sm:$0xff] %vm2941, %v2862
        %2951 = vst.msk [vmem:[#allocation2 + $0x48] sm:$0xff] %vm2941, %v2864
        %2952 = vst.msk [vmem:[#allocation2 + $0x50] sm:$0xff] %vm2941, %v2866
        %2953 = vst.msk [vmem:[#allocation2 + $0x58] sm:$0xff] %vm2941, %v2868
        %2954 = vst.msk [vmem:[#allocation2 + $0x60] sm:$0xff] %vm2941, %v2870
        %2955 = vst.msk [vmem:[#allocation2 + $0x68] sm:$0xff] %vm2941, %v2872
        %2956 = vst.msk [vmem:[#allocation2 + $0x70] sm:$0xff] %vm2941, %v2874
        %2957 = vst.msk [vmem:[#allocation2 + $0x78] sm:$0xff] %vm2941, %v2876
        %2958 = vst.msk [vmem:[#allocation2 + $0x80] sm:$0xff] %vm2941, %v2878
        %2959 = vst.msk [vmem:[#allocation2 + $0x88] sm:$0xff] %vm2941, %v2880
        %2960 = vst.msk [vmem:[#allocation2 + $0x90] sm:$0xff] %vm2941, %v2882
        %2961 = vst.msk [vmem:[#allocation2 + $0x98] sm:$0xff] %vm2941, %v2884
        %2962 = vst.msk [vmem:[#allocation2 + $0xa0] sm:$0xff] %vm2941, %v2886
        %2963 = vst.msk [vmem:[#allocation2 + $0xa8] sm:$0xff] %vm2941, %v2888
        %2964 = vst.msk [vmem:[#allocation2 + $0xb0] sm:$0xff] %vm2941, %v2890
        %2965 = vst.msk [vmem:[#allocation2 + $0xb8] sm:$0xff] %vm2941, %v2892
        %2966 = vst.msk [vmem:[#allocation2 + $0xc0] sm:$0xff] %vm2941, %v2894
        %2967 = vst.msk [vmem:[#allocation2 + $0xc8] sm:$0xff] %vm2941, %v2896
        %2968 = vst.msk [vmem:[#allocation2 + $0xd0] sm:$0xff] %vm2941, %v2898
        %2969 = vst.msk [vmem:[#allocation2 + $0xd8] sm:$0xff] %vm2941, %v2900
        %2970 = vst.msk [vmem:[#allocation2 + $0xe0] sm:$0xff] %vm2941, %v2902
        %2971 = vst.msk [vmem:[#allocation2 + $0xe8] sm:$0xff] %vm2941, %v2904
        %2972 = vst.msk [vmem:[#allocation2 + $0xf0] sm:$0xff] %vm2941, %v2906
        %2973 = vst.msk [vmem:[#allocation2 + $0xf8] sm:$0xff] %vm2941, %v2908
        %2976 = vrot.lane.b32.xlu0 %v2026, 18
        %v2977 = vpop.permute.xlu0 %2976
        %2978 = vrot.lane.b32.xlu0 %v2027, 18
        %v2979 = vpop.permute.xlu0 %2978
        %2980 = vrot.lane.b32.xlu0 %v2029, 18
        %v2981 = vpop.permute.xlu0 %2980
        %2982 = vrot.lane.b32.xlu0 %v2030, 18
        %v2983 = vpop.permute.xlu0 %2982
        %2984 = vrot.lane.b32.xlu0 %v2032, 18
        %v2985 = vpop.permute.xlu0 %2984
        %2986 = vrot.lane.b32.xlu0 %v2033, 18
        %v2987 = vpop.permute.xlu0 %2986
        %2988 = vrot.lane.b32.xlu0 %v2035, 18
        %v2989 = vpop.permute.xlu0 %2988
        %2990 = vrot.lane.b32.xlu0 %v2036, 18
        %v2991 = vpop.permute.xlu0 %2990
        %2992 = vrot.lane.b32.xlu0 %v2038, 18
        %v2993 = vpop.permute.xlu0 %2992
        %2994 = vrot.lane.b32.xlu0 %v2039, 18
        %v2995 = vpop.permute.xlu0 %2994
        %2996 = vrot.lane.b32.xlu0 %v2041, 18
        %v2997 = vpop.permute.xlu0 %2996
        %2998 = vrot.lane.b32.xlu0 %v2042, 18
        %v2999 = vpop.permute.xlu0 %2998
        %3000 = vrot.lane.b32.xlu0 %v2044, 18
        %v3001 = vpop.permute.xlu0 %3000
        %3002 = vrot.lane.b32.xlu0 %v2045, 18
        %v3003 = vpop.permute.xlu0 %3002
        %3004 = vrot.lane.b32.xlu0 %v2047, 18
        %v3005 = vpop.permute.xlu0 %3004
        %3006 = vrot.lane.b32.xlu0 %v2048, 18
        %v3007 = vpop.permute.xlu0 %3006
        %3008 = vrot.lane.b32.xlu0 %v2050, 18
        %v3009 = vpop.permute.xlu0 %3008
        %3010 = vrot.lane.b32.xlu0 %v2051, 18
        %v3011 = vpop.permute.xlu0 %3010
        %3012 = vrot.lane.b32.xlu0 %v2053, 18
        %v3013 = vpop.permute.xlu0 %3012
        %3014 = vrot.lane.b32.xlu0 %v2054, 18
        %v3015 = vpop.permute.xlu0 %3014
        %3016 = vrot.lane.b32.xlu0 %v2056, 18
        %v3017 = vpop.permute.xlu0 %3016
        %3018 = vrot.lane.b32.xlu0 %v2057, 18
        %v3019 = vpop.permute.xlu0 %3018
        %3020 = vrot.lane.b32.xlu0 %v2059, 18
        %v3021 = vpop.permute.xlu0 %3020
        %3022 = vrot.lane.b32.xlu0 %v2060, 18
        %v3023 = vpop.permute.xlu0 %3022
        %3024 = vrot.lane.b32.xlu0 %v2062, 18
        %v3025 = vpop.permute.xlu0 %3024
        %3026 = vrot.lane.b32.xlu0 %v2063, 18
        %v3027 = vpop.permute.xlu0 %3026
        %3028 = vrot.lane.b32.xlu0 %v2065, 18
        %v3029 = vpop.permute.xlu0 %3028
        %3030 = vrot.lane.b32.xlu0 %v2066, 18
        %v3031 = vpop.permute.xlu0 %3030
        %3032 = vrot.lane.b32.xlu0 %v2068, 18
        %v3033 = vpop.permute.xlu0 %3032
        %3034 = vrot.lane.b32.xlu0 %v2069, 18
        %v3035 = vpop.permute.xlu0 %3034
        %3036 = vrot.lane.b32.xlu0 %v2071, 18
        %v3037 = vpop.permute.xlu0 %3036
        %3038 = vrot.lane.b32.xlu0 %v2072, 18
        %v3039 = vpop.permute.xlu0 %3038
        %vm3072 = vcmask 171152
        %3073 = vst.msk [vmem:[#allocation2] sm:$0xff] %vm3072, %v2977
        %3074 = vst.msk [vmem:[#allocation2 + $0x8] sm:$0xff] %vm3072, %v2979
        %3075 = vst.msk [vmem:[#allocation2 + $0x10] sm:$0xff] %vm3072, %v2981
        %3076 = vst.msk [vmem:[#allocation2 + $0x18] sm:$0xff] %vm3072, %v2983
        %3077 = vst.msk [vmem:[#allocation2 + $0x20] sm:$0xff] %vm3072, %v2985
        %3078 = vst.msk [vmem:[#allocation2 + $0x28] sm:$0xff] %vm3072, %v2987
        %3079 = vst.msk [vmem:[#allocation2 + $0x30] sm:$0xff] %vm3072, %v2989
        %3080 = vst.msk [vmem:[#allocation2 + $0x38] sm:$0xff] %vm3072, %v2991
        %3081 = vst.msk [vmem:[#allocation2 + $0x40] sm:$0xff] %vm3072, %v2993
        %3082 = vst.msk [vmem:[#allocation2 + $0x48] sm:$0xff] %vm3072, %v2995
        %3083 = vst.msk [vmem:[#allocation2 + $0x50] sm:$0xff] %vm3072, %v2997
        %3084 = vst.msk [vmem:[#allocation2 + $0x58] sm:$0xff] %vm3072, %v2999
        %3085 = vst.msk [vmem:[#allocation2 + $0x60] sm:$0xff] %vm3072, %v3001
        %3086 = vst.msk [vmem:[#allocation2 + $0x68] sm:$0xff] %vm3072, %v3003
        %3087 = vst.msk [vmem:[#allocation2 + $0x70] sm:$0xff] %vm3072, %v3005
        %3088 = vst.msk [vmem:[#allocation2 + $0x78] sm:$0xff] %vm3072, %v3007
        %3089 = vst.msk [vmem:[#allocation2 + $0x80] sm:$0xff] %vm3072, %v3009
        %3090 = vst.msk [vmem:[#allocation2 + $0x88] sm:$0xff] %vm3072, %v3011
        %3091 = vst.msk [vmem:[#allocation2 + $0x90] sm:$0xff] %vm3072, %v3013
        %3092 = vst.msk [vmem:[#allocation2 + $0x98] sm:$0xff] %vm3072, %v3015
        %3093 = vst.msk [vmem:[#allocation2 + $0xa0] sm:$0xff] %vm3072, %v3017
        %3094 = vst.msk [vmem:[#allocation2 + $0xa8] sm:$0xff] %vm3072, %v3019
        %3095 = vst.msk [vmem:[#allocation2 + $0xb0] sm:$0xff] %vm3072, %v3021
        %3096 = vst.msk [vmem:[#allocation2 + $0xb8] sm:$0xff] %vm3072, %v3023
        %3097 = vst.msk [vmem:[#allocation2 + $0xc0] sm:$0xff] %vm3072, %v3025
        %3098 = vst.msk [vmem:[#allocation2 + $0xc8] sm:$0xff] %vm3072, %v3027
        %3099 = vst.msk [vmem:[#allocation2 + $0xd0] sm:$0xff] %vm3072, %v3029
        %3100 = vst.msk [vmem:[#allocation2 + $0xd8] sm:$0xff] %vm3072, %v3031
        %3101 = vst.msk [vmem:[#allocation2 + $0xe0] sm:$0xff] %vm3072, %v3033
        %3102 = vst.msk [vmem:[#allocation2 + $0xe8] sm:$0xff] %vm3072, %v3035
        %3103 = vst.msk [vmem:[#allocation2 + $0xf0] sm:$0xff] %vm3072, %v3037
        %3104 = vst.msk [vmem:[#allocation2 + $0xf8] sm:$0xff] %vm3072, %v3039
        %v3106 = vrot.slane %v2071, 1
        %v3107 = vrot.slane %v2072, 1
        %v3108 = vsel %vm2154, %v3106, %v3107
        %v3109 = vrot.slane %v2073, 1
        %v3110 = vsel %vm2154, %v3107, %v3109
        %3111 = vrot.lane.b32.xlu0 %v2167, 21
        %v3112 = vpop.permute.xlu0 %3111
        %3113 = vrot.lane.b32.xlu0 %v2169, 21
        %v3114 = vpop.permute.xlu0 %3113
        %3115 = vrot.lane.b32.xlu0 %v2172, 21
        %v3116 = vpop.permute.xlu0 %3115
        %3117 = vrot.lane.b32.xlu0 %v2174, 21
        %v3118 = vpop.permute.xlu0 %3117
        %3119 = vrot.lane.b32.xlu0 %v2177, 21
        %v3120 = vpop.permute.xlu0 %3119
        %3121 = vrot.lane.b32.xlu0 %v2179, 21
        %v3122 = vpop.permute.xlu0 %3121
        %3123 = vrot.lane.b32.xlu0 %v2182, 21
        %v3124 = vpop.permute.xlu0 %3123
        %3125 = vrot.lane.b32.xlu0 %v2184, 21
        %v3126 = vpop.permute.xlu0 %3125
        %3127 = vrot.lane.b32.xlu0 %v2187, 21
        %v3128 = vpop.permute.xlu0 %3127
        %3129 = vrot.lane.b32.xlu0 %v2189, 21
        %v3130 = vpop.permute.xlu0 %3129
        %3131 = vrot.lane.b32.xlu0 %v2192, 21
        %v3132 = vpop.permute.xlu0 %3131
        %3133 = vrot.lane.b32.xlu0 %v2194, 21
        %v3134 = vpop.permute.xlu0 %3133
        %3135 = vrot.lane.b32.xlu0 %v2197, 21
        %v3136 = vpop.permute.xlu0 %3135
        %3137 = vrot.lane.b32.xlu0 %v2199, 21
        %v3138 = vpop.permute.xlu0 %3137
        %3139 = vrot.lane.b32.xlu0 %v2202, 21
        %v3140 = vpop.permute.xlu0 %3139
        %3141 = vrot.lane.b32.xlu0 %v2204, 21
        %v3142 = vpop.permute.xlu0 %3141
        %3143 = vrot.lane.b32.xlu0 %v2207, 21
        %v3144 = vpop.permute.xlu0 %3143
        %3145 = vrot.lane.b32.xlu0 %v2209, 21
        %v3146 = vpop.permute.xlu0 %3145
        %3147 = vrot.lane.b32.xlu0 %v2212, 21
        %v3148 = vpop.permute.xlu0 %3147
        %3149 = vrot.lane.b32.xlu0 %v2214, 21
        %v3150 = vpop.permute.xlu0 %3149
        %3151 = vrot.lane.b32.xlu0 %v2217, 21
        %v3152 = vpop.permute.xlu0 %3151
        %3153 = vrot.lane.b32.xlu0 %v2219, 21
        %v3154 = vpop.permute.xlu0 %3153
        %3155 = vrot.lane.b32.xlu0 %v2222, 21
        %v3156 = vpop.permute.xlu0 %3155
        %3157 = vrot.lane.b32.xlu0 %v2224, 21
        %v3158 = vpop.permute.xlu0 %3157
        %3159 = vrot.lane.b32.xlu0 %v2227, 21
        %v3160 = vpop.permute.xlu0 %3159
        %3161 = vrot.lane.b32.xlu0 %v2229, 21
        %v3162 = vpop.permute.xlu0 %3161
        %3163 = vrot.lane.b32.xlu0 %v2232, 21
        %v3164 = vpop.permute.xlu0 %3163
        %3165 = vrot.lane.b32.xlu0 %v2234, 21
        %v3166 = vpop.permute.xlu0 %3165
        %3167 = vrot.lane.b32.xlu0 %v2708, 21
        %v3168 = vpop.permute.xlu0 %3167
        %3169 = vrot.lane.b32.xlu0 %v2710, 21
        %v3170 = vpop.permute.xlu0 %3169
        %3171 = vrot.lane.b32.xlu0 %v3108, 21
        %v3172 = vpop.permute.xlu0 %3171
        %3173 = vrot.lane.b32.xlu0 %v3110, 21
        %v3174 = vpop.permute.xlu0 %3173
        %vm3207 = vcmask 195752
        %3208 = vst.msk [vmem:[#allocation2] sm:$0xff] %vm3207, %v3112
        %3209 = vst.msk [vmem:[#allocation2 + $0x8] sm:$0xff] %vm3207, %v3114
        %3210 = vst.msk [vmem:[#allocation2 + $0x10] sm:$0xff] %vm3207, %v3116
        %3211 = vst.msk [vmem:[#allocation2 + $0x18] sm:$0xff] %vm3207, %v3118
        %3212 = vst.msk [vmem:[#allocation2 + $0x20] sm:$0xff] %vm3207, %v3120
        %3213 = vst.msk [vmem:[#allocation2 + $0x28] sm:$0xff] %vm3207, %v3122
        %3214 = vst.msk [vmem:[#allocation2 + $0x30] sm:$0xff] %vm3207, %v3124
        %3215 = vst.msk [vmem:[#allocation2 + $0x38] sm:$0xff] %vm3207, %v3126
        %3216 = vst.msk [vmem:[#allocation2 + $0x40] sm:$0xff] %vm3207, %v3128
        %3217 = vst.msk [vmem:[#allocation2 + $0x48] sm:$0xff] %vm3207, %v3130
        %3218 = vst.msk [vmem:[#allocation2 + $0x50] sm:$0xff] %vm3207, %v3132
        %3219 = vst.msk [vmem:[#allocation2 + $0x58] sm:$0xff] %vm3207, %v3134
        %3220 = vst.msk [vmem:[#allocation2 + $0x60] sm:$0xff] %vm3207, %v3136
        %3221 = vst.msk [vmem:[#allocation2 + $0x68] sm:$0xff] %vm3207, %v3138
        %3222 = vst.msk [vmem:[#allocation2 + $0x70] sm:$0xff] %vm3207, %v3140
        %3223 = vst.msk [vmem:[#allocation2 + $0x78] sm:$0xff] %vm3207, %v3142
        %3224 = vst.msk [vmem:[#allocation2 + $0x80] sm:$0xff] %vm3207, %v3144
        %3225 = vst.msk [vmem:[#allocation2 + $0x88] sm:$0xff] %vm3207, %v3146
        %3226 = vst.msk [vmem:[#allocation2 + $0x90] sm:$0xff] %vm3207, %v3148
        %3227 = vst.msk [vmem:[#allocation2 + $0x98] sm:$0xff] %vm3207, %v3150
        %3228 = vst.msk [vmem:[#allocation2 + $0xa0] sm:$0xff] %vm3207, %v3152
        %3229 = vst.msk [vmem:[#allocation2 + $0xa8] sm:$0xff] %vm3207, %v3154
        %3230 = vst.msk [vmem:[#allocation2 + $0xb0] sm:$0xff] %vm3207, %v3156
        %3231 = vst.msk [vmem:[#allocation2 + $0xb8] sm:$0xff] %vm3207, %v3158
        %3232 = vst.msk [vmem:[#allocation2 + $0xc0] sm:$0xff] %vm3207, %v3160
        %3233 = vst.msk [vmem:[#allocation2 + $0xc8] sm:$0xff] %vm3207, %v3162
        %3234 = vst.msk [vmem:[#allocation2 + $0xd0] sm:$0xff] %vm3207, %v3164
        %3235 = vst.msk [vmem:[#allocation2 + $0xd8] sm:$0xff] %vm3207, %v3166
        %3236 = vst.msk [vmem:[#allocation2 + $0xe0] sm:$0xff] %vm3207, %v3168
        %3237 = vst.msk [vmem:[#allocation2 + $0xe8] sm:$0xff] %vm3207, %v3170
        %3238 = vst.msk [vmem:[#allocation2 + $0xf0] sm:$0xff] %vm3207, %v3172
        %3239 = vst.msk [vmem:[#allocation2 + $0xf8] sm:$0xff] %vm3207, %v3174
        %v3240 = vrot.slane %v2071, 2
        %v3241 = vrot.slane %v2072, 2
        %v3242 = vsel %vm2364, %v3240, %v3241
        %v3243 = vrot.slane %v2073, 2
        %v3244 = vsel %vm2364, %v3241, %v3243
        %3245 = vrot.lane.b32.xlu0 %v2377, 24
        %v3246 = vpop.permute.xlu0 %3245
        %3247 = vrot.lane.b32.xlu0 %v2379, 24
        %v3248 = vpop.permute.xlu0 %3247
        %3249 = vrot.lane.b32.xlu0 %v2382, 24
        %v3250 = vpop.permute.xlu0 %3249
        %3251 = vrot.lane.b32.xlu0 %v2384, 24
        %v3252 = vpop.permute.xlu0 %3251
        %3253 = vrot.lane.b32.xlu0 %v2387, 24
        %v3254 = vpop.permute.xlu0 %3253
        %3255 = vrot.lane.b32.xlu0 %v2389, 24
        %v3256 = vpop.permute.xlu0 %3255
        %3257 = vrot.lane.b32.xlu0 %v2392, 24
        %v3258 = vpop.permute.xlu0 %3257
        %3259 = vrot.lane.b32.xlu0 %v2394, 24
        %v3260 = vpop.permute.xlu0 %3259
        %3261 = vrot.lane.b32.xlu0 %v2397, 24
        %v3262 = vpop.permute.xlu0 %3261
        %3263 = vrot.lane.b32.xlu0 %v2399, 24
        %v3264 = vpop.permute.xlu0 %3263
        %3265 = vrot.lane.b32.xlu0 %v2402, 24
        %v3266 = vpop.permute.xlu0 %3265
        %3267 = vrot.lane.b32.xlu0 %v2404, 24
        %v3268 = vpop.permute.xlu0 %3267
        %3269 = vrot.lane.b32.xlu0 %v2407, 24
        %v3270 = vpop.permute.xlu0 %3269
        %3271 = vrot.lane.b32.xlu0 %v2409, 24
        %v3272 = vpop.permute.xlu0 %3271
        %3273 = vrot.lane.b32.xlu0 %v2412, 24
        %v3274 = vpop.permute.xlu0 %3273
        %3275 = vrot.lane.b32.xlu0 %v2414, 24
        %v3276 = vpop.permute.xlu0 %3275
        %3277 = vrot.lane.b32.xlu0 %v2417, 24
        %v3278 = vpop.permute.xlu0 %3277
        %3279 = vrot.lane.b32.xlu0 %v2419, 24
        %v3280 = vpop.permute.xlu0 %3279
        %3281 = vrot.lane.b32.xlu0 %v2422, 24
        %v3282 = vpop.permute.xlu0 %3281
        %3283 = vrot.lane.b32.xlu0 %v2424, 24
        %v3284 = vpop.permute.xlu0 %3283
        %3285 = vrot.lane.b32.xlu0 %v2427, 24
        %v3286 = vpop.permute.xlu0 %3285
        %3287 = vrot.lane.b32.xlu0 %v2429, 24
        %v3288 = vpop.permute.xlu0 %3287
        %3289 = vrot.lane.b32.xlu0 %v2432, 24
        %v3290 = vpop.permute.xlu0 %3289
        %3291 = vrot.lane.b32.xlu0 %v2434, 24
        %v3292 = vpop.permute.xlu0 %3291
        %3293 = vrot.lane.b32.xlu0 %v2437, 24
        %v3294 = vpop.permute.xlu0 %3293
        %3295 = vrot.lane.b32.xlu0 %v2439, 24
        %v3296 = vpop.permute.xlu0 %3295
        %3297 = vrot.lane.b32.xlu0 %v2442, 24
        %v3298 = vpop.permute.xlu0 %3297
        %3299 = vrot.lane.b32.xlu0 %v2444, 24
        %v3300 = vpop.permute.xlu0 %3299
        %3301 = vrot.lane.b32.xlu0 %v2842, 24
        %v3302 = vpop.permute.xlu0 %3301
        %3303 = vrot.lane.b32.xlu0 %v2844, 24
        %v3304 = vpop.permute.xlu0 %3303
        %3305 = vrot.lane.b32.xlu0 %v3242, 24
        %v3306 = vpop.permute.xlu0 %3305
        %3307 = vrot.lane.b32.xlu0 %v3244, 24
        %v3308 = vpop.permute.xlu0 %3307
        %vm3341 = vcmask 220352
        %3342 = vst.msk [vmem:[#allocation2] sm:$0xff] %vm3341, %v3246
        %3343 = vst.msk [vmem:[#allocation2 + $0x8] sm:$0xff] %vm3341, %v3248
        %3344 = vst.msk [vmem:[#allocation2 + $0x10] sm:$0xff] %vm3341, %v3250
        %3345 = vst.msk [vmem:[#allocation2 + $0x18] sm:$0xff] %vm3341, %v3252
        %3346 = vst.msk [vmem:[#allocation2 + $0x20] sm:$0xff] %vm3341, %v3254
        %3347 = vst.msk [vmem:[#allocation2 + $0x28] sm:$0xff] %vm3341, %v3256
        %3348 = vst.msk [vmem:[#allocation2 + $0x30] sm:$0xff] %vm3341, %v3258
        %3349 = vst.msk [vmem:[#allocation2 + $0x38] sm:$0xff] %vm3341, %v3260
        %3350 = vst.msk [vmem:[#allocation2 + $0x40] sm:$0xff] %vm3341, %v3262
        %3351 = vst.msk [vmem:[#allocation2 + $0x48] sm:$0xff] %vm3341, %v3264
        %3352 = vst.msk [vmem:[#allocation2 + $0x50] sm:$0xff] %vm3341, %v3266
        %3353 = vst.msk [vmem:[#allocation2 + $0x58] sm:$0xff] %vm3341, %v3268
        %3354 = vst.msk [vmem:[#allocation2 + $0x60] sm:$0xff] %vm3341, %v3270
        %3355 = vst.msk [vmem:[#allocation2 + $0x68] sm:$0xff] %vm3341, %v3272
        %3356 = vst.msk [vmem:[#allocation2 + $0x70] sm:$0xff] %vm3341, %v3274
        %3357 = vst.msk [vmem:[#allocation2 + $0x78] sm:$0xff] %vm3341, %v3276
        %3358 = vst.msk [vmem:[#allocation2 + $0x80] sm:$0xff] %vm3341, %v3278
        %3359 = vst.msk [vmem:[#allocation2 + $0x88] sm:$0xff] %vm3341, %v3280
        %3360 = vst.msk [vmem:[#allocation2 + $0x90] sm:$0xff] %vm3341, %v3282
        %3361 = vst.msk [vmem:[#allocation2 + $0x98] sm:$0xff] %vm3341, %v3284
        %3362 = vst.msk [vmem:[#allocation2 + $0xa0] sm:$0xff] %vm3341, %v3286
        %3363 = vst.msk [vmem:[#allocation2 + $0xa8] sm:$0xff] %vm3341, %v3288
        %3364 = vst.msk [vmem:[#allocation2 + $0xb0] sm:$0xff] %vm3341, %v3290
        %3365 = vst.msk [vmem:[#allocation2 + $0xb8] sm:$0xff] %vm3341, %v3292
        %3366 = vst.msk [vmem:[#allocation2 + $0xc0] sm:$0xff] %vm3341, %v3294
        %3367 = vst.msk [vmem:[#allocation2 + $0xc8] sm:$0xff] %vm3341, %v3296
        %3368 = vst.msk [vmem:[#allocation2 + $0xd0] sm:$0xff] %vm3341, %v3298
        %3369 = vst.msk [vmem:[#allocation2 + $0xd8] sm:$0xff] %vm3341, %v3300
        %3370 = vst.msk [vmem:[#allocation2 + $0xe0] sm:$0xff] %vm3341, %v3302
        %3371 = vst.msk [vmem:[#allocation2 + $0xe8] sm:$0xff] %vm3341, %v3304
        %3372 = vst.msk [vmem:[#allocation2 + $0xf0] sm:$0xff] %vm3341, %v3306
        %3373 = vst.msk [vmem:[#allocation2 + $0xf8] sm:$0xff] %vm3341, %v3308
        %v3374 = vld [vmem:[#allocation2] sm:$0xff]
        %v3375 = vld [vmem:[#allocation2 + $0x8] sm:$0xff]
        %v3376 = vld [vmem:[#allocation2 + $0x10] sm:$0xff]
        %v3377 = vld [vmem:[#allocation2 + $0x18] sm:$0xff]
        %v3378 = vld [vmem:[#allocation2 + $0x20] sm:$0xff]
        %v3379 = vld [vmem:[#allocation2 + $0x28] sm:$0xff]
        %v3380 = vld [vmem:[#allocation2 + $0x30] sm:$0xff]
        %v3381 = vld [vmem:[#allocation2 + $0x38] sm:$0xff]
        %v3382 = vld [vmem:[#allocation2 + $0x40] sm:$0xff]
        %v3383 = vld [vmem:[#allocation2 + $0x48] sm:$0xff]
        %v3384 = vld [vmem:[#allocation2 + $0x50] sm:$0xff]
        %v3385 = vld [vmem:[#allocation2 + $0x58] sm:$0xff]
        %v3386 = vld [vmem:[#allocation2 + $0x60] sm:$0xff]
        %v3387 = vld [vmem:[#allocation2 + $0x68] sm:$0xff]
        %v3388 = vld [vmem:[#allocation2 + $0x70] sm:$0xff]
        %v3389 = vld [vmem:[#allocation2 + $0x78] sm:$0xff]
        %v3390 = vld [vmem:[#allocation2 + $0x80] sm:$0xff]
        %v3391 = vld [vmem:[#allocation2 + $0x88] sm:$0xff]
        %v3392 = vld [vmem:[#allocation2 + $0x90] sm:$0xff]
        %v3393 = vld [vmem:[#allocation2 + $0x98] sm:$0xff]
        %v3394 = vld [vmem:[#allocation2 + $0xa0] sm:$0xff]
        %v3395 = vld [vmem:[#allocation2 + $0xa8] sm:$0xff]
        %v3396 = vld [vmem:[#allocation2 + $0xb0] sm:$0xff]
        %v3397 = vld [vmem:[#allocation2 + $0xb8] sm:$0xff]
        %v3398 = vld [vmem:[#allocation2 + $0xc0] sm:$0xff]
        %v3399 = vld [vmem:[#allocation2 + $0xc8] sm:$0xff]
        %v3400 = vld [vmem:[#allocation2 + $0xd0] sm:$0xff]
        %v3401 = vld [vmem:[#allocation2 + $0xd8] sm:$0xff]
        %v3402 = vld [vmem:[#allocation2 + $0xe0] sm:$0xff]
        %v3403 = vld [vmem:[#allocation2 + $0xe8] sm:$0xff]
        %v3404 = vld [vmem:[#allocation2 + $0xf0] sm:$0xff]
        %v3405 = vld [vmem:[#allocation2 + $0xf8] sm:$0xff]
        %v3406 = vld [vmem:[%s5] sm:$0xff]
        %v3407 = vld [vmem:[%s5 + $0x8] sm:$0xff]
        %v3408 = vld [vmem:[%s5 + $0x10] sm:$0xff]
        %v3409 = vld [vmem:[%s5 + $0x18] sm:$0xff]
        %v3410 = vld [vmem:[%s5 + $0x20] sm:$0xff]
        %v3411 = vld [vmem:[%s5 + $0x28] sm:$0xff]
        %v3412 = vld [vmem:[%s5 + $0x30] sm:$0xff]
        %v3413 = vld [vmem:[%s5 + $0x38] sm:$0xff]
        %v3414 = vld [vmem:[%s5 + $0x40] sm:$0xff]
        %v3415 = vld [vmem:[%s5 + $0x48] sm:$0xff]
        %v3416 = vld [vmem:[%s5 + $0x50] sm:$0xff]
        %v3417 = vld [vmem:[%s5 + $0x58] sm:$0xff]
        %v3418 = vld [vmem:[%s5 + $0x60] sm:$0xff]
        %v3419 = vld [vmem:[%s5 + $0x68] sm:$0xff]
        %v3420 = vld [vmem:[%s5 + $0x70] sm:$0xff]
        %v3421 = vld [vmem:[%s5 + $0x78] sm:$0xff]
        %v3422 = vld [vmem:[%s5 + $0x80] sm:$0xff]
        %v3423 = vld [vmem:[%s5 + $0x88] sm:$0xff]
        %v3424 = vld [vmem:[%s5 + $0x90] sm:$0x7]
        %v3425 = vld [vmem:[%s5 + $0x98] sm:$0x7]
        %v3426 = vld [vmem:[%s5 + $0xa0] sm:$0x7]
        %v3427 = vld [vmem:[%s5 + $0xa8] sm:$0x7]
        %v3428 = vld [vmem:[%s5 + $0xb0] sm:$0x7]
        %v3429 = vld [vmem:[%s5 + $0xb8] sm:$0x7]
        %v3430 = vld [vmem:[%s6] sm:$0x3f]
        %v3432 = vperm.slane %v3430, 0
        %v3433 = vperm.slane %v3430, 1
        %v3434 = vperm.slane %v3430, 2
        %v3435 = vperm.slane %v3430, 3
        %v3436 = vperm.slane %v3430, 4
        %v3437 = vperm.slane %v3430, 5
        %vm3444 = vcmask 220160
        %v3446 = vsel %vm3444, %v3374, 0
        %v3449 = vsel %vm3444, %v3375, 0
        %v3452 = vsel %vm3444, %v3376, 0
        %v3455 = vsel %vm3444, %v3377, 0
        %v3458 = vsel %vm3444, %v3378, 0
        %v3461 = vsel %vm3444, %v3379, 0
        %v3464 = vsel %vm3444, %v3380, 0
        %v3467 = vsel %vm3444, %v3381, 0
        %v3470 = vsel %vm3444, %v3382, 0
        %v3473 = vsel %vm3444, %v3383, 0
        %v3476 = vsel %vm3444, %v3384, 0
        %v3479 = vsel %vm3444, %v3385, 0
        %v3482 = vsel %vm3444, %v3386, 0
        %v3485 = vsel %vm3444, %v3387, 0
        %v3488 = vsel %vm3444, %v3388, 0
        %v3491 = vsel %vm3444, %v3389, 0
        %v3494 = vsel %vm3444, %v3390, 0
        %v3497 = vsel %vm3444, %v3391, 0
        %v3500 = vsel %vm3444, %v3392, 0
        %v3503 = vsel %vm3444, %v3393, 0
        %v3506 = vsel %vm3444, %v3394, 0
        %v3509 = vsel %vm3444, %v3395, 0
        %v3512 = vsel %vm3444, %v3396, 0
        %v3515 = vsel %vm3444, %v3397, 0
        %v3518 = vsel %vm3444, %v3398, 0
        %v3521 = vsel %vm3444, %v3399, 0
        %v3524 = vsel %vm3444, %v3400, 0
        %v3527 = vsel %vm3444, %v3401, 0
        %v3530 = vsel %vm3444, %v3402, 0
        %v3533 = vsel %vm3444, %v3403, 0
        %v3536 = vsel %vm3444, %v3404, 0
        %v3539 = vsel %vm3444, %v3405, 0
        %vm3541 = vcmask 1042432
        %v3543 = vsel %vm3541, %v3424, 0
        %v3546 = vsel %vm3541, %v3425, 0
        %v3549 = vsel %vm3541, %v3426, 0
        %v3552 = vsel %vm3541, %v3427, 0
        %v3555 = vsel %vm3541, %v3428, 0
        %v3558 = vsel %vm3541, %v3429, 0
        %3560 = vmatpush.msra.mxu0 0.0
        %3561 = vmatpush.msra.mxu0 0.0
        %3562 = vmatpush.msra.mxu0 0.0
        %3563 = vmatpush.msra.mxu0 0.0
        %3564 = vmatpush.msra.mxu0 0.0
        %3565 = vmatpush.msra.mxu0 0.0
        %3566 = vmatpush.msra.mxu0 0.0
        %3567 = vmatpush.msra.mxu0 0.0
        %3568 = vmatpush.msra.mxu0 0.0
        %3569 = vmatpush.msra.mxu0 0.0
        %3570 = vmatpush.msra.mxu0 0.0
        %3571 = vmatpush.msra.mxu0 0.0
        %3572 = vmatpush.msra.mxu0 %v3543
        %3573 = vmatpush.msra.mxu0 %v3418
        %3574 = vmatpush.msra.mxu0 %v3412
        %3575 = vmatpush.msra.mxu0 %v3406
        %3576 = vmatmul.f32.gmra.mxu0 %v3446
        %v3577 = vpop.f32.mrf.mxu0
        %v3578 = vadd.f32 %v3432, %v3577
        %3579 = vmatmul.f32.gmra.mxu0 %v3449
        %v3580 = vpop.f32.mrf.mxu0
        %v3581 = vadd.f32 %v3432, %v3580
        %3582 = vmatmul.f32.gmra.mxu0 %v3452
        %v3583 = vpop.f32.mrf.mxu0
        %v3584 = vadd.f32 %v3432, %v3583
        %3585 = vmatmul.f32.gmra.mxu0 %v3455
        %v3586 = vpop.f32.mrf.mxu0
        %v3587 = vadd.f32 %v3432, %v3586
        %3588 = vmatmul.f32.gmra.mxu0 %v3458
        %v3589 = vpop.f32.mrf.mxu0
        %v3590 = vadd.f32 %v3432, %v3589
        %3591 = vmatmul.f32.gmra.mxu0 %v3461
        %v3592 = vpop.f32.mrf.mxu0
        %v3593 = vadd.f32 %v3432, %v3592
        %3594 = vmatmul.f32.gmra.mxu0 %v3464
        %v3595 = vpop.f32.mrf.mxu0
        %v3596 = vadd.f32 %v3432, %v3595
        %3597 = vmatmul.f32.gmra.mxu0 %v3467
        %v3598 = vpop.f32.mrf.mxu0
        %v3599 = vadd.f32 %v3432, %v3598
        %3600 = vmatmul.f32.gmra.mxu0 %v3470
        %v3601 = vpop.f32.mrf.mxu0
        %v3602 = vadd.f32 %v3432, %v3601
        %3603 = vmatmul.f32.gmra.mxu0 %v3473
        %v3604 = vpop.f32.mrf.mxu0
        %v3605 = vadd.f32 %v3432, %v3604
        %3606 = vmatmul.f32.gmra.mxu0 %v3476
        %v3607 = vpop.f32.mrf.mxu0
        %v3608 = vadd.f32 %v3432, %v3607
        %3609 = vmatmul.f32.gmra.mxu0 %v3479
        %v3610 = vpop.f32.mrf.mxu0
        %v3611 = vadd.f32 %v3432, %v3610
        %3612 = vmatmul.f32.gmra.mxu0 %v3482
        %v3613 = vpop.f32.mrf.mxu0
        %v3614 = vadd.f32 %v3432, %v3613
        %3615 = vmatmul.f32.gmra.mxu0 %v3485
        %v3616 = vpop.f32.mrf.mxu0
        %v3617 = vadd.f32 %v3432, %v3616
        %3618 = vmatmul.f32.gmra.mxu0 %v3488
        %v3619 = vpop.f32.mrf.mxu0
        %v3620 = vadd.f32 %v3432, %v3619
        %3621 = vmatmul.f32.gmra.mxu0 %v3491
        %v3622 = vpop.f32.mrf.mxu0
        %v3623 = vadd.f32 %v3432, %v3622
        %3624 = vmatmul.f32.gmra.mxu0 %v3494
        %v3625 = vpop.f32.mrf.mxu0
        %v3626 = vadd.f32 %v3432, %v3625
        %3627 = vmatmul.f32.gmra.mxu0 %v3497
        %v3628 = vpop.f32.mrf.mxu0
        %v3629 = vadd.f32 %v3432, %v3628
        %3630 = vmatmul.f32.gmra.mxu0 %v3500
        %v3631 = vpop.f32.mrf.mxu0
        %v3632 = vadd.f32 %v3432, %v3631
        %3633 = vmatmul.f32.gmra.mxu0 %v3503
        %v3634 = vpop.f32.mrf.mxu0
        %v3635 = vadd.f32 %v3432, %v3634
        %3636 = vmatmul.f32.gmra.mxu0 %v3506
        %v3637 = vpop.f32.mrf.mxu0
        %v3638 = vadd.f32 %v3432, %v3637
        %3639 = vmatmul.f32.gmra.mxu0 %v3509
        %v3640 = vpop.f32.mrf.mxu0
        %v3641 = vadd.f32 %v3432, %v3640
        %3642 = vmatmul.f32.gmra.mxu0 %v3512
        %v3643 = vpop.f32.mrf.mxu0
        %v3644 = vadd.f32 %v3432, %v3643
        %3645 = vmatmul.f32.gmra.mxu0 %v3515
        %v3646 = vpop.f32.mrf.mxu0
        %v3647 = vadd.f32 %v3432, %v3646
        %3648 = vmatmul.f32.gmra.mxu0 %v3518
        %v3649 = vpop.f32.mrf.mxu0
        %v3650 = vadd.f32 %v3432, %v3649
        %3651 = vmatmul.f32.gmra.mxu0 %v3521
        %v3652 = vpop.f32.mrf.mxu0
        %v3653 = vadd.f32 %v3432, %v3652
        %3654 = vmatmul.f32.gmra.mxu0 %v3524
        %v3655 = vpop.f32.mrf.mxu0
        %v3656 = vadd.f32 %v3432, %v3655
        %3657 = vmatmul.f32.gmra.mxu0 %v3527
        %v3658 = vpop.f32.mrf.mxu0
        %v3659 = vadd.f32 %v3432, %v3658
        %3660 = vmatmul.f32.gmra.mxu0 %v3530
        %v3661 = vpop.f32.mrf.mxu0
        %v3662 = vadd.f32 %v3432, %v3661
        %3663 = vmatmul.f32.gmra.mxu0 %v3533
        %v3664 = vpop.f32.mrf.mxu0
        %v3665 = vadd.f32 %v3432, %v3664
        %3666 = vmatmul.f32.gmra.mxu0 %v3536
        %v3667 = vpop.f32.mrf.mxu0
        %v3668 = vadd.f32 %v3432, %v3667
        %3669 = vmatmul.f32.gmra.mxu0 %v3539
        %v3670 = vpop.f32.mrf.mxu0
        %v3671 = vadd.f32 %v3432, %v3670
        %3672 = vdwg.mxu0
        %3673 = vmatpush.msra.mxu0 0.0
        %3674 = vmatpush.msra.mxu0 0.0
        %3675 = vmatpush.msra.mxu0 0.0
        %3676 = vmatpush.msra.mxu0 0.0
        %3677 = vmatpush.msra.mxu0 0.0
        %3678 = vmatpush.msra.mxu0 0.0
        %3679 = vmatpush.msra.mxu0 0.0
        %3680 = vmatpush.msra.mxu0 0.0
        %3681 = vmatpush.msra.mxu0 0.0
        %3682 = vmatpush.msra.mxu0 0.0
        %3683 = vmatpush.msra.mxu0 0.0
        %3684 = vmatpush.msra.mxu0 0.0
        %3685 = vmatpush.msra.mxu0 %v3546
        %3686 = vmatpush.msra.mxu0 %v3419
        %3687 = vmatpush.msra.mxu0 %v3413
        %3688 = vmatpush.msra.mxu0 %v3407
        %3689 = vmatmul.f32.gmra.mxu0 %v3446
        %v3690 = vpop.f32.mrf.mxu0
        %v3691 = vadd.f32 %v3433, %v3690
        %3692 = vmatmul.f32.gmra.mxu0 %v3449
        %v3693 = vpop.f32.mrf.mxu0
        %v3694 = vadd.f32 %v3433, %v3693
        %3695 = vmatmul.f32.gmra.mxu0 %v3452
        %v3696 = vpop.f32.mrf.mxu0
        %v3697 = vadd.f32 %v3433, %v3696
        %3698 = vmatmul.f32.gmra.mxu0 %v3455
        %v3699 = vpop.f32.mrf.mxu0
        %v3700 = vadd.f32 %v3433, %v3699
        %3701 = vmatmul.f32.gmra.mxu0 %v3458
        %v3702 = vpop.f32.mrf.mxu0
        %v3703 = vadd.f32 %v3433, %v3702
        %3704 = vmatmul.f32.gmra.mxu0 %v3461
        %v3705 = vpop.f32.mrf.mxu0
        %v3706 = vadd.f32 %v3433, %v3705
        %3707 = vmatmul.f32.gmra.mxu0 %v3464
        %v3708 = vpop.f32.mrf.mxu0
        %v3709 = vadd.f32 %v3433, %v3708
        %3710 = vmatmul.f32.gmra.mxu0 %v3467
        %v3711 = vpop.f32.mrf.mxu0
        %v3712 = vadd.f32 %v3433, %v3711
        %3713 = vmatmul.f32.gmra.mxu0 %v3470
        %v3714 = vpop.f32.mrf.mxu0
        %v3715 = vadd.f32 %v3433, %v3714
        %3716 = vmatmul.f32.gmra.mxu0 %v3473
        %v3717 = vpop.f32.mrf.mxu0
        %v3718 = vadd.f32 %v3433, %v3717
        %3719 = vmatmul.f32.gmra.mxu0 %v3476
        %v3720 = vpop.f32.mrf.mxu0
        %v3721 = vadd.f32 %v3433, %v3720
        %3722 = vmatmul.f32.gmra.mxu0 %v3479
        %v3723 = vpop.f32.mrf.mxu0
        %v3724 = vadd.f32 %v3433, %v3723
        %3725 = vmatmul.f32.gmra.mxu0 %v3482
        %v3726 = vpop.f32.mrf.mxu0
        %v3727 = vadd.f32 %v3433, %v3726
        %3728 = vmatmul.f32.gmra.mxu0 %v3485
        %v3729 = vpop.f32.mrf.mxu0
        %v3730 = vadd.f32 %v3433, %v3729
        %3731 = vmatmul.f32.gmra.mxu0 %v3488
        %v3732 = vpop.f32.mrf.mxu0
        %v3733 = vadd.f32 %v3433, %v3732
        %3734 = vmatmul.f32.gmra.mxu0 %v3491
        %v3735 = vpop.f32.mrf.mxu0
        %v3736 = vadd.f32 %v3433, %v3735
        %3737 = vmatmul.f32.gmra.mxu0 %v3494
        %v3738 = vpop.f32.mrf.mxu0
        %v3739 = vadd.f32 %v3433, %v3738
        %3740 = vmatmul.f32.gmra.mxu0 %v3497
        %v3741 = vpop.f32.mrf.mxu0
        %v3742 = vadd.f32 %v3433, %v3741
        %3743 = vmatmul.f32.gmra.mxu0 %v3500
        %v3744 = vpop.f32.mrf.mxu0
        %v3745 = vadd.f32 %v3433, %v3744
        %3746 = vmatmul.f32.gmra.mxu0 %v3503
        %v3747 = vpop.f32.mrf.mxu0
        %v3748 = vadd.f32 %v3433, %v3747
        %3749 = vmatmul.f32.gmra.mxu0 %v3506
        %v3750 = vpop.f32.mrf.mxu0
        %v3751 = vadd.f32 %v3433, %v3750
        %3752 = vmatmul.f32.gmra.mxu0 %v3509
        %v3753 = vpop.f32.mrf.mxu0
        %v3754 = vadd.f32 %v3433, %v3753
        %3755 = vmatmul.f32.gmra.mxu0 %v3512
        %v3756 = vpop.f32.mrf.mxu0
        %v3757 = vadd.f32 %v3433, %v3756
        %3758 = vmatmul.f32.gmra.mxu0 %v3515
        %v3759 = vpop.f32.mrf.mxu0
        %v3760 = vadd.f32 %v3433, %v3759
        %3761 = vmatmul.f32.gmra.mxu0 %v3518
        %v3762 = vpop.f32.mrf.mxu0
        %v3763 = vadd.f32 %v3433, %v3762
        %3764 = vmatmul.f32.gmra.mxu0 %v3521
        %v3765 = vpop.f32.mrf.mxu0
        %v3766 = vadd.f32 %v3433, %v3765
        %3767 = vmatmul.f32.gmra.mxu0 %v3524
        %v3768 = vpop.f32.mrf.mxu0
        %v3769 = vadd.f32 %v3433, %v3768
        %3770 = vmatmul.f32.gmra.mxu0 %v3527
        %v3771 = vpop.f32.mrf.mxu0
        %v3772 = vadd.f32 %v3433, %v3771
        %3773 = vmatmul.f32.gmra.mxu0 %v3530
        %v3774 = vpop.f32.mrf.mxu0
        %v3775 = vadd.f32 %v3433, %v3774
        %3776 = vmatmul.f32.gmra.mxu0 %v3533
        %v3777 = vpop.f32.mrf.mxu0
        %v3778 = vadd.f32 %v3433, %v3777
        %3779 = vmatmul.f32.gmra.mxu0 %v3536
        %v3780 = vpop.f32.mrf.mxu0
        %v3781 = vadd.f32 %v3433, %v3780
        %3782 = vmatmul.f32.gmra.mxu0 %v3539
        %v3783 = vpop.f32.mrf.mxu0
        %v3784 = vadd.f32 %v3433, %v3783
        %3785 = vdwg.mxu0
        %3786 = vmatpush.msra.mxu0 0.0
        %3787 = vmatpush.msra.mxu0 0.0
        %3788 = vmatpush.msra.mxu0 0.0
        %3789 = vmatpush.msra.mxu0 0.0
        %3790 = vmatpush.msra.mxu0 0.0
        %3791 = vmatpush.msra.mxu0 0.0
        %3792 = vmatpush.msra.mxu0 0.0
        %3793 = vmatpush.msra.mxu0 0.0
        %3794 = vmatpush.msra.mxu0 0.0
        %3795 = vmatpush.msra.mxu0 0.0
        %3796 = vmatpush.msra.mxu0 0.0
        %3797 = vmatpush.msra.mxu0 0.0
        %3798 = vmatpush.msra.mxu0 %v3549
        %3799 = vmatpush.msra.mxu0 %v3420
        %3800 = vmatpush.msra.mxu0 %v3414
        %3801 = vmatpush.msra.mxu0 %v3408
        %3802 = vmatmul.f32.gmra.mxu0 %v3446
        %v3803 = vpop.f32.mrf.mxu0
        %v3804 = vadd.f32 %v3434, %v3803
        %3805 = vmatmul.f32.gmra.mxu0 %v3449
        %v3806 = vpop.f32.mrf.mxu0
        %v3807 = vadd.f32 %v3434, %v3806
        %3808 = vmatmul.f32.gmra.mxu0 %v3452
        %v3809 = vpop.f32.mrf.mxu0
        %v3810 = vadd.f32 %v3434, %v3809
        %3811 = vmatmul.f32.gmra.mxu0 %v3455
        %v3812 = vpop.f32.mrf.mxu0
        %v3813 = vadd.f32 %v3434, %v3812
        %3814 = vmatmul.f32.gmra.mxu0 %v3458
        %v3815 = vpop.f32.mrf.mxu0
        %v3816 = vadd.f32 %v3434, %v3815
        %3817 = vmatmul.f32.gmra.mxu0 %v3461
        %v3818 = vpop.f32.mrf.mxu0
        %v3819 = vadd.f32 %v3434, %v3818
        %3820 = vmatmul.f32.gmra.mxu0 %v3464
        %v3821 = vpop.f32.mrf.mxu0
        %v3822 = vadd.f32 %v3434, %v3821
        %3823 = vmatmul.f32.gmra.mxu0 %v3467
        %v3824 = vpop.f32.mrf.mxu0
        %v3825 = vadd.f32 %v3434, %v3824
        %3826 = vmatmul.f32.gmra.mxu0 %v3470
        %v3827 = vpop.f32.mrf.mxu0
        %v3828 = vadd.f32 %v3434, %v3827
        %3829 = vmatmul.f32.gmra.mxu0 %v3473
        %v3830 = vpop.f32.mrf.mxu0
        %v3831 = vadd.f32 %v3434, %v3830
        %3832 = vmatmul.f32.gmra.mxu0 %v3476
        %v3833 = vpop.f32.mrf.mxu0
        %v3834 = vadd.f32 %v3434, %v3833
        %3835 = vmatmul.f32.gmra.mxu0 %v3479
        %v3836 = vpop.f32.mrf.mxu0
        %v3837 = vadd.f32 %v3434, %v3836
        %3838 = vmatmul.f32.gmra.mxu0 %v3482
        %v3839 = vpop.f32.mrf.mxu0
        %v3840 = vadd.f32 %v3434, %v3839
        %3841 = vmatmul.f32.gmra.mxu0 %v3485
        %v3842 = vpop.f32.mrf.mxu0
        %v3843 = vadd.f32 %v3434, %v3842
        %3844 = vmatmul.f32.gmra.mxu0 %v3488
        %v3845 = vpop.f32.mrf.mxu0
        %v3846 = vadd.f32 %v3434, %v3845
        %3847 = vmatmul.f32.gmra.mxu0 %v3491
        %v3848 = vpop.f32.mrf.mxu0
        %v3849 = vadd.f32 %v3434, %v3848
        %3850 = vmatmul.f32.gmra.mxu0 %v3494
        %v3851 = vpop.f32.mrf.mxu0
        %v3852 = vadd.f32 %v3434, %v3851
        %3853 = vmatmul.f32.gmra.mxu0 %v3497
        %v3854 = vpop.f32.mrf.mxu0
        %v3855 = vadd.f32 %v3434, %v3854
        %3856 = vmatmul.f32.gmra.mxu0 %v3500
        %v3857 = vpop.f32.mrf.mxu0
        %v3858 = vadd.f32 %v3434, %v3857
        %3859 = vmatmul.f32.gmra.mxu0 %v3503
        %v3860 = vpop.f32.mrf.mxu0
        %v3861 = vadd.f32 %v3434, %v3860
        %3862 = vmatmul.f32.gmra.mxu0 %v3506
        %v3863 = vpop.f32.mrf.mxu0
        %v3864 = vadd.f32 %v3434, %v3863
        %3865 = vmatmul.f32.gmra.mxu0 %v3509
        %v3866 = vpop.f32.mrf.mxu0
        %v3867 = vadd.f32 %v3434, %v3866
        %3868 = vmatmul.f32.gmra.mxu0 %v3512
        %v3869 = vpop.f32.mrf.mxu0
        %v3870 = vadd.f32 %v3434, %v3869
        %3871 = vmatmul.f32.gmra.mxu0 %v3515
        %v3872 = vpop.f32.mrf.mxu0
        %v3873 = vadd.f32 %v3434, %v3872
        %3874 = vmatmul.f32.gmra.mxu0 %v3518
        %v3875 = vpop.f32.mrf.mxu0
        %v3876 = vadd.f32 %v3434, %v3875
        %3877 = vmatmul.f32.gmra.mxu0 %v3521
        %v3878 = vpop.f32.mrf.mxu0
        %v3879 = vadd.f32 %v3434, %v3878
        %3880 = vmatmul.f32.gmra.mxu0 %v3524
        %v3881 = vpop.f32.mrf.mxu0
        %v3882 = vadd.f32 %v3434, %v3881
        %3883 = vmatmul.f32.gmra.mxu0 %v3527
        %v3884 = vpop.f32.mrf.mxu0
        %v3885 = vadd.f32 %v3434, %v3884
        %3886 = vmatmul.f32.gmra.mxu0 %v3530
        %v3887 = vpop.f32.mrf.mxu0
        %v3888 = vadd.f32 %v3434, %v3887
        %3889 = vmatmul.f32.gmra.mxu0 %v3533
        %v3890 = vpop.f32.mrf.mxu0
        %v3891 = vadd.f32 %v3434, %v3890
        %3892 = vmatmul.f32.gmra.mxu0 %v3536
        %v3893 = vpop.f32.mrf.mxu0
        %v3894 = vadd.f32 %v3434, %v3893
        %3895 = vmatmul.f32.gmra.mxu0 %v3539
        %v3896 = vpop.f32.mrf.mxu0
        %v3897 = vadd.f32 %v3434, %v3896
        %3898 = vdwg.mxu0
        %3899 = vmatpush.msra.mxu0 0.0
        %3900 = vmatpush.msra.mxu0 0.0
        %3901 = vmatpush.msra.mxu0 0.0
        %3902 = vmatpush.msra.mxu0 0.0
        %3903 = vmatpush.msra.mxu0 0.0
        %3904 = vmatpush.msra.mxu0 0.0
        %3905 = vmatpush.msra.mxu0 0.0
        %3906 = vmatpush.msra.mxu0 0.0
        %3907 = vmatpush.msra.mxu0 0.0
        %3908 = vmatpush.msra.mxu0 0.0
        %3909 = vmatpush.msra.mxu0 0.0
        %3910 = vmatpush.msra.mxu0 0.0
        %3911 = vmatpush.msra.mxu0 %v3552
        %3912 = vmatpush.msra.mxu0 %v3421
        %3913 = vmatpush.msra.mxu0 %v3415
        %3914 = vmatpush.msra.mxu0 %v3409
        %3915 = vmatmul.f32.gmra.mxu0 %v3446
        %v3916 = vpop.f32.mrf.mxu0
        %v3917 = vadd.f32 %v3435, %v3916
        %3918 = vmatmul.f32.gmra.mxu0 %v3449
        %v3919 = vpop.f32.mrf.mxu0
        %v3920 = vadd.f32 %v3435, %v3919
        %3921 = vmatmul.f32.gmra.mxu0 %v3452
        %v3922 = vpop.f32.mrf.mxu0
        %v3923 = vadd.f32 %v3435, %v3922
        %3924 = vmatmul.f32.gmra.mxu0 %v3455
        %v3925 = vpop.f32.mrf.mxu0
        %v3926 = vadd.f32 %v3435, %v3925
        %3927 = vmatmul.f32.gmra.mxu0 %v3458
        %v3928 = vpop.f32.mrf.mxu0
        %v3929 = vadd.f32 %v3435, %v3928
        %3930 = vmatmul.f32.gmra.mxu0 %v3461
        %v3931 = vpop.f32.mrf.mxu0
        %v3932 = vadd.f32 %v3435, %v3931
        %3933 = vmatmul.f32.gmra.mxu0 %v3464
        %v3934 = vpop.f32.mrf.mxu0
        %v3935 = vadd.f32 %v3435, %v3934
        %3936 = vmatmul.f32.gmra.mxu0 %v3467
        %v3937 = vpop.f32.mrf.mxu0
        %v3938 = vadd.f32 %v3435, %v3937
        %3939 = vmatmul.f32.gmra.mxu0 %v3470
        %v3940 = vpop.f32.mrf.mxu0
        %v3941 = vadd.f32 %v3435, %v3940
        %3942 = vmatmul.f32.gmra.mxu0 %v3473
        %v3943 = vpop.f32.mrf.mxu0
        %v3944 = vadd.f32 %v3435, %v3943
        %3945 = vmatmul.f32.gmra.mxu0 %v3476
        %v3946 = vpop.f32.mrf.mxu0
        %v3947 = vadd.f32 %v3435, %v3946
        %3948 = vmatmul.f32.gmra.mxu0 %v3479
        %v3949 = vpop.f32.mrf.mxu0
        %v3950 = vadd.f32 %v3435, %v3949
        %3951 = vmatmul.f32.gmra.mxu0 %v3482
        %v3952 = vpop.f32.mrf.mxu0
        %v3953 = vadd.f32 %v3435, %v3952
        %3954 = vmatmul.f32.gmra.mxu0 %v3485
        %v3955 = vpop.f32.mrf.mxu0
        %v3956 = vadd.f32 %v3435, %v3955
        %3957 = vmatmul.f32.gmra.mxu0 %v3488
        %v3958 = vpop.f32.mrf.mxu0
        %v3959 = vadd.f32 %v3435, %v3958
        %3960 = vmatmul.f32.gmra.mxu0 %v3491
        %v3961 = vpop.f32.mrf.mxu0
        %v3962 = vadd.f32 %v3435, %v3961
        %3963 = vmatmul.f32.gmra.mxu0 %v3494
        %v3964 = vpop.f32.mrf.mxu0
        %v3965 = vadd.f32 %v3435, %v3964
        %3966 = vmatmul.f32.gmra.mxu0 %v3497
        %v3967 = vpop.f32.mrf.mxu0
        %v3968 = vadd.f32 %v3435, %v3967
        %3969 = vmatmul.f32.gmra.mxu0 %v3500
        %v3970 = vpop.f32.mrf.mxu0
        %v3971 = vadd.f32 %v3435, %v3970
        %3972 = vmatmul.f32.gmra.mxu0 %v3503
        %v3973 = vpop.f32.mrf.mxu0
        %v3974 = vadd.f32 %v3435, %v3973
        %3975 = vmatmul.f32.gmra.mxu0 %v3506
        %v3976 = vpop.f32.mrf.mxu0
        %v3977 = vadd.f32 %v3435, %v3976
        %3978 = vmatmul.f32.gmra.mxu0 %v3509
        %v3979 = vpop.f32.mrf.mxu0
        %v3980 = vadd.f32 %v3435, %v3979
        %3981 = vmatmul.f32.gmra.mxu0 %v3512
        %v3982 = vpop.f32.mrf.mxu0
        %v3983 = vadd.f32 %v3435, %v3982
        %3984 = vmatmul.f32.gmra.mxu0 %v3515
        %v3985 = vpop.f32.mrf.mxu0
        %v3986 = vadd.f32 %v3435, %v3985
        %3987 = vmatmul.f32.gmra.mxu0 %v3518
        %v3988 = vpop.f32.mrf.mxu0
        %v3989 = vadd.f32 %v3435, %v3988
        %3990 = vmatmul.f32.gmra.mxu0 %v3521
        %v3991 = vpop.f32.mrf.mxu0
        %v3992 = vadd.f32 %v3435, %v3991
        %3993 = vmatmul.f32.gmra.mxu0 %v3524
        %v3994 = vpop.f32.mrf.mxu0
        %v3995 = vadd.f32 %v3435, %v3994
        %3996 = vmatmul.f32.gmra.mxu0 %v3527
        %v3997 = vpop.f32.mrf.mxu0
        %v3998 = vadd.f32 %v3435, %v3997
        %3999 = vmatmul.f32.gmra.mxu0 %v3530
        %v4000 = vpop.f32.mrf.mxu0
        %v4001 = vadd.f32 %v3435, %v4000
        %4002 = vmatmul.f32.gmra.mxu0 %v3533
        %v4003 = vpop.f32.mrf.mxu0
        %v4004 = vadd.f32 %v3435, %v4003
        %4005 = vmatmul.f32.gmra.mxu0 %v3536
        %v4006 = vpop.f32.mrf.mxu0
        %v4007 = vadd.f32 %v3435, %v4006
        %4008 = vmatmul.f32.gmra.mxu0 %v3539
        %v4009 = vpop.f32.mrf.mxu0
        %v4010 = vadd.f32 %v3435, %v4009
        %4011 = vdwg.mxu0
        %4012 = vmatpush.msra.mxu0 0.0
        %4013 = vmatpush.msra.mxu0 0.0
        %4014 = vmatpush.msra.mxu0 0.0
        %4015 = vmatpush.msra.mxu0 0.0
        %4016 = vmatpush.msra.mxu0 0.0
        %4017 = vmatpush.msra.mxu0 0.0
        %4018 = vmatpush.msra.mxu0 0.0
        %4019 = vmatpush.msra.mxu0 0.0
        %4020 = vmatpush.msra.mxu0 0.0
        %4021 = vmatpush.msra.mxu0 0.0
        %4022 = vmatpush.msra.mxu0 0.0
        %4023 = vmatpush.msra.mxu0 0.0
        %4024 = vmatpush.msra.mxu0 %v3555
        %4025 = vmatpush.msra.mxu0 %v3422
        %4026 = vmatpush.msra.mxu0 %v3416
        %4027 = vmatpush.msra.mxu0 %v3410
        %4028 = vmatmul.f32.gmra.mxu0 %v3446
        %v4029 = vpop.f32.mrf.mxu0
        %v4030 = vadd.f32 %v3436, %v4029
        %4031 = vmatmul.f32.gmra.mxu0 %v3449
        %v4032 = vpop.f32.mrf.mxu0
        %v4033 = vadd.f32 %v3436, %v4032
        %4034 = vmatmul.f32.gmra.mxu0 %v3452
        %v4035 = vpop.f32.mrf.mxu0
        %v4036 = vadd.f32 %v3436, %v4035
        %4037 = vmatmul.f32.gmra.mxu0 %v3455
        %v4038 = vpop.f32.mrf.mxu0
        %v4039 = vadd.f32 %v3436, %v4038
        %4040 = vmatmul.f32.gmra.mxu0 %v3458
        %v4041 = vpop.f32.mrf.mxu0
        %v4042 = vadd.f32 %v3436, %v4041
        %4043 = vmatmul.f32.gmra.mxu0 %v3461
        %v4044 = vpop.f32.mrf.mxu0
        %v4045 = vadd.f32 %v3436, %v4044
        %4046 = vmatmul.f32.gmra.mxu0 %v3464
        %v4047 = vpop.f32.mrf.mxu0
        %v4048 = vadd.f32 %v3436, %v4047
        %4049 = vmatmul.f32.gmra.mxu0 %v3467
        %v4050 = vpop.f32.mrf.mxu0
        %v4051 = vadd.f32 %v3436, %v4050
        %4052 = vmatmul.f32.gmra.mxu0 %v3470
        %v4053 = vpop.f32.mrf.mxu0
        %v4054 = vadd.f32 %v3436, %v4053
        %4055 = vmatmul.f32.gmra.mxu0 %v3473
        %v4056 = vpop.f32.mrf.mxu0
        %v4057 = vadd.f32 %v3436, %v4056
        %4058 = vmatmul.f32.gmra.mxu0 %v3476
        %v4059 = vpop.f32.mrf.mxu0
        %v4060 = vadd.f32 %v3436, %v4059
        %4061 = vmatmul.f32.gmra.mxu0 %v3479
        %v4062 = vpop.f32.mrf.mxu0
        %v4063 = vadd.f32 %v3436, %v4062
        %4064 = vmatmul.f32.gmra.mxu0 %v3482
        %v4065 = vpop.f32.mrf.mxu0
        %v4066 = vadd.f32 %v3436, %v4065
        %4067 = vmatmul.f32.gmra.mxu0 %v3485
        %v4068 = vpop.f32.mrf.mxu0
        %v4069 = vadd.f32 %v3436, %v4068
        %4070 = vmatmul.f32.gmra.mxu0 %v3488
        %v4071 = vpop.f32.mrf.mxu0
        %v4072 = vadd.f32 %v3436, %v4071
        %4073 = vmatmul.f32.gmra.mxu0 %v3491
        %v4074 = vpop.f32.mrf.mxu0
        %v4075 = vadd.f32 %v3436, %v4074
        %4076 = vmatmul.f32.gmra.mxu0 %v3494
        %v4077 = vpop.f32.mrf.mxu0
        %v4078 = vadd.f32 %v3436, %v4077
        %4079 = vmatmul.f32.gmra.mxu0 %v3497
        %v4080 = vpop.f32.mrf.mxu0
        %v4081 = vadd.f32 %v3436, %v4080
        %4082 = vmatmul.f32.gmra.mxu0 %v3500
        %v4083 = vpop.f32.mrf.mxu0
        %v4084 = vadd.f32 %v3436, %v4083
        %4085 = vmatmul.f32.gmra.mxu0 %v3503
        %v4086 = vpop.f32.mrf.mxu0
        %v4087 = vadd.f32 %v3436, %v4086
        %4088 = vmatmul.f32.gmra.mxu0 %v3506
        %v4089 = vpop.f32.mrf.mxu0
        %v4090 = vadd.f32 %v3436, %v4089
        %4091 = vmatmul.f32.gmra.mxu0 %v3509
        %v4092 = vpop.f32.mrf.mxu0
        %v4093 = vadd.f32 %v3436, %v4092
        %4094 = vmatmul.f32.gmra.mxu0 %v3512
        %v4095 = vpop.f32.mrf.mxu0
        %v4096 = vadd.f32 %v3436, %v4095
        %4097 = vmatmul.f32.gmra.mxu0 %v3515
        %v4098 = vpop.f32.mrf.mxu0
        %v4099 = vadd.f32 %v3436, %v4098
        %4100 = vmatmul.f32.gmra.mxu0 %v3518
        %v4101 = vpop.f32.mrf.mxu0
        %v4102 = vadd.f32 %v3436, %v4101
        %4103 = vmatmul.f32.gmra.mxu0 %v3521
        %v4104 = vpop.f32.mrf.mxu0
        %v4105 = vadd.f32 %v3436, %v4104
        %4106 = vmatmul.f32.gmra.mxu0 %v3524
        %v4107 = vpop.f32.mrf.mxu0
        %v4108 = vadd.f32 %v3436, %v4107
        %4109 = vmatmul.f32.gmra.mxu0 %v3527
        %v4110 = vpop.f32.mrf.mxu0
        %v4111 = vadd.f32 %v3436, %v4110
        %4112 = vmatmul.f32.gmra.mxu0 %v3530
        %v4113 = vpop.f32.mrf.mxu0
        %v4114 = vadd.f32 %v3436, %v4113
        %4115 = vmatmul.f32.gmra.mxu0 %v3533
        %v4116 = vpop.f32.mrf.mxu0
        %v4117 = vadd.f32 %v3436, %v4116
        %4118 = vmatmul.f32.gmra.mxu0 %v3536
        %v4119 = vpop.f32.mrf.mxu0
        %v4120 = vadd.f32 %v3436, %v4119
        %4121 = vmatmul.f32.gmra.mxu0 %v3539
        %v4122 = vpop.f32.mrf.mxu0
        %v4123 = vadd.f32 %v3436, %v4122
        %4124 = vdwg.mxu0
        %4125 = vmatpush.msra.mxu0 0.0
        %4126 = vmatpush.msra.mxu0 0.0
        %4127 = vmatpush.msra.mxu0 0.0
        %4128 = vmatpush.msra.mxu0 0.0
        %4129 = vmatpush.msra.mxu0 0.0
        %4130 = vmatpush.msra.mxu0 0.0
        %4131 = vmatpush.msra.mxu0 0.0
        %4132 = vmatpush.msra.mxu0 0.0
        %4133 = vmatpush.msra.mxu0 0.0
        %4134 = vmatpush.msra.mxu0 0.0
        %4135 = vmatpush.msra.mxu0 0.0
        %4136 = vmatpush.msra.mxu0 0.0
        %4137 = vmatpush.msra.mxu0 %v3558
        %4138 = vmatpush.msra.mxu0 %v3423
        %4139 = vmatpush.msra.mxu0 %v3417
        %4140 = vmatpush.msra.mxu0 %v3411
        %4141 = vmatmul.f32.gmra.mxu0 %v3446
        %v4142 = vpop.f32.mrf.mxu0
        %v4143 = vadd.f32 %v3437, %v4142
        %4144 = vmatmul.f32.gmra.mxu0 %v3449
        %v4145 = vpop.f32.mrf.mxu0
        %v4146 = vadd.f32 %v3437, %v4145
        %4147 = vmatmul.f32.gmra.mxu0 %v3452
        %v4148 = vpop.f32.mrf.mxu0
        %v4149 = vadd.f32 %v3437, %v4148
        %4150 = vmatmul.f32.gmra.mxu0 %v3455
        %v4151 = vpop.f32.mrf.mxu0
        %v4152 = vadd.f32 %v3437, %v4151
        %4153 = vmatmul.f32.gmra.mxu0 %v3458
        %v4154 = vpop.f32.mrf.mxu0
        %v4155 = vadd.f32 %v3437, %v4154
        %4156 = vmatmul.f32.gmra.mxu0 %v3461
        %v4157 = vpop.f32.mrf.mxu0
        %v4158 = vadd.f32 %v3437, %v4157
        %4159 = vmatmul.f32.gmra.mxu0 %v3464
        %v4160 = vpop.f32.mrf.mxu0
        %v4161 = vadd.f32 %v3437, %v4160
        %4162 = vmatmul.f32.gmra.mxu0 %v3467
        %v4163 = vpop.f32.mrf.mxu0
        %v4164 = vadd.f32 %v3437, %v4163
        %4165 = vmatmul.f32.gmra.mxu0 %v3470
        %v4166 = vpop.f32.mrf.mxu0
        %v4167 = vadd.f32 %v3437, %v4166
        %4168 = vmatmul.f32.gmra.mxu0 %v3473
        %v4169 = vpop.f32.mrf.mxu0
        %v4170 = vadd.f32 %v3437, %v4169
        %4171 = vmatmul.f32.gmra.mxu0 %v3476
        %v4172 = vpop.f32.mrf.mxu0
        %v4173 = vadd.f32 %v3437, %v4172
        %4174 = vmatmul.f32.gmra.mxu0 %v3479
        %v4175 = vpop.f32.mrf.mxu0
        %v4176 = vadd.f32 %v3437, %v4175
        %4177 = vmatmul.f32.gmra.mxu0 %v3482
        %v4178 = vpop.f32.mrf.mxu0
        %v4179 = vadd.f32 %v3437, %v4178
        %4180 = vmatmul.f32.gmra.mxu0 %v3485
        %v4181 = vpop.f32.mrf.mxu0
        %v4182 = vadd.f32 %v3437, %v4181
        %4183 = vmatmul.f32.gmra.mxu0 %v3488
        %v4184 = vpop.f32.mrf.mxu0
        %v4185 = vadd.f32 %v3437, %v4184
        %4186 = vmatmul.f32.gmra.mxu0 %v3491
        %v4187 = vpop.f32.mrf.mxu0
        %v4188 = vadd.f32 %v3437, %v4187
        %4189 = vmatmul.f32.gmra.mxu0 %v3494
        %v4190 = vpop.f32.mrf.mxu0
        %v4191 = vadd.f32 %v3437, %v4190
        %4192 = vmatmul.f32.gmra.mxu0 %v3497
        %v4193 = vpop.f32.mrf.mxu0
        %v4194 = vadd.f32 %v3437, %v4193
        %4195 = vmatmul.f32.gmra.mxu0 %v3500
        %v4196 = vpop.f32.mrf.mxu0
        %v4197 = vadd.f32 %v3437, %v4196
        %4198 = vmatmul.f32.gmra.mxu0 %v3503
        %v4199 = vpop.f32.mrf.mxu0
        %v4200 = vadd.f32 %v3437, %v4199
        %4201 = vmatmul.f32.gmra.mxu0 %v3506
        %v4202 = vpop.f32.mrf.mxu0
        %v4203 = vadd.f32 %v3437, %v4202
        %4204 = vmatmul.f32.gmra.mxu0 %v3509
        %v4205 = vpop.f32.mrf.mxu0
        %v4206 = vadd.f32 %v3437, %v4205
        %4207 = vmatmul.f32.gmra.mxu0 %v3512
        %v4208 = vpop.f32.mrf.mxu0
        %v4209 = vadd.f32 %v3437, %v4208
        %4210 = vmatmul.f32.gmra.mxu0 %v3515
        %v4211 = vpop.f32.mrf.mxu0
        %v4212 = vadd.f32 %v3437, %v4211
        %4213 = vmatmul.f32.gmra.mxu0 %v3518
        %v4214 = vpop.f32.mrf.mxu0
        %v4215 = vadd.f32 %v3437, %v4214
        %4216 = vmatmul.f32.gmra.mxu0 %v3521
        %v4217 = vpop.f32.mrf.mxu0
        %v4218 = vadd.f32 %v3437, %v4217
        %4219 = vmatmul.f32.gmra.mxu0 %v3524
        %v4220 = vpop.f32.mrf.mxu0
        %v4221 = vadd.f32 %v3437, %v4220
        %4222 = vmatmul.f32.gmra.mxu0 %v3527
        %v4223 = vpop.f32.mrf.mxu0
        %v4224 = vadd.f32 %v3437, %v4223
        %4225 = vmatmul.f32.gmra.mxu0 %v3530
        %v4226 = vpop.f32.mrf.mxu0
        %v4227 = vadd.f32 %v3437, %v4226
        %4228 = vmatmul.f32.gmra.mxu0 %v3533
        %v4229 = vpop.f32.mrf.mxu0
        %v4230 = vadd.f32 %v3437, %v4229
        %4231 = vmatmul.f32.gmra.mxu0 %v3536
        %v4232 = vpop.f32.mrf.mxu0
        %v4233 = vadd.f32 %v3437, %v4232
        %4234 = vmatmul.f32.gmra.mxu0 %v3539
        %v4235 = vpop.f32.mrf.mxu0
        %v4236 = vadd.f32 %v3437, %v4235
        %4237 = vdwg.mxu0
        %4238 = vst [vmem:[%s413] sm:$0xff] %v3578
        %4239 = vst [vmem:[%s413 + $0x8] sm:$0xff] %v3691
        %4240 = vst [vmem:[%s413 + $0x10] sm:$0xff] %v3804
        %4241 = vst [vmem:[%s413 + $0x18] sm:$0xff] %v3917
        %4242 = vst [vmem:[%s413 + $0x20] sm:$0xff] %v4030
        %4243 = vst [vmem:[%s413 + $0x28] sm:$0xff] %v4143
        %4244 = vst [vmem:[%s413 + $0x30] sm:$0xff] %v3581
        %4245 = vst [vmem:[%s413 + $0x38] sm:$0xff] %v3694
        %4246 = vst [vmem:[%s413 + $0x40] sm:$0xff] %v3807
        %4247 = vst [vmem:[%s413 + $0x48] sm:$0xff] %v3920
        %4248 = vst [vmem:[%s413 + $0x50] sm:$0xff] %v4033
        %4249 = vst [vmem:[%s413 + $0x58] sm:$0xff] %v4146
        %4250 = vst [vmem:[%s413 + $0x60] sm:$0xff] %v3584
        %4251 = vst [vmem:[%s413 + $0x68] sm:$0xff] %v3697
        %4252 = vst [vmem:[%s413 + $0x70] sm:$0xff] %v3810
        %4253 = vst [vmem:[%s413 + $0x78] sm:$0xff] %v3923
        %4254 = vst [vmem:[%s413 + $0x80] sm:$0xff] %v4036
        %4255 = vst [vmem:[%s413 + $0x88] sm:$0xff] %v4149
        %4256 = vst [vmem:[%s413 + $0x90] sm:$0xff] %v3587
        %4257 = vst [vmem:[%s413 + $0x98] sm:$0xff] %v3700
        %4258 = vst [vmem:[%s413 + $0xa0] sm:$0xff] %v3813
        %4259 = vst [vmem:[%s413 + $0xa8] sm:$0xff] %v3926
        %4260 = vst [vmem:[%s413 + $0xb0] sm:$0xff] %v4039
        %4261 = vst [vmem:[%s413 + $0xb8] sm:$0xff] %v4152
        %4262 = vst [vmem:[%s413 + $0xc0] sm:$0xff] %v3590
        %4263 = vst [vmem:[%s413 + $0xc8] sm:$0xff] %v3703
        %4264 = vst [vmem:[%s413 + $0xd0] sm:$0xff] %v3816
        %4265 = vst [vmem:[%s413 + $0xd8] sm:$0xff] %v3929
        %4266 = vst [vmem:[%s413 + $0xe0] sm:$0xff] %v4042
        %4267 = vst [vmem:[%s413 + $0xe8] sm:$0xff] %v4155
        %4268 = vst [vmem:[%s413 + $0xf0] sm:$0xff] %v3593
        %4269 = vst [vmem:[%s413 + $0xf8] sm:$0xff] %v3706
        %4270 = vst [vmem:[%s413 + $0x100] sm:$0xff] %v3819
        %4271 = vst [vmem:[%s413 + $0x108] sm:$0xff] %v3932
        %4272 = vst [vmem:[%s413 + $0x110] sm:$0xff] %v4045
        %4273 = vst [vmem:[%s413 + $0x118] sm:$0xff] %v4158
        %4274 = vst [vmem:[%s413 + $0x120] sm:$0xff] %v3596
        %4275 = vst [vmem:[%s413 + $0x128] sm:$0xff] %v3709
        %4276 = vst [vmem:[%s413 + $0x130] sm:$0xff] %v3822
        %4277 = vst [vmem:[%s413 + $0x138] sm:$0xff] %v3935
        %4278 = vst [vmem:[%s413 + $0x140] sm:$0xff] %v4048
        %4279 = vst [vmem:[%s413 + $0x148] sm:$0xff] %v4161
        %4280 = vst [vmem:[%s413 + $0x150] sm:$0xff] %v3599
        %4281 = vst [vmem:[%s413 + $0x158] sm:$0xff] %v3712
        %4282 = vst [vmem:[%s413 + $0x160] sm:$0xff] %v3825
        %4283 = vst [vmem:[%s413 + $0x168] sm:$0xff] %v3938
        %4284 = vst [vmem:[%s413 + $0x170] sm:$0xff] %v4051
        %4285 = vst [vmem:[%s413 + $0x178] sm:$0xff] %v4164
        %4286 = vst [vmem:[%s413 + $0x180] sm:$0xff] %v3602
        %4287 = vst [vmem:[%s413 + $0x188] sm:$0xff] %v3715
        %4288 = vst [vmem:[%s413 + $0x190] sm:$0xff] %v3828
        %4289 = vst [vmem:[%s413 + $0x198] sm:$0xff] %v3941
        %4290 = vst [vmem:[%s413 + $0x1a0] sm:$0xff] %v4054
        %4291 = vst [vmem:[%s413 + $0x1a8] sm:$0xff] %v4167
        %4292 = vst [vmem:[%s413 + $0x1b0] sm:$0xff] %v3605
        %4293 = vst [vmem:[%s413 + $0x1b8] sm:$0xff] %v3718
        %4294 = vst [vmem:[%s413 + $0x1c0] sm:$0xff] %v3831
        %4295 = vst [vmem:[%s413 + $0x1c8] sm:$0xff] %v3944
        %4296 = vst [vmem:[%s413 + $0x1d0] sm:$0xff] %v4057
        %4297 = vst [vmem:[%s413 + $0x1d8] sm:$0xff] %v4170
        %4298 = vst [vmem:[%s413 + $0x1e0] sm:$0xff] %v3608
        %4299 = vst [vmem:[%s413 + $0x1e8] sm:$0xff] %v3721
        %4300 = vst [vmem:[%s413 + $0x1f0] sm:$0xff] %v3834
        %4301 = vst [vmem:[%s413 + $0x1f8] sm:$0xff] %v3947
        %4302 = vst [vmem:[%s413 + $0x200] sm:$0xff] %v4060
        %4303 = vst [vmem:[%s413 + $0x208] sm:$0xff] %v4173
        %4304 = vst [vmem:[%s413 + $0x210] sm:$0xff] %v3611
        %4305 = vst [vmem:[%s413 + $0x218] sm:$0xff] %v3724
        %4306 = vst [vmem:[%s413 + $0x220] sm:$0xff] %v3837
        %4307 = vst [vmem:[%s413 + $0x228] sm:$0xff] %v3950
        %4308 = vst [vmem:[%s413 + $0x230] sm:$0xff] %v4063
        %4309 = vst [vmem:[%s413 + $0x238] sm:$0xff] %v4176
        %4310 = vst [vmem:[%s413 + $0x240] sm:$0xff] %v3614
        %4311 = vst [vmem:[%s413 + $0x248] sm:$0xff] %v3727
        %4312 = vst [vmem:[%s413 + $0x250] sm:$0xff] %v3840
        %4313 = vst [vmem:[%s413 + $0x258] sm:$0xff] %v3953
        %4314 = vst [vmem:[%s413 + $0x260] sm:$0xff] %v4066
        %4315 = vst [vmem:[%s413 + $0x268] sm:$0xff] %v4179
        %4316 = vst [vmem:[%s413 + $0x270] sm:$0xff] %v3617
        %4317 = vst [vmem:[%s413 + $0x278] sm:$0xff] %v3730
        %4318 = vst [vmem:[%s413 + $0x280] sm:$0xff] %v3843
        %4319 = vst [vmem:[%s413 + $0x288] sm:$0xff] %v3956
        %4320 = vst [vmem:[%s413 + $0x290] sm:$0xff] %v4069
        %4321 = vst [vmem:[%s413 + $0x298] sm:$0xff] %v4182
        %4322 = vst [vmem:[%s413 + $0x2a0] sm:$0xff] %v3620
        %4323 = vst [vmem:[%s413 + $0x2a8] sm:$0xff] %v3733
        %4324 = vst [vmem:[%s413 + $0x2b0] sm:$0xff] %v3846
        %4325 = vst [vmem:[%s413 + $0x2b8] sm:$0xff] %v3959
        %4326 = vst [vmem:[%s413 + $0x2c0] sm:$0xff] %v4072
        %4327 = vst [vmem:[%s413 + $0x2c8] sm:$0xff] %v4185
        %4328 = vst [vmem:[%s413 + $0x2d0] sm:$0xff] %v3623
        %4329 = vst [vmem:[%s413 + $0x2d8] sm:$0xff] %v3736
        %4330 = vst [vmem:[%s413 + $0x2e0] sm:$0xff] %v3849
        %4331 = vst [vmem:[%s413 + $0x2e8] sm:$0xff] %v3962
        %4332 = vst [vmem:[%s413 + $0x2f0] sm:$0xff] %v4075
        %4333 = vst [vmem:[%s413 + $0x2f8] sm:$0xff] %v4188
        %4334 = vst [vmem:[%s413 + $0x300] sm:$0xff] %v3626
        %4335 = vst [vmem:[%s413 + $0x308] sm:$0xff] %v3739
        %4336 = vst [vmem:[%s413 + $0x310] sm:$0xff] %v3852
        %4337 = vst [vmem:[%s413 + $0x318] sm:$0xff] %v3965
        %4338 = vst [vmem:[%s413 + $0x320] sm:$0xff] %v4078
        %4339 = vst [vmem:[%s413 + $0x328] sm:$0xff] %v4191
        %4340 = vst [vmem:[%s413 + $0x330] sm:$0xff] %v3629
        %4341 = vst [vmem:[%s413 + $0x338] sm:$0xff] %v3742
        %4342 = vst [vmem:[%s413 + $0x340] sm:$0xff] %v3855
        %4343 = vst [vmem:[%s413 + $0x348] sm:$0xff] %v3968
        %4344 = vst [vmem:[%s413 + $0x350] sm:$0xff] %v4081
        %4345 = vst [vmem:[%s413 + $0x358] sm:$0xff] %v4194
        %4346 = vst [vmem:[%s413 + $0x360] sm:$0xff] %v3632
        %4347 = vst [vmem:[%s413 + $0x368] sm:$0xff] %v3745
        %4348 = vst [vmem:[%s413 + $0x370] sm:$0xff] %v3858
        %4349 = vst [vmem:[%s413 + $0x378] sm:$0xff] %v3971
        %4350 = vst [vmem:[%s413 + $0x380] sm:$0xff] %v4084
        %4351 = vst [vmem:[%s413 + $0x388] sm:$0xff] %v4197
        %4352 = vst [vmem:[%s413 + $0x390] sm:$0xff] %v3635
        %4353 = vst [vmem:[%s413 + $0x398] sm:$0xff] %v3748
        %4354 = vst [vmem:[%s413 + $0x3a0] sm:$0xff] %v3861
        %4355 = vst [vmem:[%s413 + $0x3a8] sm:$0xff] %v3974
        %4356 = vst [vmem:[%s413 + $0x3b0] sm:$0xff] %v4087
        %4357 = vst [vmem:[%s413 + $0x3b8] sm:$0xff] %v4200
        %4358 = vst [vmem:[%s413 + $0x3c0] sm:$0xff] %v3638
        %4359 = vst [vmem:[%s413 + $0x3c8] sm:$0xff] %v3751
        %4360 = vst [vmem:[%s413 + $0x3d0] sm:$0xff] %v3864
        %4361 = vst [vmem:[%s413 + $0x3d8] sm:$0xff] %v3977
        %4362 = vst [vmem:[%s413 + $0x3e0] sm:$0xff] %v4090
        %4363 = vst [vmem:[%s413 + $0x3e8] sm:$0xff] %v4203
        %4364 = vst [vmem:[%s413 + $0x3f0] sm:$0xff] %v3641
        %4365 = vst [vmem:[%s413 + $0x3f8] sm:$0xff] %v3754
        %4366 = vst [vmem:[%s413 + $0x400] sm:$0xff] %v3867
        %4367 = vst [vmem:[%s413 + $0x408] sm:$0xff] %v3980
        %4368 = vst [vmem:[%s413 + $0x410] sm:$0xff] %v4093
        %4369 = vst [vmem:[%s413 + $0x418] sm:$0xff] %v4206
        %4370 = vst [vmem:[%s413 + $0x420] sm:$0xff] %v3644
        %4371 = vst [vmem:[%s413 + $0x428] sm:$0xff] %v3757
        %4372 = vst [vmem:[%s413 + $0x430] sm:$0xff] %v3870
        %4373 = vst [vmem:[%s413 + $0x438] sm:$0xff] %v3983
        %4374 = vst [vmem:[%s413 + $0x440] sm:$0xff] %v4096
        %4375 = vst [vmem:[%s413 + $0x448] sm:$0xff] %v4209
        %4376 = vst [vmem:[%s413 + $0x450] sm:$0xff] %v3647
        %4377 = vst [vmem:[%s413 + $0x458] sm:$0xff] %v3760
        %4378 = vst [vmem:[%s413 + $0x460] sm:$0xff] %v3873
        %4379 = vst [vmem:[%s413 + $0x468] sm:$0xff] %v3986
        %4380 = vst [vmem:[%s413 + $0x470] sm:$0xff] %v4099
        %4381 = vst [vmem:[%s413 + $0x478] sm:$0xff] %v4212
        %4382 = vst [vmem:[%s413 + $0x480] sm:$0xff] %v3650
        %4383 = vst [vmem:[%s413 + $0x488] sm:$0xff] %v3763
        %4384 = vst [vmem:[%s413 + $0x490] sm:$0xff] %v3876
        %4385 = vst [vmem:[%s413 + $0x498] sm:$0xff] %v3989
        %4386 = vst [vmem:[%s413 + $0x4a0] sm:$0xff] %v4102
        %4387 = vst [vmem:[%s413 + $0x4a8] sm:$0xff] %v4215
        %4388 = vst [vmem:[%s413 + $0x4b0] sm:$0xff] %v3653
        %4389 = vst [vmem:[%s413 + $0x4b8] sm:$0xff] %v3766
        %4390 = vst [vmem:[%s413 + $0x4c0] sm:$0xff] %v3879
        %4391 = vst [vmem:[%s413 + $0x4c8] sm:$0xff] %v3992
        %4392 = vst [vmem:[%s413 + $0x4d0] sm:$0xff] %v4105
        %4393 = vst [vmem:[%s413 + $0x4d8] sm:$0xff] %v4218
        %4394 = vst [vmem:[%s413 + $0x4e0] sm:$0xff] %v3656
        %4395 = vst [vmem:[%s413 + $0x4e8] sm:$0xff] %v3769
        %4396 = vst [vmem:[%s413 + $0x4f0] sm:$0xff] %v3882
        %4397 = vst [vmem:[%s413 + $0x4f8] sm:$0xff] %v3995
        %4398 = vst [vmem:[%s413 + $0x500] sm:$0xff] %v4108
        %4399 = vst [vmem:[%s413 + $0x508] sm:$0xff] %v4221
        %4400 = vst [vmem:[%s413 + $0x510] sm:$0xff] %v3659
        %4401 = vst [vmem:[%s413 + $0x518] sm:$0xff] %v3772
        %4402 = vst [vmem:[%s413 + $0x520] sm:$0xff] %v3885
        %4403 = vst [vmem:[%s413 + $0x528] sm:$0xff] %v3998
        %4404 = vst [vmem:[%s413 + $0x530] sm:$0xff] %v4111
        %4405 = vst [vmem:[%s413 + $0x538] sm:$0xff] %v4224
        %4406 = vst [vmem:[%s413 + $0x540] sm:$0xff] %v3662
        %4407 = vst [vmem:[%s413 + $0x548] sm:$0xff] %v3775
        %4408 = vst [vmem:[%s413 + $0x550] sm:$0xff] %v3888
        %4409 = vst [vmem:[%s413 + $0x558] sm:$0xff] %v4001
        %4410 = vst [vmem:[%s413 + $0x560] sm:$0xff] %v4114
        %4411 = vst [vmem:[%s413 + $0x568] sm:$0xff] %v4227
        %4412 = vst [vmem:[%s413 + $0x570] sm:$0xff] %v3665
        %4413 = vst [vmem:[%s413 + $0x578] sm:$0xff] %v3778
        %4414 = vst [vmem:[%s413 + $0x580] sm:$0xff] %v3891
        %4415 = vst [vmem:[%s413 + $0x588] sm:$0xff] %v4004
        %4416 = vst [vmem:[%s413 + $0x590] sm:$0xff] %v4117
        %4417 = vst [vmem:[%s413 + $0x598] sm:$0xff] %v4230
        %4418 = vst [vmem:[%s413 + $0x5a0] sm:$0xff] %v3668
        %4419 = vst [vmem:[%s413 + $0x5a8] sm:$0xff] %v3781
        %4420 = vst [vmem:[%s413 + $0x5b0] sm:$0xff] %v3894
        %4421 = vst [vmem:[%s413 + $0x5b8] sm:$0xff] %v4007
        %4422 = vst [vmem:[%s413 + $0x5c0] sm:$0xff] %v4120
        %4423 = vst [vmem:[%s413 + $0x5c8] sm:$0xff] %v4233
        %4424 = vst [vmem:[%s413 + $0x5d0] sm:$0xff] %v3671
        %4425 = vst [vmem:[%s413 + $0x5d8] sm:$0xff] %v3784
        %4426 = vst [vmem:[%s413 + $0x5e0] sm:$0xff] %v3897
        %4427 = vst [vmem:[%s413 + $0x5e8] sm:$0xff] %v4010
        %4428 = vst [vmem:[%s413 + $0x5f0] sm:$0xff] %v4123
        %4429 = vst [vmem:[%s413 + $0x5f8] sm:$0xff] %v4236
        %s4430 = sand.u32 %s221, 1
        %s4431 = scalar_lea.sflag [#allocation5], %s4430
        %s4432 = sand.u32 %s221, 1
        %s4433 = smul.addr %s4432, 1536
        %s4434 = scalar_lea.vmem [#allocation8], %s4433
        // Predicated region
        $region57: #{strided_conv_forward.1} parent=47 // pred_check
          %p4435 = pneg %p231
        $region58: #{strided_conv_forward.1} parent=47 // pred_check_branch
          %4437 = sbr.rel (%p4435) target = $region60
        $region59: #{strided_conv_forward.1} parent=47 // pred_region
          %s4438 = smul.u32 16, %s28
          %4440 = vsyncadd %s4431, 0
          %s4441 = smul.addr %s4438, 12
          %s4442 = smul.addr %s27, 192
          %s4443 = sadd.s32 %s4441, %s4442
          %s4444 = smul.addr %s4443, 8
          %s4445 = scalar_lea.hbm %s7, %s4444
          %s4446 = sshll.u32 %s4434, 4
          %s4447 = int_to_ptr.vmem [resolvable:$true] %s4446
          %s4448 = sshll.u32 %s4445, 4
          %s4449 = int_to_ptr.hbm [resolvable:$true] %s4448
          %4454 = dma.vmem_to_hbm [thread:$0]  %s4447, 24576, %s4449, %s4431, 768, 768, 48
        $region60: #{strided_conv_forward.1} parent=47 // pred_fallthru
          _
      $region48: #{strided_conv_forward.1} parent=5 // pred_fallthru
        _
      %p4455 = scmp.le.s32.totalorder 2, %s18
      // Predicated region
      $region61: #{strided_conv_forward.1} parent=5 // pred_check
        %p4456 = pneg %p4455
      $region62: #{strided_conv_forward.1} parent=5 // pred_check_branch
        %4458 = sbr.rel (%p4456) target = $region64
      $region63: #{strided_conv_forward.1} parent=5 // pred_region
        %s4459 = ssub.s32 %s18, 2
        // Predicated region
        $region65: #{strided_conv_forward.1} parent=63 // pred_check
          %p4460 = pneg %p237
        $region66: #{strided_conv_forward.1} parent=63 // pred_check_branch
          %4462 = sbr.rel (%p4460) target = $region68
        $region67: #{strided_conv_forward.1} parent=63 // pred_region
          %s4463 = sand.u32 %s222, 1
          %s4464 = scalar_lea.sflag [#allocation5], %s4463
          %s4465 = sand.u32 %s222, 1
          %s4466 = smul.addr %s4465, 1536
          %s4467 = scalar_lea.vmem [#allocation8], %s4466
          %4469 = dma.done %s4464, 24576
        $region68: #{strided_conv_forward.1} parent=63 // pred_fallthru
          _
      $region64: #{strided_conv_forward.1} parent=5 // pred_fallthru
        _
    $region6: #{strided_conv_forward.1} parent=1 // loop_footer
      %s22 = sadd.s32 1, %s18
    $region7: #{strided_conv_forward.1} parent=1 // loop_footer_branch
      %17 = sbr.rel target = $region3
    $region8: #{strided_conv_forward.1} parent=1 // loop_exit
      _
    %4470 = vsyncpa [#allocation4], 1
    %s4471 = scalar_lea.sflag [#allocation4], 1
    %4472 = vsyncpa %s4471, 1
    %4473 = vsyncpa [#allocation7], 1
    %4474 = vsyncpa [#allocation5], 1
    %s4475 = scalar_lea.sflag [#allocation5], 1
    %4476 = vsyncpa %s4475, 1

</llo_original>
